<compile_context>
chip_gen: v6e
topology: v6e:2x2x1
jax: 0.10.0
libtpu: 0.0.40
codegen_flags: <defaults>
</compile_context>

<pallas_src>
import math

import jax
import jax.numpy as jnp
from jax.experimental import pallas as pl
from jax.experimental.pallas import tpu as pltpu

# ----------------------------- model config ---------------------------------
B = 2            # batch
S = 16           # prompt_len (== sequence length)
H = 128          # hidden_size
NH = 2           # attention heads
HD = H // NH     # head dim
F = 4 * H        # FFN intermediate size
V = 5120         # vocab size (must exceed verbalizer ids 4997 / 3893)
NUM_LAYERS = 2
LN_EPS = 1e-12
VERBALIZER_IDS = (4997, 3893)   # column order of the final torch.cat
NUM_LABELS = 2
V_PAD = 128      # verbalizer decoder padded to 128 lanes (lane-dense)
ATTN_SCALE = 1.0 / math.sqrt(HD)
NEG_INF = -1e9
BS = B * S


def _round_up(n, m):
    return (n + m - 1) // m * m


# --------------------------- packed operand geometry --------------------------
WA_LANES = max(3 * H, F)                       # 512
WA_ROWS = NUM_LAYERS * 2 * H                   # 512
WB_ROWS = NUM_LAYERS * (H + F) + 2 * H         # 1536
BVEC_ROWS = _round_up(NUM_LAYERS * 8 + 4, 8)   # 24
META_ROWS = BS + 16                            # 48
OUT_ROWS = _round_up(B + 1, 8)                 # 8

_MLM_WB_BASE = NUM_LAYERS * (H + F)            # row of wt in wB
_MLM_BV_BASE = NUM_LAYERS * 8                  # row of bt in bvec
_LABEL_ROW = BS + 8                            # first label row in meta


# ------------------------------- kernel --------------------------------------
def _ln(x, g, b):
    mu = jnp.mean(x, axis=-1, keepdims=True)
    var = jnp.mean(jnp.square(x - mu), axis=-1, keepdims=True)
    return (x - mu) * jax.lax.rsqrt(var + LN_EPS) * g + b


def _bf16(x):
    return x.astype(jnp.bfloat16)


def fused_forward_kernel(meta_ref, emb_ref, wa_ref, wb_ref, bvec_ref, out_ref):
    """Whole PromptWSW forward (flattened batch) in one shot, VMEM resident."""
    # ---- prologue: in-kernel embedding gather + additive attention bias ----
    ids_col = meta_ref[0:BS, 0:1]                                     # [BS, 1] i32
    onehot = (jax.lax.broadcasted_iota(jnp.int32, (BS, S), 1)
              == ids_col).astype(jnp.float32)                         # [BS, S]
    x = jnp.dot(onehot, emb_ref[...],
                preferred_element_type=jnp.float32)                   # [BS, H]

    # TODO(synk): `prepare_attention_mask` is not defined in the reference
    # source; attention_mask is applied as a standard additive key-padding
    # mask, plus a block-diagonal mask separating batch elements.
    mask_row = meta_ref[BS:BS + 1, :].astype(jnp.float32)             # [1, BS]
    key_bias = (1.0 - mask_row) * NEG_INF
    ri = jax.lax.broadcasted_iota(jnp.int32, (BS, BS), 0)
    ci = jax.lax.broadcasted_iota(jnp.int32, (BS, BS), 1)
    if (S & (S - 1)) == 0:
        sh = S.bit_length() - 1
        same = jnp.right_shift(ri, sh) == jnp.right_shift(ci, sh)
    else:
        same = (ri // S) == (ci // S)
    attn_bias = jnp.where(same, 0.0, NEG_INF) + key_bias              # [BS, BS]

    # ----- encoder layers (static unroll; weights stay VMEM-resident) -----
    for l in range(NUM_LAYERS):
        wa_base = l * 2 * H
        wb_base = l * (H + F)
        br = l * 8
        last = (l == NUM_LAYERS - 1)

        # fused QKV projection: one [rows, H] x [H, 3H] matmul
        qkv = jnp.dot(_bf16(x), wa_ref[wa_base:wa_base + H, 0:3 * H],
                      preferred_element_type=jnp.float32)             # [BS, 3H]
        q = qkv[:, 0:H] + bvec_ref[br:br + 1, 0:H]
        k = qkv[:, H:2 * H] + bvec_ref[br:br + 1, H:2 * H]
        v = qkv[:, 2 * H:3 * H] + bvec_ref[br:br + 1, 2 * H:3 * H]

        if last:
            # Only the CLS row of each batch element feeds the MLM head and
            # everything past attention is row-wise -> keep only those rows.
            q = jnp.concatenate([q[b * S:b * S + 1, :] for b in range(B)], axis=0)
            x_res = jnp.concatenate([x[b * S:b * S + 1, :] for b in range(B)], axis=0)
            bias_q = jnp.concatenate(
                [attn_bias[b * S:b * S + 1, :] for b in range(B)], axis=0)
        else:
            x_res = x
            bias_q = attn_bias

        ctx_heads = []
        for hh in range(NH):
            sl = slice(hh * HD, (hh + 1) * HD)
            scores = jax.lax.dot_general(
                _bf16(q[:, sl]), _bf16(k[:, sl]), (((1,), (1,)), ((), ())),
                preferred_element_type=jnp.float32) * ATTN_SCALE + bias_q
            mx = jnp.max(scores, axis=-1, keepdims=True)
            e = jnp.exp(scores - mx)
            denom = jnp.sum(e, axis=-1, keepdims=True)
            probs = e * pl.reciprocal(denom, approx=True)
            ctx_heads.append(jnp.dot(_bf16(probs), _bf16(v[:, sl]),
                                     preferred_element_type=jnp.float32))
        ctx = jnp.concatenate(ctx_heads, axis=-1)                     # [rows, H]
        attn_out = jnp.dot(_bf16(ctx), wb_ref[wb_base:wb_base + H, :],
                           preferred_element_type=jnp.float32) \
            + bvec_ref[br + 1:br + 2, 0:H]

        h = _ln(x_res + attn_out,
                bvec_ref[br + 2:br + 3, 0:H], bvec_ref[br + 3:br + 4, 0:H])
        # TODO(synk): HF BERT uses exact erf GELU; tanh approximation is used
        # here (consistently in kernel and reference).
        ff = jax.nn.gelu(jnp.dot(_bf16(h), wa_ref[wa_base + H:wa_base + 2 * H, 0:F],
                                 preferred_element_type=jnp.float32)
                         + bvec_ref[br + 4:br + 5, 0:F])
        ff = jnp.dot(_bf16(ff), wb_ref[wb_base + H:wb_base + H + F, :],
                     preferred_element_type=jnp.float32) \
            + bvec_ref[br + 5:br + 6, 0:H]
        x = _ln(h + ff,
                bvec_ref[br + 6:br + 7, 0:H], bvec_ref[br + 7:br + 8, 0:H])

    # ----- MLM head on the CLS rows (x is already [B, H]) -----
    mb = _MLM_WB_BASE
    rm = _MLM_BV_BASE
    t = jnp.dot(_bf16(x), wb_ref[mb:mb + H, :],
                preferred_element_type=jnp.float32) + bvec_ref[rm:rm + 1, 0:H]
    t = jax.nn.gelu(t)
    t = _ln(t, bvec_ref[rm + 1:rm + 2, 0:H], bvec_ref[rm + 2:rm + 3, 0:H])

    # pruned decoder: only the verbalizer columns (zero-padded to 128 lanes)
    logits_pad = jnp.dot(_bf16(t), wb_ref[mb + H:mb + 2 * H, :],
                         preferred_element_type=jnp.float32) \
        + bvec_ref[rm + 3:rm + 4, 0:V_PAD]                            # [B, V_PAD]

    # ----- mean cross-entropy over the NUM_LABELS real columns -----
    lg = logits_pad[:, 0:NUM_LABELS]                                  # [B, 2]
    mrow = jnp.max(lg, axis=-1, keepdims=True)
    lse = mrow + jnp.log(jnp.sum(jnp.exp(lg - mrow), axis=-1, keepdims=True))
    labels_col = meta_ref[_LABEL_ROW:_LABEL_ROW + B, 0:1]             # [B, 1] i32
    onehot_lab = (jax.lax.broadcasted_iota(jnp.int32, (B, NUM_LABELS), 1)
                  == labels_col).astype(jnp.float32)                  # [B, 2]
    loss = (jnp.sum(lse) - jnp.sum(onehot_lab * lg)) * (1.0 / B)      # scalar

    # single lane-dense output slab: logits rows, then loss row, then zero pad
    rows = [logits_pad, jnp.full((1, V_PAD), loss, jnp.float32)]
    pad_rows = OUT_ROWS - (B + 1)
    if pad_rows:
        rows.append(jnp.zeros((pad_rows, V_PAD), jnp.float32))
    out_ref[...] = jnp.concatenate(rows, axis=0)


# ------------------------------ packing ---------------------------------------
def pack_params(params):
    """Fuse / stack / prune the raw parameters into a handful of VMEM slabs."""
    ls = params["layers"]
    m = params["mlm"]
    bf = lambda a: a.astype(jnp.bfloat16)

    # wA: per layer wqkv (lanes 0:3H) and w1 (lanes 0:F)
    wA = jnp.zeros((WA_ROWS, WA_LANES), jnp.bfloat16)
    for l, p in enumerate(ls):
        base = l * 2 * H
        wqkv = jnp.concatenate([p["wq"], p["wk"], p["wv"]], axis=1)   # [H, 3H]
        wA = wA.at[base:base + H, 0:3 * H].set(bf(wqkv))
        wA = wA.at[base + H:base + 2 * H, 0:F].set(bf(p["w1"]))

    # wB: per layer wo, w2; then wt, wd_verb (all lane dim = H)
    wB = jnp.zeros((WB_ROWS, H), jnp.bfloat16)
    for l, p in enumerate(ls):
        base = l * (H + F)
        wB = wB.at[base:base + H, :].set(bf(p["wo"]))
        wB = wB.at[base + H:base + H + F, :].set(bf(p["w2"]))
    verb = jnp.asarray(VERBALIZER_IDS, jnp.int32)
    wd_verb = jnp.zeros((H, V_PAD), jnp.float32)
    wd_verb = wd_verb.at[:, :NUM_LABELS].set(m["wd"][:, verb])
    wB = wB.at[_MLM_WB_BASE:_MLM_WB_BASE + H, :].set(bf(m["wt"]))
    wB = wB.at[_MLM_WB_BASE + H:_MLM_WB_BASE + 2 * H, :].set(bf(wd_verb))

    # bvec: every bias / LN vector, one row each (f32)
    bvec = jnp.zeros((BVEC_ROWS, WA_LANES), jnp.float32)
    for l, p in enumerate(ls):
        r = l * 8
        bqkv = jnp.concatenate([p["bq"], p["bk"], p["bv"]], axis=1)   # [1, 3H]
        bvec = bvec.at[r + 0, 0:3 * H].set(bqkv[0])
        bvec = bvec.at[r + 1, 0:H].set(p["bo"][0])
        bvec = bvec.at[r + 2, 0:H].set(p["ln1_g"][0])
        bvec = bvec.at[r + 3, 0:H].set(p["ln1_b"][0])
        bvec = bvec.at[r + 4, 0:F].set(p["b1"][0])
        bvec = bvec.at[r + 5, 0:H].set(p["b2"][0])
        bvec = bvec.at[r + 6, 0:H].set(p["ln2_g"][0])
        bvec = bvec.at[r + 7, 0:H].set(p["ln2_b"][0])
    rm = _MLM_BV_BASE
    bvec = bvec.at[rm + 0, 0:H].set(m["bt"][0])
    bvec = bvec.at[rm + 1, 0:H].set(m["ln_g"][0])
    bvec = bvec.at[rm + 2, 0:H].set(m["ln_b"][0])
    bd_verb = jnp.zeros((V_PAD,), jnp.float32).at[:NUM_LABELS].set(m["bd"][0, verb])
    bvec = bvec.at[rm + 3, 0:V_PAD].set(bd_verb)

    return dict(prompt_emb=params["prompt_emb"].astype(jnp.float32),
                wA=wA, wB=wB, bvec=bvec)


# ------------------------------ wrapper ----------------------------------------
def prompt_wsw_forward(packed, input_ids, attention_mask, labels=None):
    """Returns (loss, logits) exactly like PromptWSW.forward."""
    b_, s_ = input_ids.shape
    assert b_ == B and s_ == S, "shape must match compile-time config"

    ids_flat = input_ids.reshape(-1).astype(jnp.int32)                # [BS]
    mask_flat = attention_mask.reshape(-1).astype(jnp.int32)          # [BS]
    meta = jnp.zeros((META_ROWS, BS), jnp.int32)
    meta = meta.at[0:BS, 0].set(ids_flat)                             # ids column
    meta = meta.at[BS, :].set(mask_flat)                              # mask row
    if labels is not None:
        meta = meta.at[_LABEL_ROW:_LABEL_ROW + B, 0].set(
            labels.reshape(-1).astype(jnp.int32))                     # labels column

    vmem = pl.BlockSpec(memory_space=pltpu.MemorySpace.VMEM)
    out = pl.pallas_call(
        fused_forward_kernel,
        out_shape=jax.ShapeDtypeStruct((OUT_ROWS, V_PAD), jnp.float32),
        in_specs=[vmem] * 5,
        out_specs=vmem,
    )(meta, packed["prompt_emb"], packed["wA"], packed["wB"], packed["bvec"])

    logits = out[0:B, 0:NUM_LABELS]                                   # [B, 2]
    loss = out[B, 0] if labels is not None else None
    return loss, logits


# --------------------------- deterministic init ------------------------------
def init_params(seed=0):
    key = jax.random.PRNGKey(seed)
    keys = iter(jax.random.split(key, 128))

    def rnd(shape, scale=0.02):
        return (scale * jax.random.normal(next(keys), shape)).astype(jnp.float32)

    layers = []
    for _ in range(NUM_LAYERS):
        layers.append(dict(
            wq=rnd((H, H)), bq=rnd((1, H)),
            wk=rnd((H, H)), bk=rnd((1, H)),
            wv=rnd((H, H)), bv=rnd((1, H)),
            wo=rnd((H, H)), bo=rnd((1, H)),
            ln1_g=jnp.ones((1, H), jnp.float32), ln1_b=jnp.zeros((1, H), jnp.float32),
            w1=rnd((H, F)), b1=rnd((1, F)),
            w2=rnd((F, H)), b2=rnd((1, H)),
            ln2_g=jnp.ones((1, H), jnp.float32), ln2_b=jnp.zeros((1, H), jnp.float32),
        ))
    mlm = dict(
        wt=rnd((H, H)), bt=rnd((1, H)),
        ln_g=jnp.ones((1, H), jnp.float32), ln_b=jnp.zeros((1, H), jnp.float32),
        wd=rnd((H, V)), bd=rnd((1, V)),
    )
    return dict(prompt_emb=rnd((S, H)), layers=layers, mlm=mlm)


# ---------------------------- pure-JAX reference -----------------------------
def _ref_ln(x, g, b):
    mu = jnp.mean(x, axis=-1, keepdims=True)
    var = jnp.mean(jnp.square(x - mu), axis=-1, keepdims=True)
    return (x - mu) * jax.lax.rsqrt(var + LN_EPS) * g + b


def reference_forward(params, input_ids, attention_mask, labels):
    hp = jax.lax.Precision.HIGHEST
    x = jnp.take(params["prompt_emb"], input_ids, axis=0)
    bias3 = jnp.broadcast_to(
        ((1.0 - attention_mask.astype(jnp.float32)) * NEG_INF)[:, None, :],
        (input_ids.shape[0], S, S))
    for p in params["layers"]:
        q = jnp.einsum("bsh,hd->bsd", x, p["wq"], precision=hp) + p["bq"]
        k = jnp.einsum("bsh,hd->bsd", x, p["wk"], precision=hp) + p["bk"]
        v = jnp.einsum("bsh,hd->bsd", x, p["wv"], precision=hp) + p["bv"]
        heads = []
        for hh in range(NH):
            qh, kh, vh = (t[..., hh * HD:(hh + 1) * HD] for t in (q, k, v))
            sc = jnp.einsum("bqd,bkd->bqk", qh, kh, precision=hp) * ATTN_SCALE + bias3
            heads.append(jnp.einsum("bqk,bkd->bqd", jax.nn.softmax(sc, -1), vh,
                                    precision=hp))
        ctx = jnp.concatenate(heads, axis=-1)
        h = _ref_ln(x + jnp.einsum("bsh,hd->bsd", ctx, p["wo"], precision=hp)
                    + p["bo"], p["ln1_g"], p["ln1_b"])
        ff = jax.nn.gelu(jnp.einsum("bsh,hf->bsf", h, p["w1"], precision=hp) + p["b1"])
        ff = jnp.einsum("bsf,fh->bsh", ff, p["w2"], precision=hp) + p["b2"]
        x = _ref_ln(h + ff, p["ln2_g"], p["ln2_b"])
    m = params["mlm"]
    h0 = x[:, 0, :]
    t = jax.nn.gelu(jnp.einsum("bh,hd->bd", h0, m["wt"], precision=hp) + m["bt"])
    t = _ref_ln(t, m["ln_g"], m["ln_b"])
    mask_logits = jnp.einsum("bh,hv->bv", t, m["wd"], precision=hp) + m["bd"]
    logits = jnp.stack([mask_logits[:, VERBALIZER_IDS[0]],
                        mask_logits[:, VERBALIZER_IDS[1]]], axis=1)
    lp = jax.nn.log_softmax(logits, axis=-1)
    loss = -jnp.mean(lp[jnp.arange(logits.shape[0]), labels])
    return loss, logits


# --------------------------------- main --------------------------------------
if __name__ == "__main__":
    params = init_params(seed=0)
    packed = pack_params(params)

    key = jax.random.PRNGKey(0)
    # Prompt ids index the (prompt_len, H) embedding table.
    input_ids = jnp.broadcast_to(jnp.arange(S, dtype=jnp.int32), (B, S))
    attention_mask = jnp.ones((B, S), jnp.float32)
    labels = jax.random.randint(key, (B,), 0, NUM_LABELS, dtype=jnp.int32)

    fwd = jax.jit(prompt_wsw_forward)
    loss, logits = fwd(packed, input_ids, attention_mask, labels)
    loss = jax.block_until_ready(loss)
    logits = jax.block_until_ready(logits)

    ref_loss, ref_logits = reference_forward(params, input_ids, attention_mask, labels)
    assert logits.shape == (B, NUM_LABELS) and loss.shape == ()
    # bf16 matmul weights vs f32 HIGHEST reference -> slightly looser tolerance
    assert jnp.allclose(logits, ref_logits, atol=3e-2, rtol=3e-2)
    assert jnp.allclose(loss, ref_loss, atol=3e-2, rtol=3e-2)

    print("KERNEL_OK")
</pallas_src>

<mosaic_0001>
module attributes {stable_mosaic.version = 11 : i64} {
  func.func @fused_forward_kernel(%arg0: memref<48x32xi32, #tpu.memory_space<vmem>>, %arg1: memref<16x128xf32, #tpu.memory_space<vmem>>, %arg2: memref<512x512xbf16, #tpu.memory_space<vmem>>, %arg3: memref<1536x128xbf16, #tpu.memory_space<vmem>>, %arg4: memref<24x512xf32, #tpu.memory_space<vmem>>, %arg5: memref<8x128xf32, #tpu.memory_space<vmem>>) attributes {dimension_semantics = [], scalar_prefetch = 0 : i64, scratch_operands = 0 : i64, tpu.core_type = #tpu.core_type<tc>} {
    %c0 = arith.constant 0 : index
    %c0_0 = arith.constant 0 : index
    %0 = vector.load %arg0[%c0, %c0_0] : memref<48x32xi32, #tpu.memory_space<vmem>>, vector<32x1xi32>
    %1 = tpu.iota {dimensions = array<i32: 1>} : vector<32x16xi32>
    %2 = vector.broadcast %0 : vector<32x1xi32> to vector<32x16xi32>
    %3 = arith.cmpi eq, %1, %2 : vector<32x16xi32>
    %4 = arith.extui %3 : vector<32x16xi1> to vector<32x16xi32>
    %5 = arith.sitofp %4 : vector<32x16xi32> to vector<32x16xf32>
    %c0_1 = arith.constant 0 : index
    %c0_2 = arith.constant 0 : index
    %6 = vector.load %arg1[%c0_1, %c0_2] : memref<16x128xf32, #tpu.memory_space<vmem>>, vector<16x128xf32>
    %cst = arith.constant dense<0.000000e+00> : vector<32x128xf32>
    %7 = tpu.matmul %5, %6, %cst {dimension_numbers = #tpu.dot_dimension_numbers<[1], [0], [0], [1], [0, 0, 1, 1], [], []>} : vector<32x16xf32>, vector<16x128xf32>, vector<32x128xf32> -> vector<32x128xf32>
    %c32 = arith.constant 32 : index
    %c0_3 = arith.constant 0 : index
    %8 = vector.load %arg0[%c32, %c0_3] : memref<48x32xi32, #tpu.memory_space<vmem>>, vector<1x32xi32>
    %9 = arith.sitofp %8 : vector<1x32xi32> to vector<1x32xf32>
    %cst_4 = arith.constant 1.000000e+00 : f32
    %10 = vector.broadcast %cst_4 : f32 to vector<1x32xf32>
    %11 = arith.subf %10, %9 : vector<1x32xf32>
    %cst_5 = arith.constant -1.000000e+09 : f32
    %12 = vector.broadcast %cst_5 : f32 to vector<1x32xf32>
    %13 = arith.mulf %11, %12 : vector<1x32xf32>
    %14 = tpu.iota {dimensions = array<i32: 0>} : vector<32x32xi32>
    %15 = tpu.iota {dimensions = array<i32: 1>} : vector<32x32xi32>
    %c4_i32 = arith.constant 4 : i32
    %16 = vector.broadcast %c4_i32 : i32 to vector<32x32xi32>
    %17 = arith.shrsi %14, %16 : vector<32x32xi32>
    %c4_i32_6 = arith.constant 4 : i32
    %18 = vector.broadcast %c4_i32_6 : i32 to vector<32x32xi32>
    %19 = arith.shrsi %15, %18 : vector<32x32xi32>
    %20 = arith.cmpi eq, %17, %19 : vector<32x32xi32>
    %cst_7 = arith.constant 0.000000e+00 : f32
    %cst_8 = arith.constant -1.000000e+09 : f32
    %21 = vector.broadcast %cst_7 : f32 to vector<32x32xf32>
    %22 = vector.broadcast %cst_8 : f32 to vector<32x32xf32>
    %23 = arith.select %20, %21, %22 : vector<32x32xi1>, vector<32x32xf32>
    %24 = vector.broadcast %13 : vector<1x32xf32> to vector<32x32xf32>
    %25 = arith.addf %23, %24 : vector<32x32xf32>
    %26 = arith.truncf %7 : vector<32x128xf32> to vector<32x128xbf16>
    %c0_9 = arith.constant 0 : index
    %c0_10 = arith.constant 0 : index
    %27 = vector.load %arg2[%c0_9, %c0_10] : memref<512x512xbf16, #tpu.memory_space<vmem>>, vector<128x384xbf16>
    %cst_11 = arith.constant dense<0.000000e+00> : vector<32x384xf32>
    %28 = tpu.matmul %26, %27, %cst_11 {dimension_numbers = #tpu.dot_dimension_numbers<[1], [0], [0], [1], [0, 0, 1, 1], [], []>} : vector<32x128xbf16>, vector<128x384xbf16>, vector<32x384xf32> -> vector<32x384xf32>
    %29 = vector.extract_strided_slice %28 {offsets = [0, 0], sizes = [32, 128], strides = [1, 1]} : vector<32x384xf32> to vector<32x128xf32>
    %c0_12 = arith.constant 0 : index
    %c0_13 = arith.constant 0 : index
    %30 = vector.load %arg4[%c0_12, %c0_13] : memref<24x512xf32, #tpu.memory_space<vmem>>, vector<1x128xf32>
    %31 = vector.broadcast %30 : vector<1x128xf32> to vector<32x128xf32>
    %32 = arith.addf %29, %31 : vector<32x128xf32>
    %33 = vector.extract_strided_slice %28 {offsets = [0, 128], sizes = [32, 128], strides = [1, 1]} : vector<32x384xf32> to vector<32x128xf32>
    %c0_14 = arith.constant 0 : index
    %c128 = arith.constant 128 : index
    %34 = vector.load %arg4[%c0_14, %c128] : memref<24x512xf32, #tpu.memory_space<vmem>>, vector<1x128xf32>
    %35 = vector.broadcast %34 : vector<1x128xf32> to vector<32x128xf32>
    %36 = arith.addf %33, %35 : vector<32x128xf32>
    %37 = vector.extract_strided_slice %28 {offsets = [0, 256], sizes = [32, 128], strides = [1, 1]} : vector<32x384xf32> to vector<32x128xf32>
    %c0_15 = arith.constant 0 : index
    %c256 = arith.constant 256 : index
    %38 = vector.load %arg4[%c0_15, %c256] : memref<24x512xf32, #tpu.memory_space<vmem>>, vector<1x128xf32>
    %39 = vector.broadcast %38 : vector<1x128xf32> to vector<32x128xf32>
    %40 = arith.addf %37, %39 : vector<32x128xf32>
    %41 = vector.extract_strided_slice %32 {offsets = [0, 0], sizes = [32, 64], strides = [1, 1]} : vector<32x128xf32> to vector<32x64xf32>
    %42 = arith.truncf %41 : vector<32x64xf32> to vector<32x64xbf16>
    %43 = vector.extract_strided_slice %36 {offsets = [0, 0], sizes = [32, 64], strides = [1, 1]} : vector<32x128xf32> to vector<32x64xf32>
    %44 = arith.truncf %43 : vector<32x64xf32> to vector<32x64xbf16>
    %cst_16 = arith.constant dense<0.000000e+00> : vector<32x32xf32>
    %45 = tpu.matmul %42, %44, %cst_16 {dimension_numbers = #tpu.dot_dimension_numbers<[1], [1], [0], [0], [0, 0, 1, 0], [], []>} : vector<32x64xbf16>, vector<32x64xbf16>, vector<32x32xf32> -> vector<32x32xf32>
    %cst_17 = arith.constant 1.250000e-01 : f32
    %46 = vector.broadcast %cst_17 : f32 to vector<32x32xf32>
    %47 = arith.mulf %45, %46 : vector<32x32xf32>
    %48 = arith.addf %47, %25 : vector<32x32xf32>
    %cst_18 = arith.constant dense<0xFF800000> : vector<32xf32>
    %49 = vector.multi_reduction <maximumf>, %48, %cst_18 [1] : vector<32x32xf32> to vector<32xf32>
    %50 = vector.shape_cast %49 : vector<32xf32> to vector<32x1xf32>
    %51 = vector.broadcast %50 : vector<32x1xf32> to vector<32x32xf32>
    %52 = arith.subf %48, %51 : vector<32x32xf32>
    %53 = math.exp %52 : vector<32x32xf32>
    %cst_19 = arith.constant dense<0.000000e+00> : vector<32xf32>
    %54 = vector.multi_reduction <add>, %53, %cst_19 [1] : vector<32x32xf32> to vector<32xf32>
    %55 = vector.shape_cast %54 : vector<32xf32> to vector<32x1xf32>
    %56 = tpu.reciprocal %55 {approx = true} : vector<32x1xf32> -> vector<32x1xf32>
    %57 = vector.broadcast %56 : vector<32x1xf32> to vector<32x32xf32>
    %58 = arith.mulf %53, %57 : vector<32x32xf32>
    %59 = arith.truncf %58 : vector<32x32xf32> to vector<32x32xbf16>
    %60 = vector.extract_strided_slice %40 {offsets = [0, 0], sizes = [32, 64], strides = [1, 1]} : vector<32x128xf32> to vector<32x64xf32>
    %61 = arith.truncf %60 : vector<32x64xf32> to vector<32x64xbf16>
    %cst_20 = arith.constant dense<0.000000e+00> : vector<32x64xf32>
    %62 = tpu.matmul %59, %61, %cst_20 {dimension_numbers = #tpu.dot_dimension_numbers<[1], [0], [0], [1], [0, 0, 1, 1], [], []>} : vector<32x32xbf16>, vector<32x64xbf16>, vector<32x64xf32> -> vector<32x64xf32>
    %63 = vector.extract_strided_slice %32 {offsets = [0, 64], sizes = [32, 64], strides = [1, 1]} : vector<32x128xf32> to vector<32x64xf32>
    %64 = arith.truncf %63 : vector<32x64xf32> to vector<32x64xbf16>
    %65 = vector.extract_strided_slice %36 {offsets = [0, 64], sizes = [32, 64], strides = [1, 1]} : vector<32x128xf32> to vector<32x64xf32>
    %66 = arith.truncf %65 : vector<32x64xf32> to vector<32x64xbf16>
    %cst_21 = arith.constant dense<0.000000e+00> : vector<32x32xf32>
    %67 = tpu.matmul %64, %66, %cst_21 {dimension_numbers = #tpu.dot_dimension_numbers<[1], [1], [0], [0], [0, 0, 1, 0], [], []>} : vector<32x64xbf16>, vector<32x64xbf16>, vector<32x32xf32> -> vector<32x32xf32>
    %cst_22 = arith.constant 1.250000e-01 : f32
    %68 = vector.broadcast %cst_22 : f32 to vector<32x32xf32>
    %69 = arith.mulf %67, %68 : vector<32x32xf32>
    %70 = arith.addf %69, %25 : vector<32x32xf32>
    %cst_23 = arith.constant dense<0xFF800000> : vector<32xf32>
    %71 = vector.multi_reduction <maximumf>, %70, %cst_23 [1] : vector<32x32xf32> to vector<32xf32>
    %72 = vector.shape_cast %71 : vector<32xf32> to vector<32x1xf32>
    %73 = vector.broadcast %72 : vector<32x1xf32> to vector<32x32xf32>
    %74 = arith.subf %70, %73 : vector<32x32xf32>
    %75 = math.exp %74 : vector<32x32xf32>
    %cst_24 = arith.constant dense<0.000000e+00> : vector<32xf32>
    %76 = vector.multi_reduction <add>, %75, %cst_24 [1] : vector<32x32xf32> to vector<32xf32>
    %77 = vector.shape_cast %76 : vector<32xf32> to vector<32x1xf32>
    %78 = tpu.reciprocal %77 {approx = true} : vector<32x1xf32> -> vector<32x1xf32>
    %79 = vector.broadcast %78 : vector<32x1xf32> to vector<32x32xf32>
    %80 = arith.mulf %75, %79 : vector<32x32xf32>
    %81 = arith.truncf %80 : vector<32x32xf32> to vector<32x32xbf16>
    %82 = vector.extract_strided_slice %40 {offsets = [0, 64], sizes = [32, 64], strides = [1, 1]} : vector<32x128xf32> to vector<32x64xf32>
    %83 = arith.truncf %82 : vector<32x64xf32> to vector<32x64xbf16>
    %cst_25 = arith.constant dense<0.000000e+00> : vector<32x64xf32>
    %84 = tpu.matmul %81, %83, %cst_25 {dimension_numbers = #tpu.dot_dimension_numbers<[1], [0], [0], [1], [0, 0, 1, 1], [], []>} : vector<32x32xbf16>, vector<32x64xbf16>, vector<32x64xf32> -> vector<32x64xf32>
    %85 = tpu.concatenate %62, %84 in 1 : vector<32x64xf32>, vector<32x64xf32> -> vector<32x128xf32>
    %86 = arith.truncf %85 : vector<32x128xf32> to vector<32x128xbf16>
    %c0_26 = arith.constant 0 : index
    %c0_27 = arith.constant 0 : index
    %87 = vector.load %arg3[%c0_26, %c0_27] : memref<1536x128xbf16, #tpu.memory_space<vmem>>, vector<128x128xbf16>
    %cst_28 = arith.constant dense<0.000000e+00> : vector<32x128xf32>
    %88 = tpu.matmul %86, %87, %cst_28 {dimension_numbers = #tpu.dot_dimension_numbers<[1], [0], [0], [1], [0, 0, 1, 1], [], []>} : vector<32x128xbf16>, vector<128x128xbf16>, vector<32x128xf32> -> vector<32x128xf32>
    %c1 = arith.constant 1 : index
    %c0_29 = arith.constant 0 : index
    %89 = vector.load %arg4[%c1, %c0_29] : memref<24x512xf32, #tpu.memory_space<vmem>>, vector<1x128xf32>
    %90 = vector.broadcast %89 : vector<1x128xf32> to vector<32x128xf32>
    %91 = arith.addf %88, %90 : vector<32x128xf32>
    %92 = arith.addf %7, %91 : vector<32x128xf32>
    %c2 = arith.constant 2 : index
    %c0_30 = arith.constant 0 : index
    %93 = vector.load %arg4[%c2, %c0_30] : memref<24x512xf32, #tpu.memory_space<vmem>>, vector<1x128xf32>
    %c3 = arith.constant 3 : index
    %c0_31 = arith.constant 0 : index
    %94 = vector.load %arg4[%c3, %c0_31] : memref<24x512xf32, #tpu.memory_space<vmem>>, vector<1x128xf32>
    %cst_32 = arith.constant dense<0.000000e+00> : vector<32xf32>
    %95 = vector.multi_reduction <add>, %92, %cst_32 [1] : vector<32x128xf32> to vector<32xf32>
    %96 = vector.shape_cast %95 : vector<32xf32> to vector<32x1xf32>
    %cst_33 = arith.constant 1.280000e+02 : f32
    %97 = vector.broadcast %cst_33 : f32 to vector<32x1xf32>
    %98 = arith.divf %96, %97 : vector<32x1xf32>
    %99 = vector.broadcast %98 : vector<32x1xf32> to vector<32x128xf32>
    %100 = arith.subf %92, %99 : vector<32x128xf32>
    %101 = arith.mulf %100, %100 : vector<32x128xf32>
    %cst_34 = arith.constant dense<0.000000e+00> : vector<32xf32>
    %102 = vector.multi_reduction <add>, %101, %cst_34 [1] : vector<32x128xf32> to vector<32xf32>
    %103 = vector.shape_cast %102 : vector<32xf32> to vector<32x1xf32>
    %cst_35 = arith.constant 1.280000e+02 : f32
    %104 = vector.broadcast %cst_35 : f32 to vector<32x1xf32>
    %105 = arith.divf %103, %104 : vector<32x1xf32>
    %106 = vector.broadcast %98 : vector<32x1xf32> to vector<32x128xf32>
    %107 = arith.subf %92, %106 : vector<32x128xf32>
    %cst_36 = arith.constant 9.99999996E-13 : f32
    %108 = vector.broadcast %cst_36 : f32 to vector<32x1xf32>
    %109 = arith.addf %105, %108 : vector<32x1xf32>
    %110 = math.rsqrt %109 : vector<32x1xf32>
    %111 = vector.broadcast %110 : vector<32x1xf32> to vector<32x128xf32>
    %112 = arith.mulf %107, %111 : vector<32x128xf32>
    %113 = vector.broadcast %93 : vector<1x128xf32> to vector<32x128xf32>
    %114 = arith.mulf %112, %113 : vector<32x128xf32>
    %115 = vector.broadcast %94 : vector<1x128xf32> to vector<32x128xf32>
    %116 = arith.addf %114, %115 : vector<32x128xf32>
    %117 = arith.truncf %116 : vector<32x128xf32> to vector<32x128xbf16>
    %c128_37 = arith.constant 128 : index
    %c0_38 = arith.constant 0 : index
    %118 = vector.load %arg2[%c128_37, %c0_38] : memref<512x512xbf16, #tpu.memory_space<vmem>>, vector<128x512xbf16>
    %cst_39 = arith.constant dense<0.000000e+00> : vector<32x512xf32>
    %119 = tpu.matmul %117, %118, %cst_39 {dimension_numbers = #tpu.dot_dimension_numbers<[1], [0], [0], [1], [0, 0, 1, 1], [], []>} : vector<32x128xbf16>, vector<128x512xbf16>, vector<32x512xf32> -> vector<32x512xf32>
    %c4 = arith.constant 4 : index
    %c0_40 = arith.constant 0 : index
    %120 = vector.load %arg4[%c4, %c0_40] : memref<24x512xf32, #tpu.memory_space<vmem>>, vector<1x512xf32>
    %121 = vector.broadcast %120 : vector<1x512xf32> to vector<32x512xf32>
    %122 = arith.addf %119, %121 : vector<32x512xf32>
    %123 = arith.mulf %122, %122 : vector<32x512xf32>
    %124 = arith.mulf %122, %123 : vector<32x512xf32>
    %cst_41 = arith.constant 4.471500e-02 : f32
    %125 = vector.broadcast %cst_41 : f32 to vector<32x512xf32>
    %126 = arith.mulf %125, %124 : vector<32x512xf32>
    %127 = arith.addf %122, %126 : vector<32x512xf32>
    %cst_42 = arith.constant 0.797884583 : f32
    %128 = vector.broadcast %cst_42 : f32 to vector<32x512xf32>
    %129 = arith.mulf %128, %127 : vector<32x512xf32>
    %130 = math.tanh %129 : vector<32x512xf32>
    %cst_43 = arith.constant 1.000000e+00 : f32
    %131 = vector.broadcast %cst_43 : f32 to vector<32x512xf32>
    %132 = arith.addf %131, %130 : vector<32x512xf32>
    %cst_44 = arith.constant 5.000000e-01 : f32
    %133 = vector.broadcast %cst_44 : f32 to vector<32x512xf32>
    %134 = arith.mulf %133, %132 : vector<32x512xf32>
    %135 = arith.mulf %122, %134 : vector<32x512xf32>
    %136 = arith.truncf %135 : vector<32x512xf32> to vector<32x512xbf16>
    %c128_45 = arith.constant 128 : index
    %c0_46 = arith.constant 0 : index
    %137 = vector.load %arg3[%c128_45, %c0_46] : memref<1536x128xbf16, #tpu.memory_space<vmem>>, vector<512x128xbf16>
    %cst_47 = arith.constant dense<0.000000e+00> : vector<32x128xf32>
    %138 = tpu.matmul %136, %137, %cst_47 {dimension_numbers = #tpu.dot_dimension_numbers<[1], [0], [0], [1], [0, 0, 1, 1], [], []>} : vector<32x512xbf16>, vector<512x128xbf16>, vector<32x128xf32> -> vector<32x128xf32>
    %c5 = arith.constant 5 : index
    %c0_48 = arith.constant 0 : index
    %139 = vector.load %arg4[%c5, %c0_48] : memref<24x512xf32, #tpu.memory_space<vmem>>, vector<1x128xf32>
    %140 = vector.broadcast %139 : vector<1x128xf32> to vector<32x128xf32>
    %141 = arith.addf %138, %140 : vector<32x128xf32>
    %142 = arith.addf %116, %141 : vector<32x128xf32>
    %c6 = arith.constant 6 : index
    %c0_49 = arith.constant 0 : index
    %143 = vector.load %arg4[%c6, %c0_49] : memref<24x512xf32, #tpu.memory_space<vmem>>, vector<1x128xf32>
    %c7 = arith.constant 7 : index
    %c0_50 = arith.constant 0 : index
    %144 = vector.load %arg4[%c7, %c0_50] : memref<24x512xf32, #tpu.memory_space<vmem>>, vector<1x128xf32>
    %cst_51 = arith.constant dense<0.000000e+00> : vector<32xf32>
    %145 = vector.multi_reduction <add>, %142, %cst_51 [1] : vector<32x128xf32> to vector<32xf32>
    %146 = vector.shape_cast %145 : vector<32xf32> to vector<32x1xf32>
    %cst_52 = arith.constant 1.280000e+02 : f32
    %147 = vector.broadcast %cst_52 : f32 to vector<32x1xf32>
    %148 = arith.divf %146, %147 : vector<32x1xf32>
    %149 = vector.broadcast %148 : vector<32x1xf32> to vector<32x128xf32>
    %150 = arith.subf %142, %149 : vector<32x128xf32>
    %151 = arith.mulf %150, %150 : vector<32x128xf32>
    %cst_53 = arith.constant dense<0.000000e+00> : vector<32xf32>
    %152 = vector.multi_reduction <add>, %151, %cst_53 [1] : vector<32x128xf32> to vector<32xf32>
    %153 = vector.shape_cast %152 : vector<32xf32> to vector<32x1xf32>
    %cst_54 = arith.constant 1.280000e+02 : f32
    %154 = vector.broadcast %cst_54 : f32 to vector<32x1xf32>
    %155 = arith.divf %153, %154 : vector<32x1xf32>
    %156 = vector.broadcast %148 : vector<32x1xf32> to vector<32x128xf32>
    %157 = arith.subf %142, %156 : vector<32x128xf32>
    %cst_55 = arith.constant 9.99999996E-13 : f32
    %158 = vector.broadcast %cst_55 : f32 to vector<32x1xf32>
    %159 = arith.addf %155, %158 : vector<32x1xf32>
    %160 = math.rsqrt %159 : vector<32x1xf32>
    %161 = vector.broadcast %160 : vector<32x1xf32> to vector<32x128xf32>
    %162 = arith.mulf %157, %161 : vector<32x128xf32>
    %163 = vector.broadcast %143 : vector<1x128xf32> to vector<32x128xf32>
    %164 = arith.mulf %162, %163 : vector<32x128xf32>
    %165 = vector.broadcast %144 : vector<1x128xf32> to vector<32x128xf32>
    %166 = arith.addf %164, %165 : vector<32x128xf32>
    %167 = arith.truncf %166 : vector<32x128xf32> to vector<32x128xbf16>
    %c256_56 = arith.constant 256 : index
    %c0_57 = arith.constant 0 : index
    %168 = vector.load %arg2[%c256_56, %c0_57] : memref<512x512xbf16, #tpu.memory_space<vmem>>, vector<128x384xbf16>
    %cst_58 = arith.constant dense<0.000000e+00> : vector<32x384xf32>
    %169 = tpu.matmul %167, %168, %cst_58 {dimension_numbers = #tpu.dot_dimension_numbers<[1], [0], [0], [1], [0, 0, 1, 1], [], []>} : vector<32x128xbf16>, vector<128x384xbf16>, vector<32x384xf32> -> vector<32x384xf32>
    %170 = vector.extract_strided_slice %169 {offsets = [0, 0], sizes = [32, 128], strides = [1, 1]} : vector<32x384xf32> to vector<32x128xf32>
    %c8 = arith.constant 8 : index
    %c0_59 = arith.constant 0 : index
    %171 = vector.load %arg4[%c8, %c0_59] : memref<24x512xf32, #tpu.memory_space<vmem>>, vector<1x128xf32>
    %172 = vector.broadcast %171 : vector<1x128xf32> to vector<32x128xf32>
    %173 = arith.addf %170, %172 : vector<32x128xf32>
    %174 = vector.extract_strided_slice %169 {offsets = [0, 128], sizes = [32, 128], strides = [1, 1]} : vector<32x384xf32> to vector<32x128xf32>
    %c8_60 = arith.constant 8 : index
    %c128_61 = arith.constant 128 : index
    %175 = vector.load %arg4[%c8_60, %c128_61] : memref<24x512xf32, #tpu.memory_space<vmem>>, vector<1x128xf32>
    %176 = vector.broadcast %175 : vector<1x128xf32> to vector<32x128xf32>
    %177 = arith.addf %174, %176 : vector<32x128xf32>
    %178 = vector.extract_strided_slice %169 {offsets = [0, 256], sizes = [32, 128], strides = [1, 1]} : vector<32x384xf32> to vector<32x128xf32>
    %c8_62 = arith.constant 8 : index
    %c256_63 = arith.constant 256 : index
    %179 = vector.load %arg4[%c8_62, %c256_63] : memref<24x512xf32, #tpu.memory_space<vmem>>, vector<1x128xf32>
    %180 = vector.broadcast %179 : vector<1x128xf32> to vector<32x128xf32>
    %181 = arith.addf %178, %180 : vector<32x128xf32>
    %182 = vector.extract_strided_slice %173 {offsets = [0, 0], sizes = [1, 128], strides = [1, 1]} : vector<32x128xf32> to vector<1x128xf32>
    %183 = vector.extract_strided_slice %173 {offsets = [16, 0], sizes = [1, 128], strides = [1, 1]} : vector<32x128xf32> to vector<1x128xf32>
    %184 = tpu.concatenate %182, %183 in 0 : vector<1x128xf32>, vector<1x128xf32> -> vector<2x128xf32>
    %185 = vector.extract_strided_slice %166 {offsets = [0, 0], sizes = [1, 128], strides = [1, 1]} : vector<32x128xf32> to vector<1x128xf32>
    %186 = vector.extract_strided_slice %166 {offsets = [16, 0], sizes = [1, 128], strides = [1, 1]} : vector<32x128xf32> to vector<1x128xf32>
    %187 = tpu.concatenate %185, %186 in 0 : vector<1x128xf32>, vector<1x128xf32> -> vector<2x128xf32>
    %188 = vector.extract_strided_slice %25 {offsets = [0, 0], sizes = [1, 32], strides = [1, 1]} : vector<32x32xf32> to vector<1x32xf32>
    %189 = vector.extract_strided_slice %25 {offsets = [16, 0], sizes = [1, 32], strides = [1, 1]} : vector<32x32xf32> to vector<1x32xf32>
    %190 = tpu.concatenate %188, %189 in 0 : vector<1x32xf32>, vector<1x32xf32> -> vector<2x32xf32>
    %191 = vector.extract_strided_slice %184 {offsets = [0, 0], sizes = [2, 64], strides = [1, 1]} : vector<2x128xf32> to vector<2x64xf32>
    %192 = arith.truncf %191 : vector<2x64xf32> to vector<2x64xbf16>
    %193 = vector.extract_strided_slice %177 {offsets = [0, 0], sizes = [32, 64], strides = [1, 1]} : vector<32x128xf32> to vector<32x64xf32>
    %194 = arith.truncf %193 : vector<32x64xf32> to vector<32x64xbf16>
    %cst_64 = arith.constant dense<0.000000e+00> : vector<2x32xf32>
    %195 = tpu.matmul %192, %194, %cst_64 {dimension_numbers = #tpu.dot_dimension_numbers<[1], [1], [0], [0], [0, 0, 1, 0], [], []>} : vector<2x64xbf16>, vector<32x64xbf16>, vector<2x32xf32> -> vector<2x32xf32>
    %cst_65 = arith.constant 1.250000e-01 : f32
    %196 = vector.broadcast %cst_65 : f32 to vector<2x32xf32>
    %197 = arith.mulf %195, %196 : vector<2x32xf32>
    %198 = arith.addf %197, %190 : vector<2x32xf32>
    %cst_66 = arith.constant dense<0xFF800000> : vector<2xf32>
    %199 = vector.multi_reduction <maximumf>, %198, %cst_66 [1] : vector<2x32xf32> to vector<2xf32>
    %200 = vector.shape_cast %199 : vector<2xf32> to vector<2x1xf32>
    %201 = vector.broadcast %200 : vector<2x1xf32> to vector<2x32xf32>
    %202 = arith.subf %198, %201 : vector<2x32xf32>
    %203 = math.exp %202 : vector<2x32xf32>
    %cst_67 = arith.constant dense<0.000000e+00> : vector<2xf32>
    %204 = vector.multi_reduction <add>, %203, %cst_67 [1] : vector<2x32xf32> to vector<2xf32>
    %205 = vector.shape_cast %204 : vector<2xf32> to vector<2x1xf32>
    %206 = tpu.reciprocal %205 {approx = true} : vector<2x1xf32> -> vector<2x1xf32>
    %207 = vector.broadcast %206 : vector<2x1xf32> to vector<2x32xf32>
    %208 = arith.mulf %203, %207 : vector<2x32xf32>
    %209 = arith.truncf %208 : vector<2x32xf32> to vector<2x32xbf16>
    %210 = vector.extract_strided_slice %181 {offsets = [0, 0], sizes = [32, 64], strides = [1, 1]} : vector<32x128xf32> to vector<32x64xf32>
    %211 = arith.truncf %210 : vector<32x64xf32> to vector<32x64xbf16>
    %cst_68 = arith.constant dense<0.000000e+00> : vector<2x64xf32>
    %212 = tpu.matmul %209, %211, %cst_68 {dimension_numbers = #tpu.dot_dimension_numbers<[1], [0], [0], [1], [0, 0, 1, 1], [], []>} : vector<2x32xbf16>, vector<32x64xbf16>, vector<2x64xf32> -> vector<2x64xf32>
    %213 = vector.extract_strided_slice %184 {offsets = [0, 64], sizes = [2, 64], strides = [1, 1]} : vector<2x128xf32> to vector<2x64xf32>
    %214 = arith.truncf %213 : vector<2x64xf32> to vector<2x64xbf16>
    %215 = vector.extract_strided_slice %177 {offsets = [0, 64], sizes = [32, 64], strides = [1, 1]} : vector<32x128xf32> to vector<32x64xf32>
    %216 = arith.truncf %215 : vector<32x64xf32> to vector<32x64xbf16>
    %cst_69 = arith.constant dense<0.000000e+00> : vector<2x32xf32>
    %217 = tpu.matmul %214, %216, %cst_69 {dimension_numbers = #tpu.dot_dimension_numbers<[1], [1], [0], [0], [0, 0, 1, 0], [], []>} : vector<2x64xbf16>, vector<32x64xbf16>, vector<2x32xf32> -> vector<2x32xf32>
    %cst_70 = arith.constant 1.250000e-01 : f32
    %218 = vector.broadcast %cst_70 : f32 to vector<2x32xf32>
    %219 = arith.mulf %217, %218 : vector<2x32xf32>
    %220 = arith.addf %219, %190 : vector<2x32xf32>
    %cst_71 = arith.constant dense<0xFF800000> : vector<2xf32>
    %221 = vector.multi_reduction <maximumf>, %220, %cst_71 [1] : vector<2x32xf32> to vector<2xf32>
    %222 = vector.shape_cast %221 : vector<2xf32> to vector<2x1xf32>
    %223 = vector.broadcast %222 : vector<2x1xf32> to vector<2x32xf32>
    %224 = arith.subf %220, %223 : vector<2x32xf32>
    %225 = math.exp %224 : vector<2x32xf32>
    %cst_72 = arith.constant dense<0.000000e+00> : vector<2xf32>
    %226 = vector.multi_reduction <add>, %225, %cst_72 [1] : vector<2x32xf32> to vector<2xf32>
    %227 = vector.shape_cast %226 : vector<2xf32> to vector<2x1xf32>
    %228 = tpu.reciprocal %227 {approx = true} : vector<2x1xf32> -> vector<2x1xf32>
    %229 = vector.broadcast %228 : vector<2x1xf32> to vector<2x32xf32>
    %230 = arith.mulf %225, %229 : vector<2x32xf32>
    %231 = arith.truncf %230 : vector<2x32xf32> to vector<2x32xbf16>
    %232 = vector.extract_strided_slice %181 {offsets = [0, 64], sizes = [32, 64], strides = [1, 1]} : vector<32x128xf32> to vector<32x64xf32>
    %233 = arith.truncf %232 : vector<32x64xf32> to vector<32x64xbf16>
    %cst_73 = arith.constant dense<0.000000e+00> : vector<2x64xf32>
    %234 = tpu.matmul %231, %233, %cst_73 {dimension_numbers = #tpu.dot_dimension_numbers<[1], [0], [0], [1], [0, 0, 1, 1], [], []>} : vector<2x32xbf16>, vector<32x64xbf16>, vector<2x64xf32> -> vector<2x64xf32>
    %235 = tpu.concatenate %212, %234 in 1 : vector<2x64xf32>, vector<2x64xf32> -> vector<2x128xf32>
    %236 = arith.truncf %235 : vector<2x128xf32> to vector<2x128xbf16>
    %c640 = arith.constant 640 : index
    %c0_74 = arith.constant 0 : index
    %237 = vector.load %arg3[%c640, %c0_74] : memref<1536x128xbf16, #tpu.memory_space<vmem>>, vector<128x128xbf16>
    %cst_75 = arith.constant dense<0.000000e+00> : vector<2x128xf32>
    %238 = tpu.matmul %236, %237, %cst_75 {dimension_numbers = #tpu.dot_dimension_numbers<[1], [0], [0], [1], [0, 0, 1, 1], [], []>} : vector<2x128xbf16>, vector<128x128xbf16>, vector<2x128xf32> -> vector<2x128xf32>
    %c9 = arith.constant 9 : index
    %c0_76 = arith.constant 0 : index
    %239 = vector.load %arg4[%c9, %c0_76] : memref<24x512xf32, #tpu.memory_space<vmem>>, vector<1x128xf32>
    %240 = vector.broadcast %239 : vector<1x128xf32> to vector<2x128xf32>
    %241 = arith.addf %238, %240 : vector<2x128xf32>
    %242 = arith.addf %187, %241 : vector<2x128xf32>
    %c10 = arith.constant 10 : index
    %c0_77 = arith.constant 0 : index
    %243 = vector.load %arg4[%c10, %c0_77] : memref<24x512xf32, #tpu.memory_space<vmem>>, vector<1x128xf32>
    %c11 = arith.constant 11 : index
    %c0_78 = arith.constant 0 : index
    %244 = vector.load %arg4[%c11, %c0_78] : memref<24x512xf32, #tpu.memory_space<vmem>>, vector<1x128xf32>
    %cst_79 = arith.constant dense<0.000000e+00> : vector<2xf32>
    %245 = vector.multi_reduction <add>, %242, %cst_79 [1] : vector<2x128xf32> to vector<2xf32>
    %246 = vector.shape_cast %245 : vector<2xf32> to vector<2x1xf32>
    %cst_80 = arith.constant 1.280000e+02 : f32
    %247 = vector.broadcast %cst_80 : f32 to vector<2x1xf32>
    %248 = arith.divf %246, %247 : vector<2x1xf32>
    %249 = vector.broadcast %248 : vector<2x1xf32> to vector<2x128xf32>
    %250 = arith.subf %242, %249 : vector<2x128xf32>
    %251 = arith.mulf %250, %250 : vector<2x128xf32>
    %cst_81 = arith.constant dense<0.000000e+00> : vector<2xf32>
    %252 = vector.multi_reduction <add>, %251, %cst_81 [1] : vector<2x128xf32> to vector<2xf32>
    %253 = vector.shape_cast %252 : vector<2xf32> to vector<2x1xf32>
    %cst_82 = arith.constant 1.280000e+02 : f32
    %254 = vector.broadcast %cst_82 : f32 to vector<2x1xf32>
    %255 = arith.divf %253, %254 : vector<2x1xf32>
    %256 = vector.broadcast %248 : vector<2x1xf32> to vector<2x128xf32>
    %257 = arith.subf %242, %256 : vector<2x128xf32>
    %cst_83 = arith.constant 9.99999996E-13 : f32
    %258 = vector.broadcast %cst_83 : f32 to vector<2x1xf32>
    %259 = arith.addf %255, %258 : vector<2x1xf32>
    %260 = math.rsqrt %259 : vector<2x1xf32>
    %261 = vector.broadcast %260 : vector<2x1xf32> to vector<2x128xf32>
    %262 = arith.mulf %257, %261 : vector<2x128xf32>
    %263 = vector.broadcast %243 : vector<1x128xf32> to vector<2x128xf32>
    %264 = arith.mulf %262, %263 : vector<2x128xf32>
    %265 = vector.broadcast %244 : vector<1x128xf32> to vector<2x128xf32>
    %266 = arith.addf %264, %265 : vector<2x128xf32>
    %267 = arith.truncf %266 : vector<2x128xf32> to vector<2x128xbf16>
    %c384 = arith.constant 384 : index
    %c0_84 = arith.constant 0 : index
    %268 = vector.load %arg2[%c384, %c0_84] : memref<512x512xbf16, #tpu.memory_space<vmem>>, vector<128x512xbf16>
    %cst_85 = arith.constant dense<0.000000e+00> : vector<2x512xf32>
    %269 = tpu.matmul %267, %268, %cst_85 {dimension_numbers = #tpu.dot_dimension_numbers<[1], [0], [0], [1], [0, 0, 1, 1], [], []>} : vector<2x128xbf16>, vector<128x512xbf16>, vector<2x512xf32> -> vector<2x512xf32>
    %c12 = arith.constant 12 : index
    %c0_86 = arith.constant 0 : index
    %270 = vector.load %arg4[%c12, %c0_86] : memref<24x512xf32, #tpu.memory_space<vmem>>, vector<1x512xf32>
    %271 = vector.broadcast %270 : vector<1x512xf32> to vector<2x512xf32>
    %272 = arith.addf %269, %271 : vector<2x512xf32>
    %273 = arith.mulf %272, %272 : vector<2x512xf32>
    %274 = arith.mulf %272, %273 : vector<2x512xf32>
    %cst_87 = arith.constant 4.471500e-02 : f32
    %275 = vector.broadcast %cst_87 : f32 to vector<2x512xf32>
    %276 = arith.mulf %275, %274 : vector<2x512xf32>
    %277 = arith.addf %272, %276 : vector<2x512xf32>
    %cst_88 = arith.constant 0.797884583 : f32
    %278 = vector.broadcast %cst_88 : f32 to vector<2x512xf32>
    %279 = arith.mulf %278, %277 : vector<2x512xf32>
    %280 = math.tanh %279 : vector<2x512xf32>
    %cst_89 = arith.constant 1.000000e+00 : f32
    %281 = vector.broadcast %cst_89 : f32 to vector<2x512xf32>
    %282 = arith.addf %281, %280 : vector<2x512xf32>
    %cst_90 = arith.constant 5.000000e-01 : f32
    %283 = vector.broadcast %cst_90 : f32 to vector<2x512xf32>
    %284 = arith.mulf %283, %282 : vector<2x512xf32>
    %285 = arith.mulf %272, %284 : vector<2x512xf32>
    %286 = arith.truncf %285 : vector<2x512xf32> to vector<2x512xbf16>
    %c768 = arith.constant 768 : index
    %c0_91 = arith.constant 0 : index
    %287 = vector.load %arg3[%c768, %c0_91] : memref<1536x128xbf16, #tpu.memory_space<vmem>>, vector<512x128xbf16>
    %cst_92 = arith.constant dense<0.000000e+00> : vector<2x128xf32>
    %288 = tpu.matmul %286, %287, %cst_92 {dimension_numbers = #tpu.dot_dimension_numbers<[1], [0], [0], [1], [0, 0, 1, 1], [], []>} : vector<2x512xbf16>, vector<512x128xbf16>, vector<2x128xf32> -> vector<2x128xf32>
    %c13 = arith.constant 13 : index
    %c0_93 = arith.constant 0 : index
    %289 = vector.load %arg4[%c13, %c0_93] : memref<24x512xf32, #tpu.memory_space<vmem>>, vector<1x128xf32>
    %290 = vector.broadcast %289 : vector<1x128xf32> to vector<2x128xf32>
    %291 = arith.addf %288, %290 : vector<2x128xf32>
    %292 = arith.addf %266, %291 : vector<2x128xf32>
    %c14 = arith.constant 14 : index
    %c0_94 = arith.constant 0 : index
    %293 = vector.load %arg4[%c14, %c0_94] : memref<24x512xf32, #tpu.memory_space<vmem>>, vector<1x128xf32>
    %c15 = arith.constant 15 : index
    %c0_95 = arith.constant 0 : index
    %294 = vector.load %arg4[%c15, %c0_95] : memref<24x512xf32, #tpu.memory_space<vmem>>, vector<1x128xf32>
    %cst_96 = arith.constant dense<0.000000e+00> : vector<2xf32>
    %295 = vector.multi_reduction <add>, %292, %cst_96 [1] : vector<2x128xf32> to vector<2xf32>
    %296 = vector.shape_cast %295 : vector<2xf32> to vector<2x1xf32>
    %cst_97 = arith.constant 1.280000e+02 : f32
    %297 = vector.broadcast %cst_97 : f32 to vector<2x1xf32>
    %298 = arith.divf %296, %297 : vector<2x1xf32>
    %299 = vector.broadcast %298 : vector<2x1xf32> to vector<2x128xf32>
    %300 = arith.subf %292, %299 : vector<2x128xf32>
    %301 = arith.mulf %300, %300 : vector<2x128xf32>
    %cst_98 = arith.constant dense<0.000000e+00> : vector<2xf32>
    %302 = vector.multi_reduction <add>, %301, %cst_98 [1] : vector<2x128xf32> to vector<2xf32>
    %303 = vector.shape_cast %302 : vector<2xf32> to vector<2x1xf32>
    %cst_99 = arith.constant 1.280000e+02 : f32
    %304 = vector.broadcast %cst_99 : f32 to vector<2x1xf32>
    %305 = arith.divf %303, %304 : vector<2x1xf32>
    %306 = vector.broadcast %298 : vector<2x1xf32> to vector<2x128xf32>
    %307 = arith.subf %292, %306 : vector<2x128xf32>
    %cst_100 = arith.constant 9.99999996E-13 : f32
    %308 = vector.broadcast %cst_100 : f32 to vector<2x1xf32>
    %309 = arith.addf %305, %308 : vector<2x1xf32>
    %310 = math.rsqrt %309 : vector<2x1xf32>
    %311 = vector.broadcast %310 : vector<2x1xf32> to vector<2x128xf32>
    %312 = arith.mulf %307, %311 : vector<2x128xf32>
    %313 = vector.broadcast %293 : vector<1x128xf32> to vector<2x128xf32>
    %314 = arith.mulf %312, %313 : vector<2x128xf32>
    %315 = vector.broadcast %294 : vector<1x128xf32> to vector<2x128xf32>
    %316 = arith.addf %314, %315 : vector<2x128xf32>
    %317 = arith.truncf %316 : vector<2x128xf32> to vector<2x128xbf16>
    %c1280 = arith.constant 1280 : index
    %c0_101 = arith.constant 0 : index
    %318 = vector.load %arg3[%c1280, %c0_101] : memref<1536x128xbf16, #tpu.memory_space<vmem>>, vector<128x128xbf16>
    %cst_102 = arith.constant dense<0.000000e+00> : vector<2x128xf32>
    %319 = tpu.matmul %317, %318, %cst_102 {dimension_numbers = #tpu.dot_dimension_numbers<[1], [0], [0], [1], [0, 0, 1, 1], [], []>} : vector<2x128xbf16>, vector<128x128xbf16>, vector<2x128xf32> -> vector<2x128xf32>
    %c16 = arith.constant 16 : index
    %c0_103 = arith.constant 0 : index
    %320 = vector.load %arg4[%c16, %c0_103] : memref<24x512xf32, #tpu.memory_space<vmem>>, vector<1x128xf32>
    %321 = vector.broadcast %320 : vector<1x128xf32> to vector<2x128xf32>
    %322 = arith.addf %319, %321 : vector<2x128xf32>
    %323 = arith.mulf %322, %322 : vector<2x128xf32>
    %324 = arith.mulf %322, %323 : vector<2x128xf32>
    %cst_104 = arith.constant 4.471500e-02 : f32
    %325 = vector.broadcast %cst_104 : f32 to vector<2x128xf32>
    %326 = arith.mulf %325, %324 : vector<2x128xf32>
    %327 = arith.addf %322, %326 : vector<2x128xf32>
    %cst_105 = arith.constant 0.797884583 : f32
    %328 = vector.broadcast %cst_105 : f32 to vector<2x128xf32>
    %329 = arith.mulf %328, %327 : vector<2x128xf32>
    %330 = math.tanh %329 : vector<2x128xf32>
    %cst_106 = arith.constant 1.000000e+00 : f32
    %331 = vector.broadcast %cst_106 : f32 to vector<2x128xf32>
    %332 = arith.addf %331, %330 : vector<2x128xf32>
    %cst_107 = arith.constant 5.000000e-01 : f32
    %333 = vector.broadcast %cst_107 : f32 to vector<2x128xf32>
    %334 = arith.mulf %333, %332 : vector<2x128xf32>
    %335 = arith.mulf %322, %334 : vector<2x128xf32>
    %c17 = arith.constant 17 : index
    %c0_108 = arith.constant 0 : index
    %336 = vector.load %arg4[%c17, %c0_108] : memref<24x512xf32, #tpu.memory_space<vmem>>, vector<1x128xf32>
    %c18 = arith.constant 18 : index
    %c0_109 = arith.constant 0 : index
    %337 = vector.load %arg4[%c18, %c0_109] : memref<24x512xf32, #tpu.memory_space<vmem>>, vector<1x128xf32>
    %cst_110 = arith.constant dense<0.000000e+00> : vector<2xf32>
    %338 = vector.multi_reduction <add>, %335, %cst_110 [1] : vector<2x128xf32> to vector<2xf32>
    %339 = vector.shape_cast %338 : vector<2xf32> to vector<2x1xf32>
    %cst_111 = arith.constant 1.280000e+02 : f32
    %340 = vector.broadcast %cst_111 : f32 to vector<2x1xf32>
    %341 = arith.divf %339, %340 : vector<2x1xf32>
    %342 = vector.broadcast %341 : vector<2x1xf32> to vector<2x128xf32>
    %343 = arith.subf %335, %342 : vector<2x128xf32>
    %344 = arith.mulf %343, %343 : vector<2x128xf32>
    %cst_112 = arith.constant dense<0.000000e+00> : vector<2xf32>
    %345 = vector.multi_reduction <add>, %344, %cst_112 [1] : vector<2x128xf32> to vector<2xf32>
    %346 = vector.shape_cast %345 : vector<2xf32> to vector<2x1xf32>
    %cst_113 = arith.constant 1.280000e+02 : f32
    %347 = vector.broadcast %cst_113 : f32 to vector<2x1xf32>
    %348 = arith.divf %346, %347 : vector<2x1xf32>
    %349 = vector.broadcast %341 : vector<2x1xf32> to vector<2x128xf32>
    %350 = arith.subf %335, %349 : vector<2x128xf32>
    %cst_114 = arith.constant 9.99999996E-13 : f32
    %351 = vector.broadcast %cst_114 : f32 to vector<2x1xf32>
    %352 = arith.addf %348, %351 : vector<2x1xf32>
    %353 = math.rsqrt %352 : vector<2x1xf32>
    %354 = vector.broadcast %353 : vector<2x1xf32> to vector<2x128xf32>
    %355 = arith.mulf %350, %354 : vector<2x128xf32>
    %356 = vector.broadcast %336 : vector<1x128xf32> to vector<2x128xf32>
    %357 = arith.mulf %355, %356 : vector<2x128xf32>
    %358 = vector.broadcast %337 : vector<1x128xf32> to vector<2x128xf32>
    %359 = arith.addf %357, %358 : vector<2x128xf32>
    %360 = arith.truncf %359 : vector<2x128xf32> to vector<2x128xbf16>
    %c1408 = arith.constant 1408 : index
    %c0_115 = arith.constant 0 : index
    %361 = vector.load %arg3[%c1408, %c0_115] : memref<1536x128xbf16, #tpu.memory_space<vmem>>, vector<128x128xbf16>
    %cst_116 = arith.constant dense<0.000000e+00> : vector<2x128xf32>
    %362 = tpu.matmul %360, %361, %cst_116 {dimension_numbers = #tpu.dot_dimension_numbers<[1], [0], [0], [1], [0, 0, 1, 1], [], []>} : vector<2x128xbf16>, vector<128x128xbf16>, vector<2x128xf32> -> vector<2x128xf32>
    %c19 = arith.constant 19 : index
    %c0_117 = arith.constant 0 : index
    %363 = vector.load %arg4[%c19, %c0_117] : memref<24x512xf32, #tpu.memory_space<vmem>>, vector<1x128xf32>
    %364 = vector.broadcast %363 : vector<1x128xf32> to vector<2x128xf32>
    %365 = arith.addf %362, %364 : vector<2x128xf32>
    %366 = vector.extract_strided_slice %365 {offsets = [0, 0], sizes = [2, 2], strides = [1, 1]} : vector<2x128xf32> to vector<2x2xf32>
    %cst_118 = arith.constant dense<0xFF800000> : vector<2xf32>
    %367 = vector.multi_reduction <maximumf>, %366, %cst_118 [1] : vector<2x2xf32> to vector<2xf32>
    %368 = vector.shape_cast %367 : vector<2xf32> to vector<2x1xf32>
    %369 = vector.broadcast %368 : vector<2x1xf32> to vector<2x2xf32>
    %370 = arith.subf %366, %369 : vector<2x2xf32>
    %371 = math.exp %370 : vector<2x2xf32>
    %cst_119 = arith.constant dense<0.000000e+00> : vector<2xf32>
    %372 = vector.multi_reduction <add>, %371, %cst_119 [1] : vector<2x2xf32> to vector<2xf32>
    %373 = vector.shape_cast %372 : vector<2xf32> to vector<2x1xf32>
    %374 = math.log %373 : vector<2x1xf32>
    %375 = arith.addf %368, %374 : vector<2x1xf32>
    %c40 = arith.constant 40 : index
    %c0_120 = arith.constant 0 : index
    %376 = vector.load %arg0[%c40, %c0_120] : memref<48x32xi32, #tpu.memory_space<vmem>>, vector<2x1xi32>
    %377 = tpu.iota {dimensions = array<i32: 1>} : vector<2x2xi32>
    %378 = vector.broadcast %376 : vector<2x1xi32> to vector<2x2xi32>
    %379 = arith.cmpi eq, %377, %378 : vector<2x2xi32>
    %380 = arith.extui %379 : vector<2x2xi1> to vector<2x2xi32>
    %381 = arith.sitofp %380 : vector<2x2xi32> to vector<2x2xf32>
    %382 = vector.shape_cast %375 : vector<2x1xf32> to vector<1x2x1xf32>
    %cst_121 = arith.constant dense<0.000000e+00> : vector<1xf32>
    %383 = vector.multi_reduction <add>, %382, %cst_121 [1, 2] : vector<1x2x1xf32> to vector<1xf32>
    %384 = vector.shape_cast %383 : vector<1xf32> to vector<1x1x1xf32>
    %385 = vector.extract %384[0, 0, 0] : f32 from vector<1x1x1xf32>
    %386 = arith.mulf %381, %366 : vector<2x2xf32>
    %387 = vector.shape_cast %386 : vector<2x2xf32> to vector<1x2x2xf32>
    %cst_122 = arith.constant dense<0.000000e+00> : vector<1xf32>
    %388 = vector.multi_reduction <add>, %387, %cst_122 [1, 2] : vector<1x2x2xf32> to vector<1xf32>
    %389 = vector.shape_cast %388 : vector<1xf32> to vector<1x1x1xf32>
    %390 = vector.extract %389[0, 0, 0] : f32 from vector<1x1x1xf32>
    %391 = arith.subf %385, %390 : f32
    %cst_123 = arith.constant 5.000000e-01 : f32
    %392 = arith.mulf %391, %cst_123 : f32
    %393 = vector.broadcast %392 : f32 to vector<1x128xf32>
    %cst_124 = arith.constant 0.000000e+00 : f32
    %394 = vector.broadcast %cst_124 : f32 to vector<5x128xf32>
    %395 = tpu.concatenate %365, %393, %394 in 0 : vector<2x128xf32>, vector<1x128xf32>, vector<5x128xf32> -> vector<8x128xf32>
    %c0_125 = arith.constant 0 : index
    %c0_126 = arith.constant 0 : index
    %396 = vector.load %arg5[%c0_125, %c0_126] : memref<8x128xf32, #tpu.memory_space<vmem>>, vector<8x128xf32>
    tpu.vector_store %arg5[%c0_125, %c0_126], %395 {strides = array<i32>} : memref<8x128xf32, #tpu.memory_space<vmem>>, vector<8x128xf32>,
    return
  }
}

</mosaic_0001>

<llo_original>
// kernel: prompt_wsw_forward.1
$region0: #{prompt_wsw_forward.1}
  #allocation0 [shape = 'u32[]', space=smem, size = 0x4, offset = 0x4, fixed_abs, tag = 'smem constant byte address 0x4 - core index']
  #allocation1 [shape = 'u32[144,128]{1,0:T(1,128)}', space=vmem, size = 0x12000, scoped, tag = 'internal scratch']
  %s0 = inlined_call_operand.vmem [shape: s32[48,32], index: 0, kind: input, shape index: {}]
  %s1 = inlined_call_operand.vmem [shape: f32[16,128], index: 1, kind: input, shape index: {}]
  %s2 = inlined_call_operand.hbm [shape: bf16[512,512], index: 2, kind: input, shape index: {}]
  %s3 = inlined_call_operand.hbm [shape: bf16[1536,128], index: 3, kind: input, shape index: {}]
  %s4 = inlined_call_operand.vmem [shape: f32[24,512], index: 4, kind: input, shape index: {}]
  %s5 = inlined_call_operand.vmem [shape: f32[8,128], index: 5, kind: output, shape index: {}]
  %s6 = sld [smem:[#allocation0]]
  $region38: #{prompt_wsw_forward.1} parent=0
    _
  %s8 = ssub.s32 1, %s6
  %s9 = scalar_select 0, %s8, %s6
  $region1: #{prompt_wsw_forward.1} parent=0
    #allocation2 [shape = 'u8[524288]{0}', space=vmem, size = 0x80000, scoped, tag = 'input window, operand 2, single buffered']
    #allocation3 [shape = 's32[1]{0}', space=sflag, size = 0x4, scoped, tag = 'scoped memory for prompt_wsw_forward.1']
    #allocation4 [shape = 'u8[393216]{0}', space=vmem, size = 0x60000, scoped, tag = 'input window, operand 3, single buffered']
    #allocation5 [shape = 's32[1]{0}', space=sflag, size = 0x4, scoped, tag = 'scoped memory for prompt_wsw_forward.1']
    %10 = vsyncpa [#allocation3], 0
    %11 = vsyncpa [#allocation5], 0
    // Predicated region
    $region2: #{prompt_wsw_forward.1} parent=1 // pred_check
      _
    $region3: #{prompt_wsw_forward.1} parent=1 // pred_check_branch
      %13 = sbr.rel (0) target = $region5
    $region4: #{prompt_wsw_forward.1} parent=1 // pred_region
      _
    $region5: #{prompt_wsw_forward.1} parent=1 // pred_fallthru
      _
    // Predicated region
    $region6: #{prompt_wsw_forward.1} parent=1 // pred_check
      _
    $region7: #{prompt_wsw_forward.1} parent=1 // pred_check_branch
      %15 = sbr.rel (0) target = $region9
    $region8: #{prompt_wsw_forward.1} parent=1 // pred_region
      _
    $region9: #{prompt_wsw_forward.1} parent=1 // pred_fallthru
      _
    // Predicated region
    $region10: #{prompt_wsw_forward.1} parent=1 // pred_check
      _
    $region11: #{prompt_wsw_forward.1} parent=1 // pred_check_branch
      %17 = sbr.rel (0) target = $region13
    $region12: #{prompt_wsw_forward.1} parent=1 // pred_region
      %s19 = ssub.s32 16384, 16384
      %20 = vsyncadd [#allocation3], %s19
      %s21 = sshll.u32 [#allocation2], 4
      %s22 = int_to_ptr.vmem [resolvable:$true] %s21
      %27 = dma.hbm_to_vmem [thread:$0]  %s2, 16384, %s22, [#allocation3], 256, 256, 16
    $region13: #{prompt_wsw_forward.1} parent=1 // pred_fallthru
      _
    // Predicated region
    $region14: #{prompt_wsw_forward.1} parent=1 // pred_check
      _
    $region15: #{prompt_wsw_forward.1} parent=1 // pred_check_branch
      %29 = sbr.rel (0) target = $region17
    $region16: #{prompt_wsw_forward.1} parent=1 // pred_region
      %s31 = ssub.s32 12288, 12288
      %32 = vsyncadd [#allocation5], %s31
      %s33 = sshll.u32 [#allocation4], 4
      %s34 = int_to_ptr.vmem [resolvable:$true] %s33
      %39 = dma.hbm_to_vmem [thread:$0]  %s3, 12288, %s34, [#allocation5], 64, 64, 4
    $region17: #{prompt_wsw_forward.1} parent=1 // pred_fallthru
      _
    // Predicated region
    $region18: #{prompt_wsw_forward.1} parent=1 // pred_check
      _
    $region19: #{prompt_wsw_forward.1} parent=1 // pred_check_branch
      %41 = sbr.rel (0) target = $region21
    $region20: #{prompt_wsw_forward.1} parent=1 // pred_region
      _
    $region21: #{prompt_wsw_forward.1} parent=1 // pred_fallthru
      _
    // Predicated region
    $region22: #{prompt_wsw_forward.1} parent=1 // pred_check
      _
    $region23: #{prompt_wsw_forward.1} parent=1 // pred_check_branch
      %43 = sbr.rel (0) target = $region25
    $region24: #{prompt_wsw_forward.1} parent=1 // pred_region
      %44 = dma.done [#allocation3], 16384
    $region25: #{prompt_wsw_forward.1} parent=1 // pred_fallthru
      _
    // Predicated region
    $region26: #{prompt_wsw_forward.1} parent=1 // pred_check
      _
    $region27: #{prompt_wsw_forward.1} parent=1 // pred_check_branch
      %46 = sbr.rel (0) target = $region29
    $region28: #{prompt_wsw_forward.1} parent=1 // pred_region
      %47 = dma.done [#allocation5], 12288
    $region29: #{prompt_wsw_forward.1} parent=1 // pred_fallthru
      _
    %v49 = vld [vmem:[%s0] sm:$0xff]
    %v50 = vld [vmem:[%s0 + $0x8] sm:$0xff]
    %v51 = vld [vmem:[%s0 + $0x10] sm:$0xff]
    %v52 = vld [vmem:[%s0 + $0x18] sm:$0xff]
    %v53 = vlaneseq
    %v54 = vand.u32 %v53, 127
    %55 = vset.pattern.permute.xlu0 0
    %56 = vperm.xlu0 %55, %v49
    %v57 = vpop.permute.xlu0 %56
    %58 = vset.pattern.permute.xlu0 0
    %59 = vperm.xlu0 %58, %v50
    %v60 = vpop.permute.xlu0 %59
    %61 = vset.pattern.permute.xlu0 0
    %62 = vperm.xlu0 %61, %v51
    %v63 = vpop.permute.xlu0 %62
    %64 = vset.pattern.permute.xlu0 0
    %65 = vperm.xlu0 %64, %v52
    %v66 = vpop.permute.xlu0 %65
    %vm67 = vcmp.eq.s32.totalorder %v54, %v57
    %vm68 = vcmp.eq.s32.totalorder %v54, %v60
    %vm69 = vcmp.eq.s32.totalorder %v54, %v63
    %vm70 = vcmp.eq.s32.totalorder %v54, %v66
    %v71 = vsel %vm67, 1, 0
    %v72 = vsel %vm68, 1, 0
    %v73 = vsel %vm69, 1, 0
    %v74 = vsel %vm70, 1, 0
    %v75 = vcvt.s32.f32 %v71
    %v76 = vcvt.s32.f32 %v72
    %v77 = vcvt.s32.f32 %v73
    %v78 = vcvt.s32.f32 %v74
    %v79 = vld [vmem:[%s1] sm:$0xff]
    %v80 = vld [vmem:[%s1 + $0x8] sm:$0xff]
    %vm81 = vcmask 130048
    %v83 = vsel %vm81, %v75, 0
    %v86 = vsel %vm81, %v76, 0
    %v89 = vsel %vm81, %v77, 0
    %v92 = vsel %vm81, %v78, 0
    %94 = vmatprep.subr.mxu0 0.0
    %95 = vmatpush1.msra.mxu0 0.0
    %96 = vmatprep.subr.mxu0 0.0
    %97 = vmatpush1.msra.mxu0 0.0
    %98 = vmatprep.subr.mxu0 0.0
    %99 = vmatpush1.msra.mxu0 0.0
    %100 = vmatprep.subr.mxu0 0.0
    %101 = vmatpush1.msra.mxu0 0.0
    %102 = vmatprep.subr.mxu0 0.0
    %103 = vmatpush1.msra.mxu0 0.0
    %104 = vmatprep.subr.mxu0 0.0
    %105 = vmatpush1.msra.mxu0 0.0
    %106 = vmatprep.subr.mxu0 0.0
    %107 = vmatpush1.msra.mxu0 0.0
    %108 = vmatprep.subr.mxu0 0.0
    %109 = vmatpush1.msra.mxu0 0.0
    %110 = vmatprep.subr.mxu0 0.0
    %111 = vmatpush1.msra.mxu0 0.0
    %112 = vmatprep.subr.mxu0 0.0
    %113 = vmatpush1.msra.mxu0 0.0
    %114 = vmatprep.subr.mxu0 0.0
    %115 = vmatpush1.msra.mxu0 0.0
    %116 = vmatprep.subr.mxu0 0.0
    %117 = vmatpush1.msra.mxu0 0.0
    %118 = vmatprep.subr.mxu0 0.0
    %119 = vmatpush1.msra.mxu0 0.0
    %120 = vmatprep.subr.mxu0 0.0
    %121 = vmatpush1.msra.mxu0 0.0
    %122 = vmatprep.subr.mxu0 0.0
    %123 = vmatpush1.msra.mxu0 %v80
    %124 = vmatprep.subr.mxu0 0.0
    %125 = vmatpush1.msra.mxu0 %v79
    %126 = vmatprep.subr.mxu0 0.0
    %127 = vmatpush2.msra.mxu0 0.0
    %128 = vmatprep.subr.mxu0 0.0
    %129 = vmatpush2.msra.mxu0 0.0
    %130 = vmatprep.subr.mxu0 0.0
    %131 = vmatpush2.msra.mxu0 0.0
    %132 = vmatprep.subr.mxu0 0.0
    %133 = vmatpush2.msra.mxu0 0.0
    %134 = vmatprep.subr.mxu0 0.0
    %135 = vmatpush2.msra.mxu0 0.0
    %136 = vmatprep.subr.mxu0 0.0
    %137 = vmatpush2.msra.mxu0 0.0
    %138 = vmatprep.subr.mxu0 0.0
    %139 = vmatpush2.msra.mxu0 0.0
    %140 = vmatprep.subr.mxu0 0.0
    %141 = vmatpush2.msra.mxu0 0.0
    %142 = vmatprep.subr.mxu0 0.0
    %143 = vmatpush2.msra.mxu0 0.0
    %144 = vmatprep.subr.mxu0 0.0
    %145 = vmatpush2.msra.mxu0 0.0
    %146 = vmatprep.subr.mxu0 0.0
    %147 = vmatpush2.msra.mxu0 0.0
    %148 = vmatprep.subr.mxu0 0.0
    %149 = vmatpush2.msra.mxu0 0.0
    %150 = vmatprep.subr.mxu0 0.0
    %151 = vmatpush2.msra.mxu0 0.0
    %152 = vmatprep.subr.mxu0 0.0
    %153 = vmatpush2.msra.mxu0 0.0
    %154 = vmatprep.subr.mxu0 0.0
    %155 = vmatpush2.msra.mxu0 0.0
    %156 = vmatprep.subr.mxu0 0.0
    %157 = vmatpush2.msra.mxu0 0.0
    %158 = vmatprep.mubr.f32.mxu0 0.0
    %159 = vmatmul.mubr.f32.gmra.mxu0 %v83
    %v160 = vpop.f32.mrf.mxu0
    %v161 = vadd.f32 0.0, %v160
    %v162 = vpop.f32.mrf.mxu0
    %163 = vmatprep.mubr.f32.mxu0 0.0
    %164 = vmatmul.mubr.f32.gmra.mxu0 %v86
    %v165 = vpop.f32.mrf.mxu0
    %v166 = vadd.f32 0.0, %v165
    %v167 = vpop.f32.mrf.mxu0
    %168 = vmatprep.mubr.f32.mxu0 0.0
    %169 = vmatmul.mubr.f32.gmra.mxu0 %v89
    %v170 = vpop.f32.mrf.mxu0
    %v171 = vadd.f32 0.0, %v170
    %v172 = vpop.f32.mrf.mxu0
    %173 = vmatprep.mubr.f32.mxu0 0.0
    %174 = vmatmul.mubr.f32.gmra.mxu0 %v92
    %v175 = vpop.f32.mrf.mxu0
    %v176 = vadd.f32 0.0, %v175
    %v177 = vpop.f32.mrf.mxu0
    %178 = vdwg.mxu0
    %v179 = vld [vmem:[%s0 + $0x20] sm:$0x1]
    %v180 = vcvt.s32.f32 %v179
    %v181 = vsub.f32 1.0, %v180
    %v182 = vmul.f32 %v181, -1e+09
    %v183 = vlaneseq
    %v184 = vshrl.u32 %v183, 7
    %v185 = vadd.s32 %v184, 8
    %v186 = vadd.s32 %v184, 16
    %v187 = vadd.s32 %v184, 24
    %v188 = vshra.s32 %v184, 4
    %v189 = vshra.s32 %v185, 4
    %v190 = vshra.s32 %v186, 4
    %v191 = vshra.s32 %v187, 4
    %v192 = vshra.s32 %v54, 4
    %vm193 = vcmp.eq.s32.totalorder %v188, %v192
    %vm194 = vcmp.eq.s32.totalorder %v189, %v192
    %vm195 = vcmp.eq.s32.totalorder %v190, %v192
    %vm196 = vcmp.eq.s32.totalorder %v191, %v192
    %v197 = vsel %vm193, 0.0, -1e+09
    %v198 = vsel %vm194, 0.0, -1e+09
    %v199 = vsel %vm195, 0.0, -1e+09
    %v200 = vsel %vm196, 0.0, -1e+09
    %v201 = vlaneseq
    %v202 = vshrl.u32 %v201, 7
    %v203 = vsub.s32 0, %v202
    %v204 = vrot.slane %v182, %v203
    %v205 = vadd.f32 %v197, %v204
    %v206 = vadd.f32 %v198, %v204
    %v207 = vadd.f32 %v199, %v204
    %v208 = vadd.f32 %v200, %v204
    %v209 = vpack.c.bf16 %v166, %v161
    %v210 = vpack.c.bf16 %v176, %v171
    %v211 = vld [vmem:[#allocation2] sm:$0xff]
    %v212 = vld [vmem:[#allocation2 + $0x8] sm:$0xf]
    %v213 = vld [vmem:[#allocation2 + $0x10] sm:$0xff]
    %v214 = vld [vmem:[#allocation2 + $0x18] sm:$0xf]
    %v215 = vld [vmem:[#allocation2 + $0x20] sm:$0xff]
    %v216 = vld [vmem:[#allocation2 + $0x28] sm:$0xf]
    %v217 = vld [vmem:[#allocation2 + $0x30] sm:$0xff]
    %v218 = vld [vmem:[#allocation2 + $0x38] sm:$0xf]
    %v219 = vld [vmem:[#allocation2 + $0x40] sm:$0xff]
    %v220 = vld [vmem:[#allocation2 + $0x48] sm:$0xf]
    %v221 = vld [vmem:[#allocation2 + $0x50] sm:$0xff]
    %v222 = vld [vmem:[#allocation2 + $0x58] sm:$0xf]
    %v223 = vld [vmem:[#allocation2 + $0x60] sm:$0xff]
    %v224 = vld [vmem:[#allocation2 + $0x68] sm:$0xf]
    %v225 = vld [vmem:[#allocation2 + $0x70] sm:$0xff]
    %v226 = vld [vmem:[#allocation2 + $0x78] sm:$0xf]
    %v227 = vld [vmem:[#allocation2 + $0x80] sm:$0xff]
    %v228 = vld [vmem:[#allocation2 + $0x88] sm:$0xf]
    %v229 = vld [vmem:[#allocation2 + $0x90] sm:$0xff]
    %v230 = vld [vmem:[#allocation2 + $0x98] sm:$0xf]
    %v231 = vld [vmem:[#allocation2 + $0xa0] sm:$0xff]
    %v232 = vld [vmem:[#allocation2 + $0xa8] sm:$0xf]
    %v233 = vld [vmem:[#allocation2 + $0xb0] sm:$0xff]
    %v234 = vld [vmem:[#allocation2 + $0xb8] sm:$0xf]
    %v235 = vld [vmem:[#allocation2 + $0xc0] sm:$0xff]
    %v236 = vld [vmem:[#allocation2 + $0xc8] sm:$0xf]
    %v237 = vld [vmem:[#allocation2 + $0xd0] sm:$0xff]
    %v238 = vld [vmem:[#allocation2 + $0xd8] sm:$0xf]
    %v239 = vld [vmem:[#allocation2 + $0xe0] sm:$0xff]
    %v240 = vld [vmem:[#allocation2 + $0xe8] sm:$0xf]
    %v241 = vld [vmem:[#allocation2 + $0xf0] sm:$0xff]
    %v242 = vld [vmem:[#allocation2 + $0xf8] sm:$0xf]
    %v275 = vunpack.c.l.b16 %v211
    %v276 = vunpack.c.h.b16 %v211
    %v277 = vunpack.c.l.b16 %v212
    %v278 = vunpack.c.l.b16 %v213
    %v279 = vunpack.c.h.b16 %v213
    %v280 = vunpack.c.l.b16 %v214
    %v281 = vunpack.c.l.b16 %v215
    %v282 = vunpack.c.h.b16 %v215
    %v283 = vunpack.c.l.b16 %v216
    %v284 = vunpack.c.l.b16 %v217
    %v285 = vunpack.c.h.b16 %v217
    %v286 = vunpack.c.l.b16 %v218
    %v287 = vunpack.c.l.b16 %v219
    %v288 = vunpack.c.h.b16 %v219
    %v289 = vunpack.c.l.b16 %v220
    %v290 = vunpack.c.l.b16 %v221
    %v291 = vunpack.c.h.b16 %v221
    %v292 = vunpack.c.l.b16 %v222
    %v293 = vunpack.c.l.b16 %v223
    %v294 = vunpack.c.h.b16 %v223
    %v295 = vunpack.c.l.b16 %v224
    %v296 = vunpack.c.l.b16 %v225
    %v297 = vunpack.c.h.b16 %v225
    %v298 = vunpack.c.l.b16 %v226
    %v299 = vunpack.c.l.b16 %v227
    %v300 = vunpack.c.h.b16 %v227
    %v301 = vunpack.c.l.b16 %v228
    %v302 = vunpack.c.l.b16 %v229
    %v303 = vunpack.c.h.b16 %v229
    %v304 = vunpack.c.l.b16 %v230
    %v305 = vunpack.c.l.b16 %v231
    %v306 = vunpack.c.h.b16 %v231
    %v307 = vunpack.c.l.b16 %v232
    %v308 = vunpack.c.l.b16 %v233
    %v309 = vunpack.c.h.b16 %v233
    %v310 = vunpack.c.l.b16 %v234
    %v311 = vunpack.c.l.b16 %v235
    %v312 = vunpack.c.h.b16 %v235
    %v313 = vunpack.c.l.b16 %v236
    %v314 = vunpack.c.l.b16 %v237
    %v315 = vunpack.c.h.b16 %v237
    %v316 = vunpack.c.l.b16 %v238
    %v317 = vunpack.c.l.b16 %v239
    %v318 = vunpack.c.h.b16 %v239
    %v319 = vunpack.c.l.b16 %v240
    %v320 = vunpack.c.l.b16 %v241
    %v321 = vunpack.c.h.b16 %v241
    %v322 = vunpack.c.l.b16 %v242
    %v323 = vpack.c.b16 %v278, %v275
    %v324 = vpack.c.b16 %v279, %v276
    %v325 = vpack.c.b16 %v280, %v277
    %v326 = vpack.c.b16 %v284, %v281
    %v327 = vpack.c.b16 %v285, %v282
    %v328 = vpack.c.b16 %v286, %v283
    %v329 = vpack.c.b16 %v290, %v287
    %v330 = vpack.c.b16 %v291, %v288
    %v331 = vpack.c.b16 %v292, %v289
    %v332 = vpack.c.b16 %v296, %v293
    %v333 = vpack.c.b16 %v297, %v294
    %v334 = vpack.c.b16 %v298, %v295
    %v335 = vpack.c.b16 %v302, %v299
    %v336 = vpack.c.b16 %v303, %v300
    %v337 = vpack.c.b16 %v304, %v301
    %v338 = vpack.c.b16 %v308, %v305
    %v339 = vpack.c.b16 %v309, %v306
    %v340 = vpack.c.b16 %v310, %v307
    %v341 = vpack.c.b16 %v314, %v311
    %v342 = vpack.c.b16 %v315, %v312
    %v343 = vpack.c.b16 %v316, %v313
    %v344 = vpack.c.b16 %v320, %v317
    %v345 = vpack.c.b16 %v321, %v318
    %v346 = vpack.c.b16 %v322, %v319
    %371 = vmatprep.subr.bf16.mxu0 %v345
    %372 = vmatpush1.bf16.msra.mxu0 %v344
    %373 = vmatprep.subr.bf16.mxu0 %v342
    %374 = vmatpush1.bf16.msra.mxu0 %v341
    %375 = vmatprep.subr.bf16.mxu0 %v339
    %376 = vmatpush1.bf16.msra.mxu0 %v338
    %377 = vmatprep.subr.bf16.mxu0 %v336
    %378 = vmatpush1.bf16.msra.mxu0 %v335
    %379 = vmatprep.subr.bf16.mxu0 %v333
    %380 = vmatpush1.bf16.msra.mxu0 %v332
    %381 = vmatprep.subr.bf16.mxu0 %v330
    %382 = vmatpush1.bf16.msra.mxu0 %v329
    %383 = vmatprep.subr.bf16.mxu0 %v327
    %384 = vmatpush1.bf16.msra.mxu0 %v326
    %385 = vmatprep.subr.bf16.mxu0 %v324
    %386 = vmatpush1.bf16.msra.mxu0 %v323
    %387 = vmatprep.subr.bf16.mxu0 0
    %388 = vmatpush2.bf16.msra.mxu0 0
    %389 = vmatprep.subr.bf16.mxu0 0
    %390 = vmatpush2.bf16.msra.mxu0 0
    %391 = vmatprep.subr.bf16.mxu0 0
    %392 = vmatpush2.bf16.msra.mxu0 0
    %393 = vmatprep.subr.bf16.mxu0 0
    %394 = vmatpush2.bf16.msra.mxu0 0
    %395 = vmatprep.subr.bf16.mxu0 0
    %396 = vmatpush2.bf16.msra.mxu0 0
    %397 = vmatprep.subr.bf16.mxu0 0
    %398 = vmatpush2.bf16.msra.mxu0 0
    %399 = vmatprep.subr.bf16.mxu0 0
    %400 = vmatpush2.bf16.msra.mxu0 0
    %401 = vmatprep.subr.bf16.mxu0 0
    %402 = vmatpush2.bf16.msra.mxu0 0
    %403 = vmatprep.mubr.bf16.mxu0 0
    %404 = vmatmul.mubr.bf16.gmra.mxu0 %v209
    %v405 = vpop.f32.mrf.mxu0
    %v406 = vadd.f32 0.0, %v405
    %v407 = vpop.f32.mrf.mxu0
    %v408 = vadd.f32 0.0, %v407
    %v409 = vpop.f32.mrf.mxu0
    %v410 = vadd.f32 0.0, %v409
    %v411 = vpop.f32.mrf.mxu0
    %v412 = vadd.f32 0.0, %v411
    %413 = vmatprep.mubr.bf16.mxu0 0
    %414 = vmatmul.mubr.bf16.gmra.mxu0 %v210
    %v415 = vpop.f32.mrf.mxu0
    %v416 = vadd.f32 0.0, %v415
    %v417 = vpop.f32.mrf.mxu0
    %v418 = vadd.f32 0.0, %v417
    %v419 = vpop.f32.mrf.mxu0
    %v420 = vadd.f32 0.0, %v419
    %v421 = vpop.f32.mrf.mxu0
    %v422 = vadd.f32 0.0, %v421
    %423 = vdwg.mxu0
    %424 = vmatprep.subr.bf16.mxu0 0
    %425 = vmatpush1.bf16.msra.mxu0 %v346
    %426 = vmatprep.subr.bf16.mxu0 0
    %427 = vmatpush1.bf16.msra.mxu0 %v343
    %428 = vmatprep.subr.bf16.mxu0 0
    %429 = vmatpush1.bf16.msra.mxu0 %v340
    %430 = vmatprep.subr.bf16.mxu0 0
    %431 = vmatpush1.bf16.msra.mxu0 %v337
    %432 = vmatprep.subr.bf16.mxu0 0
    %433 = vmatpush1.bf16.msra.mxu0 %v334
    %434 = vmatprep.subr.bf16.mxu0 0
    %435 = vmatpush1.bf16.msra.mxu0 %v331
    %436 = vmatprep.subr.bf16.mxu0 0
    %437 = vmatpush1.bf16.msra.mxu0 %v328
    %438 = vmatprep.subr.bf16.mxu0 0
    %439 = vmatpush1.bf16.msra.mxu0 %v325
    %440 = vmatprep.subr.bf16.mxu0 0
    %441 = vmatpush2.bf16.msra.mxu0 0
    %442 = vmatprep.subr.bf16.mxu0 0
    %443 = vmatpush2.bf16.msra.mxu0 0
    %444 = vmatprep.subr.bf16.mxu0 0
    %445 = vmatpush2.bf16.msra.mxu0 0
    %446 = vmatprep.subr.bf16.mxu0 0
    %447 = vmatpush2.bf16.msra.mxu0 0
    %448 = vmatprep.subr.bf16.mxu0 0
    %449 = vmatpush2.bf16.msra.mxu0 0
    %450 = vmatprep.subr.bf16.mxu0 0
    %451 = vmatpush2.bf16.msra.mxu0 0
    %452 = vmatprep.subr.bf16.mxu0 0
    %453 = vmatpush2.bf16.msra.mxu0 0
    %454 = vmatprep.subr.bf16.mxu0 0
    %455 = vmatpush2.bf16.msra.mxu0 0
    %456 = vmatprep.mubr.bf16.mxu0 0
    %457 = vmatmul.mubr.bf16.gmra.mxu0 %v209
    %v458 = vpop.f32.mrf.mxu0
    %v459 = vadd.f32 0.0, %v458
    %v460 = vpop.f32.mrf.mxu0
    %v461 = vpop.f32.mrf.mxu0
    %v462 = vadd.f32 0.0, %v461
    %v463 = vpop.f32.mrf.mxu0
    %464 = vmatprep.mubr.bf16.mxu0 0
    %465 = vmatmul.mubr.bf16.gmra.mxu0 %v210
    %v466 = vpop.f32.mrf.mxu0
    %v467 = vadd.f32 0.0, %v466
    %v468 = vpop.f32.mrf.mxu0
    %v469 = vpop.f32.mrf.mxu0
    %v470 = vadd.f32 0.0, %v469
    %v471 = vpop.f32.mrf.mxu0
    %472 = vdwg.mxu0
    %v473 = vld [vmem:[%s4] ss:$0 sm:$0xff]
    %v474 = vadd.f32 %v406, %v473
    %v475 = vadd.f32 %v410, %v473
    %v476 = vadd.f32 %v416, %v473
    %v477 = vadd.f32 %v420, %v473
    %v478 = vld [vmem:[%s4 + $0x8] ss:$0 sm:$0xff]
    %v479 = vadd.f32 %v408, %v478
    %v480 = vadd.f32 %v412, %v478
    %v481 = vadd.f32 %v418, %v478
    %v482 = vadd.f32 %v422, %v478
    %v483 = vld [vmem:[%s4 + $0x10] ss:$0 sm:$0xff]
    %v484 = vadd.f32 %v459, %v483
    %v485 = vadd.f32 %v462, %v483
    %v486 = vadd.f32 %v467, %v483
    %v487 = vadd.f32 %v470, %v483
    %v488 = vpack.c.bf16 %v475, %v474
    %v489 = vpack.c.bf16 %v477, %v476
    %v490 = vpack.c.bf16 %v480, %v479
    %v491 = vpack.c.bf16 %v482, %v481
    %vm492 = vcmask 523264
    %v494 = vsel %vm492, %v488, 0
    %v497 = vsel %vm492, %v489, 0
    %v500 = vsel %vm492, %v490, 0
    %v503 = vsel %vm492, %v491, 0
    %505 = vmatprep.subr.bf16.mxu0 0
    %506 = vmatpush1.bf16.xpose.msra.mxu0 0
    %507 = vmatprep.subr.bf16.mxu0 0
    %508 = vmatpush1.bf16.xpose.msra.mxu0 0
    %509 = vmatprep.subr.bf16.mxu0 0
    %510 = vmatpush1.bf16.xpose.msra.mxu0 0
    %511 = vmatprep.subr.bf16.mxu0 0
    %512 = vmatpush1.bf16.xpose.msra.mxu0 0
    %513 = vmatprep.subr.bf16.mxu0 0
    %514 = vmatpush1.bf16.xpose.msra.mxu0 0
    %515 = vmatprep.subr.bf16.mxu0 0
    %516 = vmatpush1.bf16.xpose.msra.mxu0 0
    %517 = vmatprep.subr.bf16.mxu0 0
    %518 = vmatpush1.bf16.xpose.msra.mxu0 %v503
    %519 = vmatprep.subr.bf16.mxu0 0
    %520 = vmatpush1.bf16.xpose.msra.mxu0 %v500
    %521 = vmatprep.subr.bf16.mxu0 0
    %522 = vmatpush2.bf16.xpose.msra.mxu0 0
    %523 = vmatprep.subr.bf16.mxu0 0
    %524 = vmatpush2.bf16.xpose.msra.mxu0 0
    %525 = vmatprep.subr.bf16.mxu0 0
    %526 = vmatpush2.bf16.xpose.msra.mxu0 0
    %527 = vmatprep.subr.bf16.mxu0 0
    %528 = vmatpush2.bf16.xpose.msra.mxu0 0
    %529 = vmatprep.subr.bf16.mxu0 0
    %530 = vmatpush2.bf16.xpose.msra.mxu0 0
    %531 = vmatprep.subr.bf16.mxu0 0
    %532 = vmatpush2.bf16.xpose.msra.mxu0 0
    %533 = vmatprep.subr.bf16.mxu0 0
    %534 = vmatpush2.bf16.xpose.msra.mxu0 0
    %535 = vmatprep.subr.bf16.mxu0 0
    %536 = vmatpush2.bf16.xpose.msra.mxu0 0
    %537 = vmatprep.mubr.bf16.mxu0 0
    %538 = vmatmul.mubr.bf16.gmra.mxu0 %v494
    %v539 = vpop.f32.mrf.mxu0
    %v540 = vadd.f32 0.0, %v539
    %v541 = vpop.f32.mrf.mxu0
    %v542 = vpop.f32.mrf.mxu0
    %v543 = vadd.f32 0.0, %v542
    %v544 = vpop.f32.mrf.mxu0
    %545 = vmatprep.mubr.bf16.mxu0 0
    %546 = vmatmul.mubr.bf16.gmra.mxu0 %v497
    %v547 = vpop.f32.mrf.mxu0
    %v548 = vadd.f32 0.0, %v547
    %v549 = vpop.f32.mrf.mxu0
    %v550 = vpop.f32.mrf.mxu0
    %v551 = vadd.f32 0.0, %v550
    %v552 = vpop.f32.mrf.mxu0
    %553 = vdwg.mxu0
    %v554 = vmul.f32 %v540, 0.125
    %v555 = vmul.f32 %v543, 0.125
    %v556 = vmul.f32 %v548, 0.125
    %v557 = vmul.f32 %v551, 0.125
    %v558 = vadd.f32 %v554, %v205
    %v559 = vadd.f32 %v555, %v206
    %v560 = vadd.f32 %v556, %v207
    %v561 = vadd.f32 %v557, %v208
    %vm562 = vcmask 261120
    %v563 = vsel %vm562, %v558, -inf
    %564 = vmax.xlane.f32.xlu0 %v563
    %v565 = vpop.xlane.xlu0 %564
    %v566 = vsel %vm562, %v559, -inf
    %567 = vmax.xlane.f32.xlu0 %v566
    %v568 = vpop.xlane.xlu0 %567
    %v569 = vsel %vm562, %v560, -inf
    %570 = vmax.xlane.f32.xlu0 %v569
    %v571 = vpop.xlane.xlu0 %570
    %v572 = vsel %vm562, %v561, -inf
    %573 = vmax.xlane.f32.xlu0 %v572
    %v574 = vpop.xlane.xlu0 %573
    %v575 = vsub.f32 %v558, %v565
    %v576 = vsub.f32 %v559, %v568
    %v577 = vsub.f32 %v560, %v571
    %v578 = vsub.f32 %v561, %v574
    %v579 = vmul.f32 %v575, 1.442695
    %v580 = vpow.pop %v579
    %v581 = vmul.f32 %v576, 1.442695
    %v582 = vpow.pop %v581
    %v583 = vmul.f32 %v577, 1.442695
    %v584 = vpow.pop %v583
    %v585 = vmul.f32 %v578, 1.442695
    %v586 = vpow.pop %v585
    %v587 = vsel %vm562, %v580, 0.0
    %588 = vadd.xlane.f32.xlu0 %v587
    %v589 = vpop.xlane.xlu0 %588
    %v590 = vsel %vm562, %v582, 0.0
    %591 = vadd.xlane.f32.xlu0 %v590
    %v592 = vpop.xlane.xlu0 %591
    %v593 = vsel %vm562, %v584, 0.0
    %594 = vadd.xlane.f32.xlu0 %v593
    %v595 = vpop.xlane.xlu0 %594
    %v596 = vsel %vm562, %v586, 0.0
    %597 = vadd.xlane.f32.xlu0 %v596
    %v598 = vpop.xlane.xlu0 %597
    %v599 = vrcp.pop %v589
    %v600 = vrcp.pop %v592
    %v601 = vrcp.pop %v595
    %v602 = vrcp.pop %v598
    %v603 = vmul.f32 %v580, %v599
    %v604 = vmul.f32 %v582, %v600
    %v605 = vmul.f32 %v584, %v601
    %v606 = vmul.f32 %v586, %v602
    %v607 = vpack.c.bf16 %v604, %v603
    %v608 = vpack.c.bf16 %v606, %v605
    %v609 = vpack.c.bf16 %v485, %v484
    %v610 = vpack.c.bf16 %v487, %v486
    %v612 = vsel %vm562, %v607, 0
    %v615 = vsel %vm562, %v608, 0
    %617 = vmatprep.subr.bf16.mxu0 0
    %618 = vmatpush1.bf16.msra.mxu0 0
    %619 = vmatprep.subr.bf16.mxu0 0
    %620 = vmatpush1.bf16.msra.mxu0 0
    %621 = vmatprep.subr.bf16.mxu0 0
    %622 = vmatpush1.bf16.msra.mxu0 0
    %623 = vmatprep.subr.bf16.mxu0 0
    %624 = vmatpush1.bf16.msra.mxu0 0
    %625 = vmatprep.subr.bf16.mxu0 0
    %626 = vmatpush1.bf16.msra.mxu0 0
    %627 = vmatprep.subr.bf16.mxu0 0
    %628 = vmatpush1.bf16.msra.mxu0 0
    %629 = vmatprep.subr.bf16.mxu0 0
    %630 = vmatpush1.bf16.msra.mxu0 %v610
    %631 = vmatprep.subr.bf16.mxu0 0
    %632 = vmatpush1.bf16.msra.mxu0 %v609
    %633 = vmatprep.subr.bf16.mxu0 0
    %634 = vmatpush2.bf16.msra.mxu0 0
    %635 = vmatprep.subr.bf16.mxu0 0
    %636 = vmatpush2.bf16.msra.mxu0 0
    %637 = vmatprep.subr.bf16.mxu0 0
    %638 = vmatpush2.bf16.msra.mxu0 0
    %639 = vmatprep.subr.bf16.mxu0 0
    %640 = vmatpush2.bf16.msra.mxu0 0
    %641 = vmatprep.subr.bf16.mxu0 0
    %642 = vmatpush2.bf16.msra.mxu0 0
    %643 = vmatprep.subr.bf16.mxu0 0
    %644 = vmatpush2.bf16.msra.mxu0 0
    %645 = vmatprep.subr.bf16.mxu0 0
    %646 = vmatpush2.bf16.msra.mxu0 0
    %647 = vmatprep.subr.bf16.mxu0 0
    %648 = vmatpush2.bf16.msra.mxu0 0
    %649 = vmatprep.mubr.bf16.mxu0 0
    %650 = vmatmul.mubr.bf16.gmra.mxu0 %v612
    %v651 = vpop.f32.mrf.mxu0
    %v652 = vadd.f32 0.0, %v651
    %v653 = vpop.f32.mrf.mxu0
    %v654 = vpop.f32.mrf.mxu0
    %v655 = vadd.f32 0.0, %v654
    %v656 = vpop.f32.mrf.mxu0
    %657 = vmatprep.mubr.bf16.mxu0 0
    %658 = vmatmul.mubr.bf16.gmra.mxu0 %v615
    %v659 = vpop.f32.mrf.mxu0
    %v660 = vadd.f32 0.0, %v659
    %v661 = vpop.f32.mrf.mxu0
    %v662 = vpop.f32.mrf.mxu0
    %v663 = vadd.f32 0.0, %v662
    %v664 = vpop.f32.mrf.mxu0
    %665 = vdwg.mxu0
    %668 = vrot.lane.b32.xlu0 %v488, 64
    %v669 = vpop.permute.xlu0 %668
    %670 = vrot.lane.b32.xlu0 %v489, 64
    %v671 = vpop.permute.xlu0 %670
    %674 = vrot.lane.b32.xlu0 %v490, 64
    %v675 = vpop.permute.xlu0 %674
    %676 = vrot.lane.b32.xlu0 %v491, 64
    %v677 = vpop.permute.xlu0 %676
    %v679 = vsel %vm492, %v669, 0
    %v682 = vsel %vm492, %v671, 0
    %v685 = vsel %vm492, %v675, 0
    %v688 = vsel %vm492, %v677, 0
    %690 = vmatprep.subr.bf16.mxu0 0
    %691 = vmatpush1.bf16.xpose.msra.mxu0 0
    %692 = vmatprep.subr.bf16.mxu0 0
    %693 = vmatpush1.bf16.xpose.msra.mxu0 0
    %694 = vmatprep.subr.bf16.mxu0 0
    %695 = vmatpush1.bf16.xpose.msra.mxu0 0
    %696 = vmatprep.subr.bf16.mxu0 0
    %697 = vmatpush1.bf16.xpose.msra.mxu0 0
    %698 = vmatprep.subr.bf16.mxu0 0
    %699 = vmatpush1.bf16.xpose.msra.mxu0 0
    %700 = vmatprep.subr.bf16.mxu0 0
    %701 = vmatpush1.bf16.xpose.msra.mxu0 0
    %702 = vmatprep.subr.bf16.mxu0 0
    %703 = vmatpush1.bf16.xpose.msra.mxu0 %v688
    %704 = vmatprep.subr.bf16.mxu0 0
    %705 = vmatpush1.bf16.xpose.msra.mxu0 %v685
    %706 = vmatprep.subr.bf16.mxu0 0
    %707 = vmatpush2.bf16.xpose.msra.mxu0 0
    %708 = vmatprep.subr.bf16.mxu0 0
    %709 = vmatpush2.bf16.xpose.msra.mxu0 0
    %710 = vmatprep.subr.bf16.mxu0 0
    %711 = vmatpush2.bf16.xpose.msra.mxu0 0
    %712 = vmatprep.subr.bf16.mxu0 0
    %713 = vmatpush2.bf16.xpose.msra.mxu0 0
    %714 = vmatprep.subr.bf16.mxu0 0
    %715 = vmatpush2.bf16.xpose.msra.mxu0 0
    %716 = vmatprep.subr.bf16.mxu0 0
    %717 = vmatpush2.bf16.xpose.msra.mxu0 0
    %718 = vmatprep.subr.bf16.mxu0 0
    %719 = vmatpush2.bf16.xpose.msra.mxu0 0
    %720 = vmatprep.subr.bf16.mxu0 0
    %721 = vmatpush2.bf16.xpose.msra.mxu0 0
    %722 = vmatprep.mubr.bf16.mxu0 0
    %723 = vmatmul.mubr.bf16.gmra.mxu0 %v679
    %v724 = vpop.f32.mrf.mxu0
    %v725 = vadd.f32 0.0, %v724
    %v726 = vpop.f32.mrf.mxu0
    %v727 = vpop.f32.mrf.mxu0
    %v728 = vadd.f32 0.0, %v727
    %v729 = vpop.f32.mrf.mxu0
    %730 = vmatprep.mubr.bf16.mxu0 0
    %731 = vmatmul.mubr.bf16.gmra.mxu0 %v682
    %v732 = vpop.f32.mrf.mxu0
    %v733 = vadd.f32 0.0, %v732
    %v734 = vpop.f32.mrf.mxu0
    %v735 = vpop.f32.mrf.mxu0
    %v736 = vadd.f32 0.0, %v735
    %v737 = vpop.f32.mrf.mxu0
    %738 = vdwg.mxu0
    %v739 = vmul.f32 %v725, 0.125
    %v740 = vmul.f32 %v728, 0.125
    %v741 = vmul.f32 %v733, 0.125
    %v742 = vmul.f32 %v736, 0.125
    %v743 = vadd.f32 %v739, %v205
    %v744 = vadd.f32 %v740, %v206
    %v745 = vadd.f32 %v741, %v207
    %v746 = vadd.f32 %v742, %v208
    %v747 = vsel %vm562, %v743, -inf
    %748 = vmax.xlane.f32.xlu0 %v747
    %v749 = vpop.xlane.xlu0 %748
    %v750 = vsel %vm562, %v744, -inf
    %751 = vmax.xlane.f32.xlu0 %v750
    %v752 = vpop.xlane.xlu0 %751
    %v753 = vsel %vm562, %v745, -inf
    %754 = vmax.xlane.f32.xlu0 %v753
    %v755 = vpop.xlane.xlu0 %754
    %v756 = vsel %vm562, %v746, -inf
    %757 = vmax.xlane.f32.xlu0 %v756
    %v758 = vpop.xlane.xlu0 %757
    %v759 = vsub.f32 %v743, %v749
    %v760 = vsub.f32 %v744, %v752
    %v761 = vsub.f32 %v745, %v755
    %v762 = vsub.f32 %v746, %v758
    %v763 = vmul.f32 %v759, 1.442695
    %v764 = vpow.pop %v763
    %v765 = vmul.f32 %v760, 1.442695
    %v766 = vpow.pop %v765
    %v767 = vmul.f32 %v761, 1.442695
    %v768 = vpow.pop %v767
    %v769 = vmul.f32 %v762, 1.442695
    %v770 = vpow.pop %v769
    %v771 = vsel %vm562, %v764, 0.0
    %772 = vadd.xlane.f32.xlu0 %v771
    %v773 = vpop.xlane.xlu0 %772
    %v774 = vsel %vm562, %v766, 0.0
    %775 = vadd.xlane.f32.xlu0 %v774
    %v776 = vpop.xlane.xlu0 %775
    %v777 = vsel %vm562, %v768, 0.0
    %778 = vadd.xlane.f32.xlu0 %v777
    %v779 = vpop.xlane.xlu0 %778
    %v780 = vsel %vm562, %v770, 0.0
    %781 = vadd.xlane.f32.xlu0 %v780
    %v782 = vpop.xlane.xlu0 %781
    %v783 = vrcp.pop %v773
    %v784 = vrcp.pop %v776
    %v785 = vrcp.pop %v779
    %v786 = vrcp.pop %v782
    %v787 = vmul.f32 %v764, %v783
    %v788 = vmul.f32 %v766, %v784
    %v789 = vmul.f32 %v768, %v785
    %v790 = vmul.f32 %v770, %v786
    %v791 = vpack.c.bf16 %v788, %v787
    %v792 = vpack.c.bf16 %v790, %v789
    %795 = vrot.lane.b32.xlu0 %v609, 64
    %v796 = vpop.permute.xlu0 %795
    %797 = vrot.lane.b32.xlu0 %v610, 64
    %v798 = vpop.permute.xlu0 %797
    %v802 = vsel %vm562, %v791, 0
    %v805 = vsel %vm562, %v792, 0
    %807 = vmatprep.subr.bf16.mxu0 0
    %808 = vmatpush1.bf16.msra.mxu0 0
    %809 = vmatprep.subr.bf16.mxu0 0
    %810 = vmatpush1.bf16.msra.mxu0 0
    %811 = vmatprep.subr.bf16.mxu0 0
    %812 = vmatpush1.bf16.msra.mxu0 0
    %813 = vmatprep.subr.bf16.mxu0 0
    %814 = vmatpush1.bf16.msra.mxu0 0
    %815 = vmatprep.subr.bf16.mxu0 0
    %816 = vmatpush1.bf16.msra.mxu0 0
    %817 = vmatprep.subr.bf16.mxu0 0
    %818 = vmatpush1.bf16.msra.mxu0 0
    %819 = vmatprep.subr.bf16.mxu0 0
    %820 = vmatpush1.bf16.msra.mxu0 %v798
    %821 = vmatprep.subr.bf16.mxu0 0
    %822 = vmatpush1.bf16.msra.mxu0 %v796
    %823 = vmatprep.subr.bf16.mxu0 0
    %824 = vmatpush2.bf16.msra.mxu0 0
    %825 = vmatprep.subr.bf16.mxu0 0
    %826 = vmatpush2.bf16.msra.mxu0 0
    %827 = vmatprep.subr.bf16.mxu0 0
    %828 = vmatpush2.bf16.msra.mxu0 0
    %829 = vmatprep.subr.bf16.mxu0 0
    %830 = vmatpush2.bf16.msra.mxu0 0
    %831 = vmatprep.subr.bf16.mxu0 0
    %832 = vmatpush2.bf16.msra.mxu0 0
    %833 = vmatprep.subr.bf16.mxu0 0
    %834 = vmatpush2.bf16.msra.mxu0 0
    %835 = vmatprep.subr.bf16.mxu0 0
    %836 = vmatpush2.bf16.msra.mxu0 0
    %837 = vmatprep.subr.bf16.mxu0 0
    %838 = vmatpush2.bf16.msra.mxu0 0
    %839 = vmatprep.mubr.bf16.mxu0 0
    %840 = vmatmul.mubr.bf16.gmra.mxu0 %v802
    %v841 = vpop.f32.mrf.mxu0
    %v842 = vadd.f32 0.0, %v841
    %v843 = vpop.f32.mrf.mxu0
    %v844 = vpop.f32.mrf.mxu0
    %v845 = vadd.f32 0.0, %v844
    %v846 = vpop.f32.mrf.mxu0
    %847 = vmatprep.mubr.bf16.mxu0 0
    %848 = vmatmul.mubr.bf16.gmra.mxu0 %v805
    %v849 = vpop.f32.mrf.mxu0
    %v850 = vadd.f32 0.0, %v849
    %v851 = vpop.f32.mrf.mxu0
    %v852 = vpop.f32.mrf.mxu0
    %v853 = vadd.f32 0.0, %v852
    %v854 = vpop.f32.mrf.mxu0
    %855 = vdwg.mxu0
    %860 = vrot.lane.b32.xlu0 %v842, 64
    %v861 = vpop.permute.xlu0 %860
    %862 = vrot.lane.b32.xlu0 %v845, 64
    %v863 = vpop.permute.xlu0 %862
    %864 = vrot.lane.b32.xlu0 %v850, 64
    %v865 = vpop.permute.xlu0 %864
    %866 = vrot.lane.b32.xlu0 %v853, 64
    %v867 = vpop.permute.xlu0 %866
    %v872 = vsel %vm492, %v652, %v861
    %v873 = vsel %vm492, %v655, %v863
    %v874 = vsel %vm492, %v660, %v865
    %v875 = vsel %vm492, %v663, %v867
    %v876 = vpack.c.bf16 %v873, %v872
    %v877 = vpack.c.bf16 %v875, %v874
    %v878 = vld [vmem:[#allocation4] sm:$0xf]
    %v879 = vld [vmem:[#allocation4 + $0x4] sm:$0xf]
    %v880 = vld [vmem:[#allocation4 + $0x8] sm:$0xf]
    %v881 = vld [vmem:[#allocation4 + $0xc] sm:$0xf]
    %v882 = vld [vmem:[#allocation4 + $0x10] sm:$0xf]
    %v883 = vld [vmem:[#allocation4 + $0x14] sm:$0xf]
    %v884 = vld [vmem:[#allocation4 + $0x18] sm:$0xf]
    %v885 = vld [vmem:[#allocation4 + $0x1c] sm:$0xf]
    %v886 = vld [vmem:[#allocation4 + $0x20] sm:$0xf]
    %v887 = vld [vmem:[#allocation4 + $0x24] sm:$0xf]
    %v888 = vld [vmem:[#allocation4 + $0x28] sm:$0xf]
    %v889 = vld [vmem:[#allocation4 + $0x2c] sm:$0xf]
    %v890 = vld [vmem:[#allocation4 + $0x30] sm:$0xf]
    %v891 = vld [vmem:[#allocation4 + $0x34] sm:$0xf]
    %v892 = vld [vmem:[#allocation4 + $0x38] sm:$0xf]
    %v893 = vld [vmem:[#allocation4 + $0x3c] sm:$0xf]
    %v894 = vld [vmem:[%s4 + $0x1] ss:$0 sm:$0xff]
    %v911 = vunpack.c.l.b16 %v878
    %v912 = vunpack.c.l.b16 %v879
    %v913 = vunpack.c.l.b16 %v880
    %v914 = vunpack.c.l.b16 %v881
    %v915 = vunpack.c.l.b16 %v882
    %v916 = vunpack.c.l.b16 %v883
    %v917 = vunpack.c.l.b16 %v884
    %v918 = vunpack.c.l.b16 %v885
    %v919 = vunpack.c.l.b16 %v886
    %v920 = vunpack.c.l.b16 %v887
    %v921 = vunpack.c.l.b16 %v888
    %v922 = vunpack.c.l.b16 %v889
    %v923 = vunpack.c.l.b16 %v890
    %v924 = vunpack.c.l.b16 %v891
    %v925 = vunpack.c.l.b16 %v892
    %v926 = vunpack.c.l.b16 %v893
    %v927 = vpack.c.b16 %v912, %v911
    %v928 = vpack.c.b16 %v914, %v913
    %v929 = vpack.c.b16 %v916, %v915
    %v930 = vpack.c.b16 %v918, %v917
    %v931 = vpack.c.b16 %v920, %v919
    %v932 = vpack.c.b16 %v922, %v921
    %v933 = vpack.c.b16 %v924, %v923
    %v934 = vpack.c.b16 %v926, %v925
    %943 = vmatprep.subr.bf16.mxu0 0
    %944 = vmatpush1.bf16.msra.mxu0 %v934
    %945 = vmatprep.subr.bf16.mxu0 0
    %946 = vmatpush1.bf16.msra.mxu0 %v933
    %947 = vmatprep.subr.bf16.mxu0 0
    %948 = vmatpush1.bf16.msra.mxu0 %v932
    %949 = vmatprep.subr.bf16.mxu0 0
    %950 = vmatpush1.bf16.msra.mxu0 %v931
    %951 = vmatprep.subr.bf16.mxu0 0
    %952 = vmatpush1.bf16.msra.mxu0 %v930
    %953 = vmatprep.subr.bf16.mxu0 0
    %954 = vmatpush1.bf16.msra.mxu0 %v929
    %955 = vmatprep.subr.bf16.mxu0 0
    %956 = vmatpush1.bf16.msra.mxu0 %v928
    %957 = vmatprep.subr.bf16.mxu0 0
    %958 = vmatpush1.bf16.msra.mxu0 %v927
    %959 = vmatprep.subr.bf16.mxu0 0
    %960 = vmatpush2.bf16.msra.mxu0 0
    %961 = vmatprep.subr.bf16.mxu0 0
    %962 = vmatpush2.bf16.msra.mxu0 0
    %963 = vmatprep.subr.bf16.mxu0 0
    %964 = vmatpush2.bf16.msra.mxu0 0
    %965 = vmatprep.subr.bf16.mxu0 0
    %966 = vmatpush2.bf16.msra.mxu0 0
    %967 = vmatprep.subr.bf16.mxu0 0
    %968 = vmatpush2.bf16.msra.mxu0 0
    %969 = vmatprep.subr.bf16.mxu0 0
    %970 = vmatpush2.bf16.msra.mxu0 0
    %971 = vmatprep.subr.bf16.mxu0 0
    %972 = vmatpush2.bf16.msra.mxu0 0
    %973 = vmatprep.subr.bf16.mxu0 0
    %974 = vmatpush2.bf16.msra.mxu0 0
    %975 = vmatprep.mubr.bf16.mxu0 0
    %976 = vmatmul.mubr.bf16.gmra.mxu0 %v876
    %v977 = vpop.f32.mrf.mxu0
    %v978 = vadd.f32 %v894, %v977
    %v979 = vpop.f32.mrf.mxu0
    %v980 = vpop.f32.mrf.mxu0
    %v981 = vadd.f32 %v894, %v980
    %v982 = vpop.f32.mrf.mxu0
    %983 = vmatprep.mubr.bf16.mxu0 0
    %984 = vmatmul.mubr.bf16.gmra.mxu0 %v877
    %v985 = vpop.f32.mrf.mxu0
    %v986 = vadd.f32 %v894, %v985
    %v987 = vpop.f32.mrf.mxu0
    %v988 = vpop.f32.mrf.mxu0
    %v989 = vadd.f32 %v894, %v988
    %v990 = vpop.f32.mrf.mxu0
    %991 = vdwg.mxu0
    %v992 = vadd.f32 %v161, %v978
    %v993 = vadd.f32 %v166, %v981
    %v994 = vadd.f32 %v171, %v986
    %v995 = vadd.f32 %v176, %v989
    %v996 = vld [vmem:[%s4 + $0x2] ss:$0 sm:$0xff]
    %v997 = vld [vmem:[%s4 + $0x3] ss:$0 sm:$0xff]
    %998 = vadd.xlane.f32.xlu0 %v992
    %v999 = vpop.xlane.xlu0 %998
    %1000 = vadd.xlane.f32.xlu0 %v993
    %v1001 = vpop.xlane.xlu0 %1000
    %1002 = vadd.xlane.f32.xlu0 %v994
    %v1003 = vpop.xlane.xlu0 %1002
    %1004 = vadd.xlane.f32.xlu0 %v995
    %v1005 = vpop.xlane.xlu0 %1004
    %v1006 = vrcp.pop 128.0
    %v1007 = vmul.f32 %v999, %v1006
    %v1008 = vmul.f32 %v1001, %v1006
    %v1009 = vmul.f32 %v1003, %v1006
    %v1010 = vmul.f32 %v1005, %v1006
    %v1011 = vsub.f32 %v992, %v1007
    %v1012 = vsub.f32 %v993, %v1008
    %v1013 = vsub.f32 %v994, %v1009
    %v1014 = vsub.f32 %v995, %v1010
    %v1015 = vmul.f32 %v1011, %v1011
    %v1016 = vmul.f32 %v1012, %v1012
    %v1017 = vmul.f32 %v1013, %v1013
    %v1018 = vmul.f32 %v1014, %v1014
    %1019 = vadd.xlane.f32.xlu0 %v1015
    %v1020 = vpop.xlane.xlu0 %1019
    %1021 = vadd.xlane.f32.xlu0 %v1016
    %v1022 = vpop.xlane.xlu0 %1021
    %1023 = vadd.xlane.f32.xlu0 %v1017
    %v1024 = vpop.xlane.xlu0 %1023
    %1025 = vadd.xlane.f32.xlu0 %v1018
    %v1026 = vpop.xlane.xlu0 %1025
    %v1027 = vmul.f32 %v1020, %v1006
    %v1028 = vmul.f32 %v1022, %v1006
    %v1029 = vmul.f32 %v1024, %v1006
    %v1030 = vmul.f32 %v1026, %v1006
    %v1031 = vadd.f32 %v1027, 1e-12
    %v1032 = vadd.f32 %v1028, 1e-12
    %v1033 = vadd.f32 %v1029, 1e-12
    %v1034 = vadd.f32 %v1030, 1e-12
    %v1035 = vrsqrt.pop %v1031
    %v1036 = vrsqrt.pop %v1032
    %v1037 = vrsqrt.pop %v1033
    %v1038 = vrsqrt.pop %v1034
    %v1039 = vmul.f32 %v1011, %v1035
    %v1040 = vmul.f32 %v1012, %v1036
    %v1041 = vmul.f32 %v1013, %v1037
    %v1042 = vmul.f32 %v1014, %v1038
    %v1043 = vmul.f32 %v1039, %v996
    %v1044 = vmul.f32 %v1040, %v996
    %v1045 = vmul.f32 %v1041, %v996
    %v1046 = vmul.f32 %v1042, %v996
    %v1047 = vadd.f32 %v1043, %v997
    %v1048 = vadd.f32 %v1044, %v997
    %v1049 = vadd.f32 %v1045, %v997
    %v1050 = vadd.f32 %v1046, %v997
    %v1051 = vpack.c.bf16 %v1048, %v1047
    %v1052 = vpack.c.bf16 %v1050, %v1049
    %v1053 = vld [vmem:[#allocation2 + $0x100] sm:$0xff]
    %v1054 = vld [vmem:[#allocation2 + $0x108] sm:$0xff]
    %v1055 = vld [vmem:[#allocation2 + $0x110] sm:$0xff]
    %v1056 = vld [vmem:[#allocation2 + $0x118] sm:$0xff]
    %v1057 = vld [vmem:[#allocation2 + $0x120] sm:$0xff]
    %v1058 = vld [vmem:[#allocation2 + $0x128] sm:$0xff]
    %v1059 = vld [vmem:[#allocation2 + $0x130] sm:$0xff]
    %v1060 = vld [vmem:[#allocation2 + $0x138] sm:$0xff]
    %v1061 = vld [vmem:[#allocation2 + $0x140] sm:$0xff]
    %v1062 = vld [vmem:[#allocation2 + $0x148] sm:$0xff]
    %v1063 = vld [vmem:[#allocation2 + $0x150] sm:$0xff]
    %v1064 = vld [vmem:[#allocation2 + $0x158] sm:$0xff]
    %v1065 = vld [vmem:[#allocation2 + $0x160] sm:$0xff]
    %v1066 = vld [vmem:[#allocation2 + $0x168] sm:$0xff]
    %v1067 = vld [vmem:[#allocation2 + $0x170] sm:$0xff]
    %v1068 = vld [vmem:[#allocation2 + $0x178] sm:$0xff]
    %v1069 = vld [vmem:[#allocation2 + $0x180] sm:$0xff]
    %v1070 = vld [vmem:[#allocation2 + $0x188] sm:$0xff]
    %v1071 = vld [vmem:[#allocation2 + $0x190] sm:$0xff]
    %v1072 = vld [vmem:[#allocation2 + $0x198] sm:$0xff]
    %v1073 = vld [vmem:[#allocation2 + $0x1a0] sm:$0xff]
    %v1074 = vld [vmem:[#allocation2 + $0x1a8] sm:$0xff]
    %v1075 = vld [vmem:[#allocation2 + $0x1b0] sm:$0xff]
    %v1076 = vld [vmem:[#allocation2 + $0x1b8] sm:$0xff]
    %v1077 = vld [vmem:[#allocation2 + $0x1c0] sm:$0xff]
    %v1078 = vld [vmem:[#allocation2 + $0x1c8] sm:$0xff]
    %v1079 = vld [vmem:[#allocation2 + $0x1d0] sm:$0xff]
    %v1080 = vld [vmem:[#allocation2 + $0x1d8] sm:$0xff]
    %v1081 = vld [vmem:[#allocation2 + $0x1e0] sm:$0xff]
    %v1082 = vld [vmem:[#allocation2 + $0x1e8] sm:$0xff]
    %v1083 = vld [vmem:[#allocation2 + $0x1f0] sm:$0xff]
    %v1084 = vld [vmem:[#allocation2 + $0x1f8] sm:$0xff]
    %s1085 = scalar_lea.vmem %s4, 4
    %v1086 = vld [vmem:[%s1085] ss:$8 sm:$0xf]
    %v1088 = vlaneseq
    %v1089 = vshrl.u32 %v1088, 7
    %v1090 = vsub.s32 0, %v1089
    %v1091 = vrot.slane %v1086, %v1090
    %v1092 = vlaneseq
    %v1093 = vshrl.u32 %v1092, 7
    %v1094 = vsub.s32 1, %v1093
    %v1095 = vrot.slane %v1086, %v1094
    %v1096 = vlaneseq
    %v1097 = vshrl.u32 %v1096, 7
    %v1098 = vsub.s32 2, %v1097
    %v1099 = vrot.slane %v1086, %v1098
    %v1100 = vlaneseq
    %v1101 = vshrl.u32 %v1100, 7
    %v1102 = vsub.s32 3, %v1101
    %v1103 = vrot.slane %v1086, %v1102
    %v1140 = vunpack.c.l.b16 %v1053
    %v1141 = vunpack.c.h.b16 %v1053
    %v1142 = vunpack.c.l.b16 %v1054
    %v1143 = vunpack.c.h.b16 %v1054
    %v1144 = vunpack.c.l.b16 %v1055
    %v1145 = vunpack.c.h.b16 %v1055
    %v1146 = vunpack.c.l.b16 %v1056
    %v1147 = vunpack.c.h.b16 %v1056
    %v1148 = vunpack.c.l.b16 %v1057
    %v1149 = vunpack.c.h.b16 %v1057
    %v1150 = vunpack.c.l.b16 %v1058
    %v1151 = vunpack.c.h.b16 %v1058
    %v1152 = vunpack.c.l.b16 %v1059
    %v1153 = vunpack.c.h.b16 %v1059
    %v1154 = vunpack.c.l.b16 %v1060
    %v1155 = vunpack.c.h.b16 %v1060
    %v1156 = vunpack.c.l.b16 %v1061
    %v1157 = vunpack.c.h.b16 %v1061
    %v1158 = vunpack.c.l.b16 %v1062
    %v1159 = vunpack.c.h.b16 %v1062
    %v1160 = vunpack.c.l.b16 %v1063
    %v1161 = vunpack.c.h.b16 %v1063
    %v1162 = vunpack.c.l.b16 %v1064
    %v1163 = vunpack.c.h.b16 %v1064
    %v1164 = vunpack.c.l.b16 %v1065
    %v1165 = vunpack.c.h.b16 %v1065
    %v1166 = vunpack.c.l.b16 %v1066
    %v1167 = vunpack.c.h.b16 %v1066
    %v1168 = vunpack.c.l.b16 %v1067
    %v1169 = vunpack.c.h.b16 %v1067
    %v1170 = vunpack.c.l.b16 %v1068
    %v1171 = vunpack.c.h.b16 %v1068
    %v1172 = vunpack.c.l.b16 %v1069
    %v1173 = vunpack.c.h.b16 %v1069
    %v1174 = vunpack.c.l.b16 %v1070
    %v1175 = vunpack.c.h.b16 %v1070
    %v1176 = vunpack.c.l.b16 %v1071
    %v1177 = vunpack.c.h.b16 %v1071
    %v1178 = vunpack.c.l.b16 %v1072
    %v1179 = vunpack.c.h.b16 %v1072
    %v1180 = vunpack.c.l.b16 %v1073
    %v1181 = vunpack.c.h.b16 %v1073
    %v1182 = vunpack.c.l.b16 %v1074
    %v1183 = vunpack.c.h.b16 %v1074
    %v1184 = vunpack.c.l.b16 %v1075
    %v1185 = vunpack.c.h.b16 %v1075
    %v1186 = vunpack.c.l.b16 %v1076
    %v1187 = vunpack.c.h.b16 %v1076
    %v1188 = vunpack.c.l.b16 %v1077
    %v1189 = vunpack.c.h.b16 %v1077
    %v1190 = vunpack.c.l.b16 %v1078
    %v1191 = vunpack.c.h.b16 %v1078
    %v1192 = vunpack.c.l.b16 %v1079
    %v1193 = vunpack.c.h.b16 %v1079
    %v1194 = vunpack.c.l.b16 %v1080
    %v1195 = vunpack.c.h.b16 %v1080
    %v1196 = vunpack.c.l.b16 %v1081
    %v1197 = vunpack.c.h.b16 %v1081
    %v1198 = vunpack.c.l.b16 %v1082
    %v1199 = vunpack.c.h.b16 %v1082
    %v1200 = vunpack.c.l.b16 %v1083
    %v1201 = vunpack.c.h.b16 %v1083
    %v1202 = vunpack.c.l.b16 %v1084
    %v1203 = vunpack.c.h.b16 %v1084
    %v1204 = vpack.c.b16 %v1144, %v1140
    %v1205 = vpack.c.b16 %v1145, %v1141
    %v1206 = vpack.c.b16 %v1146, %v1142
    %v1207 = vpack.c.b16 %v1147, %v1143
    %v1208 = vpack.c.b16 %v1152, %v1148
    %v1209 = vpack.c.b16 %v1153, %v1149
    %v1210 = vpack.c.b16 %v1154, %v1150
    %v1211 = vpack.c.b16 %v1155, %v1151
    %v1212 = vpack.c.b16 %v1160, %v1156
    %v1213 = vpack.c.b16 %v1161, %v1157
    %v1214 = vpack.c.b16 %v1162, %v1158
    %v1215 = vpack.c.b16 %v1163, %v1159
    %v1216 = vpack.c.b16 %v1168, %v1164
    %v1217 = vpack.c.b16 %v1169, %v1165
    %v1218 = vpack.c.b16 %v1170, %v1166
    %v1219 = vpack.c.b16 %v1171, %v1167
    %v1220 = vpack.c.b16 %v1176, %v1172
    %v1221 = vpack.c.b16 %v1177, %v1173
    %v1222 = vpack.c.b16 %v1178, %v1174
    %v1223 = vpack.c.b16 %v1179, %v1175
    %v1224 = vpack.c.b16 %v1184, %v1180
    %v1225 = vpack.c.b16 %v1185, %v1181
    %v1226 = vpack.c.b16 %v1186, %v1182
    %v1227 = vpack.c.b16 %v1187, %v1183
    %v1228 = vpack.c.b16 %v1192, %v1188
    %v1229 = vpack.c.b16 %v1193, %v1189
    %v1230 = vpack.c.b16 %v1194, %v1190
    %v1231 = vpack.c.b16 %v1195, %v1191
    %v1232 = vpack.c.b16 %v1200, %v1196
    %v1233 = vpack.c.b16 %v1201, %v1197
    %v1234 = vpack.c.b16 %v1202, %v1198
    %v1235 = vpack.c.b16 %v1203, %v1199
    %1268 = vmatprep.subr.bf16.mxu0 %v1233
    %1269 = vmatpush1.bf16.msra.mxu0 %v1232
    %1270 = vmatprep.subr.bf16.mxu0 %v1229
    %1271 = vmatpush1.bf16.msra.mxu0 %v1228
    %1272 = vmatprep.subr.bf16.mxu0 %v1225
    %1273 = vmatpush1.bf16.msra.mxu0 %v1224
    %1274 = vmatprep.subr.bf16.mxu0 %v1221
    %1275 = vmatpush1.bf16.msra.mxu0 %v1220
    %1276 = vmatprep.subr.bf16.mxu0 %v1217
    %1277 = vmatpush1.bf16.msra.mxu0 %v1216
    %1278 = vmatprep.subr.bf16.mxu0 %v1213
    %1279 = vmatpush1.bf16.msra.mxu0 %v1212
    %1280 = vmatprep.subr.bf16.mxu0 %v1209
    %1281 = vmatpush1.bf16.msra.mxu0 %v1208
    %1282 = vmatprep.subr.bf16.mxu0 %v1205
    %1283 = vmatpush1.bf16.msra.mxu0 %v1204
    %1284 = vmatprep.subr.bf16.mxu0 0
    %1285 = vmatpush2.bf16.msra.mxu0 0
    %1286 = vmatprep.subr.bf16.mxu0 0
    %1287 = vmatpush2.bf16.msra.mxu0 0
    %1288 = vmatprep.subr.bf16.mxu0 0
    %1289 = vmatpush2.bf16.msra.mxu0 0
    %1290 = vmatprep.subr.bf16.mxu0 0
    %1291 = vmatpush2.bf16.msra.mxu0 0
    %1292 = vmatprep.subr.bf16.mxu0 0
    %1293 = vmatpush2.bf16.msra.mxu0 0
    %1294 = vmatprep.subr.bf16.mxu0 0
    %1295 = vmatpush2.bf16.msra.mxu0 0
    %1296 = vmatprep.subr.bf16.mxu0 0
    %1297 = vmatpush2.bf16.msra.mxu0 0
    %1298 = vmatprep.subr.bf16.mxu0 0
    %1299 = vmatpush2.bf16.msra.mxu0 0
    %1300 = vmatprep.mubr.bf16.mxu0 0
    %1301 = vmatmul.mubr.bf16.gmra.mxu0 %v1051
    %v1302 = vpop.f32.mrf.mxu0
    %v1303 = vadd.f32 %v1091, %v1302
    %v1304 = vpop.f32.mrf.mxu0
    %v1305 = vadd.f32 %v1095, %v1304
    %v1306 = vpop.f32.mrf.mxu0
    %v1307 = vadd.f32 %v1091, %v1306
    %v1308 = vpop.f32.mrf.mxu0
    %v1309 = vadd.f32 %v1095, %v1308
    %1310 = vmatprep.mubr.bf16.mxu0 0
    %1311 = vmatmul.mubr.bf16.gmra.mxu0 %v1052
    %v1312 = vpop.f32.mrf.mxu0
    %v1313 = vadd.f32 %v1091, %v1312
    %v1314 = vpop.f32.mrf.mxu0
    %v1315 = vadd.f32 %v1095, %v1314
    %v1316 = vpop.f32.mrf.mxu0
    %v1317 = vadd.f32 %v1091, %v1316
    %v1318 = vpop.f32.mrf.mxu0
    %v1319 = vadd.f32 %v1095, %v1318
    %1320 = vdwg.mxu0
    %1321 = vmatprep.subr.bf16.mxu0 %v1235
    %1322 = vmatpush1.bf16.msra.mxu0 %v1234
    %1323 = vmatprep.subr.bf16.mxu0 %v1231
    %1324 = vmatpush1.bf16.msra.mxu0 %v1230
    %1325 = vmatprep.subr.bf16.mxu0 %v1227
    %1326 = vmatpush1.bf16.msra.mxu0 %v1226
    %1327 = vmatprep.subr.bf16.mxu0 %v1223
    %1328 = vmatpush1.bf16.msra.mxu0 %v1222
    %1329 = vmatprep.subr.bf16.mxu0 %v1219
    %1330 = vmatpush1.bf16.msra.mxu0 %v1218
    %1331 = vmatprep.subr.bf16.mxu0 %v1215
    %1332 = vmatpush1.bf16.msra.mxu0 %v1214
    %1333 = vmatprep.subr.bf16.mxu0 %v1211
    %1334 = vmatpush1.bf16.msra.mxu0 %v1210
    %1335 = vmatprep.subr.bf16.mxu0 %v1207
    %1336 = vmatpush1.bf16.msra.mxu0 %v1206
    %1337 = vmatprep.subr.bf16.mxu0 0
    %1338 = vmatpush2.bf16.msra.mxu0 0
    %1339 = vmatprep.subr.bf16.mxu0 0
    %1340 = vmatpush2.bf16.msra.mxu0 0
    %1341 = vmatprep.subr.bf16.mxu0 0
    %1342 = vmatpush2.bf16.msra.mxu0 0
    %1343 = vmatprep.subr.bf16.mxu0 0
    %1344 = vmatpush2.bf16.msra.mxu0 0
    %1345 = vmatprep.subr.bf16.mxu0 0
    %1346 = vmatpush2.bf16.msra.mxu0 0
    %1347 = vmatprep.subr.bf16.mxu0 0
    %1348 = vmatpush2.bf16.msra.mxu0 0
    %1349 = vmatprep.subr.bf16.mxu0 0
    %1350 = vmatpush2.bf16.msra.mxu0 0
    %1351 = vmatprep.subr.bf16.mxu0 0
    %1352 = vmatpush2.bf16.msra.mxu0 0
    %1353 = vmatprep.mubr.bf16.mxu0 0
    %1354 = vmatmul.mubr.bf16.gmra.mxu0 %v1051
    %v1355 = vpop.f32.mrf.mxu0
    %v1356 = vadd.f32 %v1099, %v1355
    %v1357 = vpop.f32.mrf.mxu0
    %v1358 = vadd.f32 %v1103, %v1357
    %v1359 = vpop.f32.mrf.mxu0
    %v1360 = vadd.f32 %v1099, %v1359
    %v1361 = vpop.f32.mrf.mxu0
    %v1362 = vadd.f32 %v1103, %v1361
    %1363 = vmatprep.mubr.bf16.mxu0 0
    %1364 = vmatmul.mubr.bf16.gmra.mxu0 %v1052
    %v1365 = vpop.f32.mrf.mxu0
    %v1366 = vadd.f32 %v1099, %v1365
    %v1367 = vpop.f32.mrf.mxu0
    %v1368 = vadd.f32 %v1103, %v1367
    %v1369 = vpop.f32.mrf.mxu0
    %v1370 = vadd.f32 %v1099, %v1369
    %v1371 = vpop.f32.mrf.mxu0
    %v1372 = vadd.f32 %v1103, %v1371
    %1373 = vdwg.mxu0
    %v1374 = vmul.f32 %v1303, %v1303
    %v1375 = vmul.f32 %v1305, %v1305
    %v1376 = vmul.f32 %v1356, %v1356
    %v1377 = vmul.f32 %v1358, %v1358
    %v1378 = vmul.f32 %v1307, %v1307
    %v1379 = vmul.f32 %v1309, %v1309
    %v1380 = vmul.f32 %v1360, %v1360
    %v1381 = vmul.f32 %v1362, %v1362
    %v1382 = vmul.f32 %v1313, %v1313
    %v1383 = vmul.f32 %v1315, %v1315
    %v1384 = vmul.f32 %v1366, %v1366
    %v1385 = vmul.f32 %v1368, %v1368
    %v1386 = vmul.f32 %v1317, %v1317
    %v1387 = vmul.f32 %v1319, %v1319
    %v1388 = vmul.f32 %v1370, %v1370
    %v1389 = vmul.f32 %v1372, %v1372
    %v1390 = vmul.f32 %v1303, %v1374
    %v1391 = vmul.f32 %v1305, %v1375
    %v1392 = vmul.f32 %v1356, %v1376
    %v1393 = vmul.f32 %v1358, %v1377
    %v1394 = vmul.f32 %v1307, %v1378
    %v1395 = vmul.f32 %v1309, %v1379
    %v1396 = vmul.f32 %v1360, %v1380
    %v1397 = vmul.f32 %v1362, %v1381
    %v1398 = vmul.f32 %v1313, %v1382
    %v1399 = vmul.f32 %v1315, %v1383
    %v1400 = vmul.f32 %v1366, %v1384
    %v1401 = vmul.f32 %v1368, %v1385
    %v1402 = vmul.f32 %v1317, %v1386
    %v1403 = vmul.f32 %v1319, %v1387
    %v1404 = vmul.f32 %v1370, %v1388
    %v1405 = vmul.f32 %v1372, %v1389
    %v1406 = vmul.f32 %v1390, 0.044715
    %v1407 = vmul.f32 %v1391, 0.044715
    %v1408 = vmul.f32 %v1392, 0.044715
    %v1409 = vmul.f32 %v1393, 0.044715
    %v1410 = vmul.f32 %v1394, 0.044715
    %v1411 = vmul.f32 %v1395, 0.044715
    %v1412 = vmul.f32 %v1396, 0.044715
    %v1413 = vmul.f32 %v1397, 0.044715
    %v1414 = vmul.f32 %v1398, 0.044715
    %v1415 = vmul.f32 %v1399, 0.044715
    %v1416 = vmul.f32 %v1400, 0.044715
    %v1417 = vmul.f32 %v1401, 0.044715
    %v1418 = vmul.f32 %v1402, 0.044715
    %v1419 = vmul.f32 %v1403, 0.044715
    %v1420 = vmul.f32 %v1404, 0.044715
    %v1421 = vmul.f32 %v1405, 0.044715
    %v1422 = vadd.f32 %v1303, %v1406
    %v1423 = vadd.f32 %v1305, %v1407
    %v1424 = vadd.f32 %v1356, %v1408
    %v1425 = vadd.f32 %v1358, %v1409
    %v1426 = vadd.f32 %v1307, %v1410
    %v1427 = vadd.f32 %v1309, %v1411
    %v1428 = vadd.f32 %v1360, %v1412
    %v1429 = vadd.f32 %v1362, %v1413
    %v1430 = vadd.f32 %v1313, %v1414
    %v1431 = vadd.f32 %v1315, %v1415
    %v1432 = vadd.f32 %v1366, %v1416
    %v1433 = vadd.f32 %v1368, %v1417
    %v1434 = vadd.f32 %v1317, %v1418
    %v1435 = vadd.f32 %v1319, %v1419
    %v1436 = vadd.f32 %v1370, %v1420
    %v1437 = vadd.f32 %v1372, %v1421
    %v1438 = vmul.f32 %v1422, 0.7978846
    %v1439 = vmul.f32 %v1423, 0.7978846
    %v1440 = vmul.f32 %v1424, 0.7978846
    %v1441 = vmul.f32 %v1425, 0.7978846
    %v1442 = vmul.f32 %v1426, 0.7978846
    %v1443 = vmul.f32 %v1427, 0.7978846
    %v1444 = vmul.f32 %v1428, 0.7978846
    %v1445 = vmul.f32 %v1429, 0.7978846
    %v1446 = vmul.f32 %v1430, 0.7978846
    %v1447 = vmul.f32 %v1431, 0.7978846
    %v1448 = vmul.f32 %v1432, 0.7978846
    %v1449 = vmul.f32 %v1433, 0.7978846
    %v1450 = vmul.f32 %v1434, 0.7978846
    %v1451 = vmul.f32 %v1435, 0.7978846
    %v1452 = vmul.f32 %v1436, 0.7978846
    %v1453 = vmul.f32 %v1437, 0.7978846
    %v1454 = vtanh.pop %v1438
    %v1455 = vtanh.pop %v1439
    %v1456 = vtanh.pop %v1440
    %v1457 = vtanh.pop %v1441
    %v1458 = vtanh.pop %v1442
    %v1459 = vtanh.pop %v1443
    %v1460 = vtanh.pop %v1444
    %v1461 = vtanh.pop %v1445
    %v1462 = vtanh.pop %v1446
    %v1463 = vtanh.pop %v1447
    %v1464 = vtanh.pop %v1448
    %v1465 = vtanh.pop %v1449
    %v1466 = vtanh.pop %v1450
    %v1467 = vtanh.pop %v1451
    %v1468 = vtanh.pop %v1452
    %v1469 = vtanh.pop %v1453
    %v1470 = vadd.f32 %v1454, 1.0
    %v1471 = vadd.f32 %v1455, 1.0
    %v1472 = vadd.f32 %v1456, 1.0
    %v1473 = vadd.f32 %v1457, 1.0
    %v1474 = vadd.f32 %v1458, 1.0
    %v1475 = vadd.f32 %v1459, 1.0
    %v1476 = vadd.f32 %v1460, 1.0
    %v1477 = vadd.f32 %v1461, 1.0
    %v1478 = vadd.f32 %v1462, 1.0
    %v1479 = vadd.f32 %v1463, 1.0
    %v1480 = vadd.f32 %v1464, 1.0
    %v1481 = vadd.f32 %v1465, 1.0
    %v1482 = vadd.f32 %v1466, 1.0
    %v1483 = vadd.f32 %v1467, 1.0
    %v1484 = vadd.f32 %v1468, 1.0
    %v1485 = vadd.f32 %v1469, 1.0
    %v1486 = vmul.f32 %v1470, 0.5
    %v1487 = vmul.f32 %v1471, 0.5
    %v1488 = vmul.f32 %v1472, 0.5
    %v1489 = vmul.f32 %v1473, 0.5
    %v1490 = vmul.f32 %v1474, 0.5
    %v1491 = vmul.f32 %v1475, 0.5
    %v1492 = vmul.f32 %v1476, 0.5
    %v1493 = vmul.f32 %v1477, 0.5
    %v1494 = vmul.f32 %v1478, 0.5
    %v1495 = vmul.f32 %v1479, 0.5
    %v1496 = vmul.f32 %v1480, 0.5
    %v1497 = vmul.f32 %v1481, 0.5
    %v1498 = vmul.f32 %v1482, 0.5
    %v1499 = vmul.f32 %v1483, 0.5
    %v1500 = vmul.f32 %v1484, 0.5
    %v1501 = vmul.f32 %v1485, 0.5
    %v1502 = vmul.f32 %v1303, %v1486
    %v1503 = vmul.f32 %v1305, %v1487
    %v1504 = vmul.f32 %v1356, %v1488
    %v1505 = vmul.f32 %v1358, %v1489
    %v1506 = vmul.f32 %v1307, %v1490
    %v1507 = vmul.f32 %v1309, %v1491
    %v1508 = vmul.f32 %v1360, %v1492
    %v1509 = vmul.f32 %v1362, %v1493
    %v1510 = vmul.f32 %v1313, %v1494
    %v1511 = vmul.f32 %v1315, %v1495
    %v1512 = vmul.f32 %v1366, %v1496
    %v1513 = vmul.f32 %v1368, %v1497
    %v1514 = vmul.f32 %v1317, %v1498
    %v1515 = vmul.f32 %v1319, %v1499
    %v1516 = vmul.f32 %v1370, %v1500
    %v1517 = vmul.f32 %v1372, %v1501
    %v1518 = vpack.c.bf16 %v1506, %v1502
    %v1519 = vpack.c.bf16 %v1507, %v1503
    %v1520 = vpack.c.bf16 %v1508, %v1504
    %v1521 = vpack.c.bf16 %v1509, %v1505
    %v1522 = vpack.c.bf16 %v1514, %v1510
    %v1523 = vpack.c.bf16 %v1515, %v1511
    %v1524 = vpack.c.bf16 %v1516, %v1512
    %v1525 = vpack.c.bf16 %v1517, %v1513
    %v1526 = vld [vmem:[#allocation4 + $0x40] sm:$0xf]
    %v1527 = vld [vmem:[#allocation4 + $0x44] sm:$0xf]
    %v1528 = vld [vmem:[#allocation4 + $0x48] sm:$0xf]
    %v1529 = vld [vmem:[#allocation4 + $0x4c] sm:$0xf]
    %v1530 = vld [vmem:[#allocation4 + $0x50] sm:$0xf]
    %v1531 = vld [vmem:[#allocation4 + $0x54] sm:$0xf]
    %v1532 = vld [vmem:[#allocation4 + $0x58] sm:$0xf]
    %v1533 = vld [vmem:[#allocation4 + $0x5c] sm:$0xf]
    %v1534 = vld [vmem:[#allocation4 + $0x60] sm:$0xf]
    %v1535 = vld [vmem:[#allocation4 + $0x64] sm:$0xf]
    %v1536 = vld [vmem:[#allocation4 + $0x68] sm:$0xf]
    %v1537 = vld [vmem:[#allocation4 + $0x6c] sm:$0xf]
    %v1538 = vld [vmem:[#allocation4 + $0x70] sm:$0xf]
    %v1539 = vld [vmem:[#allocation4 + $0x74] sm:$0xf]
    %v1540 = vld [vmem:[#allocation4 + $0x78] sm:$0xf]
    %v1541 = vld [vmem:[#allocation4 + $0x7c] sm:$0xf]
    %v1542 = vld [vmem:[#allocation4 + $0x80] sm:$0xf]
    %v1543 = vld [vmem:[#allocation4 + $0x84] sm:$0xf]
    %v1544 = vld [vmem:[#allocation4 + $0x88] sm:$0xf]
    %v1545 = vld [vmem:[#allocation4 + $0x8c] sm:$0xf]
    %v1546 = vld [vmem:[#allocation4 + $0x90] sm:$0xf]
    %v1547 = vld [vmem:[#allocation4 + $0x94] sm:$0xf]
    %v1548 = vld [vmem:[#allocation4 + $0x98] sm:$0xf]
    %v1549 = vld [vmem:[#allocation4 + $0x9c] sm:$0xf]
    %v1550 = vld [vmem:[#allocation4 + $0xa0] sm:$0xf]
    %v1551 = vld [vmem:[#allocation4 + $0xa4] sm:$0xf]
    %v1552 = vld [vmem:[#allocation4 + $0xa8] sm:$0xf]
    %v1553 = vld [vmem:[#allocation4 + $0xac] sm:$0xf]
    %v1554 = vld [vmem:[#allocation4 + $0xb0] sm:$0xf]
    %v1555 = vld [vmem:[#allocation4 + $0xb4] sm:$0xf]
    %v1556 = vld [vmem:[#allocation4 + $0xb8] sm:$0xf]
    %v1557 = vld [vmem:[#allocation4 + $0xbc] sm:$0xf]
    %v1558 = vld [vmem:[#allocation4 + $0xc0] sm:$0xf]
    %v1559 = vld [vmem:[#allocation4 + $0xc4] sm:$0xf]
    %v1560 = vld [vmem:[#allocation4 + $0xc8] sm:$0xf]
    %v1561 = vld [vmem:[#allocation4 + $0xcc] sm:$0xf]
    %v1562 = vld [vmem:[#allocation4 + $0xd0] sm:$0xf]
    %v1563 = vld [vmem:[#allocation4 + $0xd4] sm:$0xf]
    %v1564 = vld [vmem:[#allocation4 + $0xd8] sm:$0xf]
    %v1565 = vld [vmem:[#allocation4 + $0xdc] sm:$0xf]
    %v1566 = vld [vmem:[#allocation4 + $0xe0] sm:$0xf]
    %v1567 = vld [vmem:[#allocation4 + $0xe4] sm:$0xf]
    %v1568 = vld [vmem:[#allocation4 + $0xe8] sm:$0xf]
    %v1569 = vld [vmem:[#allocation4 + $0xec] sm:$0xf]
    %v1570 = vld [vmem:[#allocation4 + $0xf0] sm:$0xf]
    %v1571 = vld [vmem:[#allocation4 + $0xf4] sm:$0xf]
    %v1572 = vld [vmem:[#allocation4 + $0xf8] sm:$0xf]
    %v1573 = vld [vmem:[#allocation4 + $0xfc] sm:$0xf]
    %v1574 = vld [vmem:[#allocation4 + $0x100] sm:$0xf]
    %v1575 = vld [vmem:[#allocation4 + $0x104] sm:$0xf]
    %v1576 = vld [vmem:[#allocation4 + $0x108] sm:$0xf]
    %v1577 = vld [vmem:[#allocation4 + $0x10c] sm:$0xf]
    %v1578 = vld [vmem:[#allocation4 + $0x110] sm:$0xf]
    %v1579 = vld [vmem:[#allocation4 + $0x114] sm:$0xf]
    %v1580 = vld [vmem:[#allocation4 + $0x118] sm:$0xf]
    %v1581 = vld [vmem:[#allocation4 + $0x11c] sm:$0xf]
    %v1582 = vld [vmem:[#allocation4 + $0x120] sm:$0xf]
    %v1583 = vld [vmem:[#allocation4 + $0x124] sm:$0xf]
    %v1584 = vld [vmem:[#allocation4 + $0x128] sm:$0xf]
    %v1585 = vld [vmem:[#allocation4 + $0x12c] sm:$0xf]
    %v1586 = vld [vmem:[#allocation4 + $0x130] sm:$0xf]
    %v1587 = vld [vmem:[#allocation4 + $0x134] sm:$0xf]
    %v1588 = vld [vmem:[#allocation4 + $0x138] sm:$0xf]
    %v1589 = vld [vmem:[#allocation4 + $0x13c] sm:$0xf]
    %v1590 = vld [vmem:[%s4 + $0x5] ss:$0 sm:$0xff]
    %v1655 = vunpack.c.l.b16 %v1526
    %v1656 = vunpack.c.l.b16 %v1527
    %v1657 = vunpack.c.l.b16 %v1528
    %v1658 = vunpack.c.l.b16 %v1529
    %v1659 = vunpack.c.l.b16 %v1530
    %v1660 = vunpack.c.l.b16 %v1531
    %v1661 = vunpack.c.l.b16 %v1532
    %v1662 = vunpack.c.l.b16 %v1533
    %v1663 = vunpack.c.l.b16 %v1534
    %v1664 = vunpack.c.l.b16 %v1535
    %v1665 = vunpack.c.l.b16 %v1536
    %v1666 = vunpack.c.l.b16 %v1537
    %v1667 = vunpack.c.l.b16 %v1538
    %v1668 = vunpack.c.l.b16 %v1539
    %v1669 = vunpack.c.l.b16 %v1540
    %v1670 = vunpack.c.l.b16 %v1541
    %v1671 = vunpack.c.l.b16 %v1542
    %v1672 = vunpack.c.l.b16 %v1543
    %v1673 = vunpack.c.l.b16 %v1544
    %v1674 = vunpack.c.l.b16 %v1545
    %v1675 = vunpack.c.l.b16 %v1546
    %v1676 = vunpack.c.l.b16 %v1547
    %v1677 = vunpack.c.l.b16 %v1548
    %v1678 = vunpack.c.l.b16 %v1549
    %v1679 = vunpack.c.l.b16 %v1550
    %v1680 = vunpack.c.l.b16 %v1551
    %v1681 = vunpack.c.l.b16 %v1552
    %v1682 = vunpack.c.l.b16 %v1553
    %v1683 = vunpack.c.l.b16 %v1554
    %v1684 = vunpack.c.l.b16 %v1555
    %v1685 = vunpack.c.l.b16 %v1556
    %v1686 = vunpack.c.l.b16 %v1557
    %v1687 = vunpack.c.l.b16 %v1558
    %v1688 = vunpack.c.l.b16 %v1559
    %v1689 = vunpack.c.l.b16 %v1560
    %v1690 = vunpack.c.l.b16 %v1561
    %v1691 = vunpack.c.l.b16 %v1562
    %v1692 = vunpack.c.l.b16 %v1563
    %v1693 = vunpack.c.l.b16 %v1564
    %v1694 = vunpack.c.l.b16 %v1565
    %v1695 = vunpack.c.l.b16 %v1566
    %v1696 = vunpack.c.l.b16 %v1567
    %v1697 = vunpack.c.l.b16 %v1568
    %v1698 = vunpack.c.l.b16 %v1569
    %v1699 = vunpack.c.l.b16 %v1570
    %v1700 = vunpack.c.l.b16 %v1571
    %v1701 = vunpack.c.l.b16 %v1572
    %v1702 = vunpack.c.l.b16 %v1573
    %v1703 = vunpack.c.l.b16 %v1574
    %v1704 = vunpack.c.l.b16 %v1575
    %v1705 = vunpack.c.l.b16 %v1576
    %v1706 = vunpack.c.l.b16 %v1577
    %v1707 = vunpack.c.l.b16 %v1578
    %v1708 = vunpack.c.l.b16 %v1579
    %v1709 = vunpack.c.l.b16 %v1580
    %v1710 = vunpack.c.l.b16 %v1581
    %v1711 = vunpack.c.l.b16 %v1582
    %v1712 = vunpack.c.l.b16 %v1583
    %v1713 = vunpack.c.l.b16 %v1584
    %v1714 = vunpack.c.l.b16 %v1585
    %v1715 = vunpack.c.l.b16 %v1586
    %v1716 = vunpack.c.l.b16 %v1587
    %v1717 = vunpack.c.l.b16 %v1588
    %v1718 = vunpack.c.l.b16 %v1589
    %v1719 = vpack.c.b16 %v1656, %v1655
    %v1720 = vpack.c.b16 %v1658, %v1657
    %v1721 = vpack.c.b16 %v1660, %v1659
    %v1722 = vpack.c.b16 %v1662, %v1661
    %v1723 = vpack.c.b16 %v1664, %v1663
    %v1724 = vpack.c.b16 %v1666, %v1665
    %v1725 = vpack.c.b16 %v1668, %v1667
    %v1726 = vpack.c.b16 %v1670, %v1669
    %v1727 = vpack.c.b16 %v1672, %v1671
    %v1728 = vpack.c.b16 %v1674, %v1673
    %v1729 = vpack.c.b16 %v1676, %v1675
    %v1730 = vpack.c.b16 %v1678, %v1677
    %v1731 = vpack.c.b16 %v1680, %v1679
    %v1732 = vpack.c.b16 %v1682, %v1681
    %v1733 = vpack.c.b16 %v1684, %v1683
    %v1734 = vpack.c.b16 %v1686, %v1685
    %v1735 = vpack.c.b16 %v1688, %v1687
    %v1736 = vpack.c.b16 %v1690, %v1689
    %v1737 = vpack.c.b16 %v1692, %v1691
    %v1738 = vpack.c.b16 %v1694, %v1693
    %v1739 = vpack.c.b16 %v1696, %v1695
    %v1740 = vpack.c.b16 %v1698, %v1697
    %v1741 = vpack.c.b16 %v1700, %v1699
    %v1742 = vpack.c.b16 %v1702, %v1701
    %v1743 = vpack.c.b16 %v1704, %v1703
    %v1744 = vpack.c.b16 %v1706, %v1705
    %v1745 = vpack.c.b16 %v1708, %v1707
    %v1746 = vpack.c.b16 %v1710, %v1709
    %v1747 = vpack.c.b16 %v1712, %v1711
    %v1748 = vpack.c.b16 %v1714, %v1713
    %v1749 = vpack.c.b16 %v1716, %v1715
    %v1750 = vpack.c.b16 %v1718, %v1717
    %1783 = vmatprep.subr.bf16.mxu0 0
    %1784 = vmatpush1.bf16.msra.mxu0 %v1726
    %1785 = vmatprep.subr.bf16.mxu0 0
    %1786 = vmatpush1.bf16.msra.mxu0 %v1725
    %1787 = vmatprep.subr.bf16.mxu0 0
    %1788 = vmatpush1.bf16.msra.mxu0 %v1724
    %1789 = vmatprep.subr.bf16.mxu0 0
    %1790 = vmatpush1.bf16.msra.mxu0 %v1723
    %1791 = vmatprep.subr.bf16.mxu0 0
    %1792 = vmatpush1.bf16.msra.mxu0 %v1722
    %1793 = vmatprep.subr.bf16.mxu0 0
    %1794 = vmatpush1.bf16.msra.mxu0 %v1721
    %1795 = vmatprep.subr.bf16.mxu0 0
    %1796 = vmatpush1.bf16.msra.mxu0 %v1720
    %1797 = vmatprep.subr.bf16.mxu0 0
    %1798 = vmatpush1.bf16.msra.mxu0 %v1719
    %1799 = vmatprep.subr.bf16.mxu0 0
    %1800 = vmatpush2.bf16.msra.mxu0 %v1734
    %1801 = vmatprep.subr.bf16.mxu0 0
    %1802 = vmatpush2.bf16.msra.mxu0 %v1733
    %1803 = vmatprep.subr.bf16.mxu0 0
    %1804 = vmatpush2.bf16.msra.mxu0 %v1732
    %1805 = vmatprep.subr.bf16.mxu0 0
    %1806 = vmatpush2.bf16.msra.mxu0 %v1731
    %1807 = vmatprep.subr.bf16.mxu0 0
    %1808 = vmatpush2.bf16.msra.mxu0 %v1730
    %1809 = vmatprep.subr.bf16.mxu0 0
    %1810 = vmatpush2.bf16.msra.mxu0 %v1729
    %1811 = vmatprep.subr.bf16.mxu0 0
    %1812 = vmatpush2.bf16.msra.mxu0 %v1728
    %1813 = vmatprep.subr.bf16.mxu0 0
    %1814 = vmatpush2.bf16.msra.mxu0 %v1727
    %1815 = vmatprep.mubr.bf16.mxu0 %v1519
    %1816 = vmatmul.mubr.bf16.gmra.mxu0 %v1518
    %v1817 = vpop.f32.mrf.mxu0
    %v1818 = vadd.f32 %v1590, %v1817
    %v1819 = vpop.f32.mrf.mxu0
    %v1820 = vpop.f32.mrf.mxu0
    %v1821 = vadd.f32 %v1590, %v1820
    %v1822 = vpop.f32.mrf.mxu0
    %1823 = vmatprep.mubr.bf16.mxu0 %v1523
    %1824 = vmatmul.mubr.bf16.gmra.mxu0 %v1522
    %v1825 = vpop.f32.mrf.mxu0
    %v1826 = vadd.f32 %v1590, %v1825
    %v1827 = vpop.f32.mrf.mxu0
    %v1828 = vpop.f32.mrf.mxu0
    %v1829 = vadd.f32 %v1590, %v1828
    %v1830 = vpop.f32.mrf.mxu0
    %1831 = vdwg.mxu0
    %1832 = vmatprep.subr.bf16.mxu0 0
    %1833 = vmatpush1.bf16.msra.mxu0 %v1742
    %1834 = vmatprep.subr.bf16.mxu0 0
    %1835 = vmatpush1.bf16.msra.mxu0 %v1741
    %1836 = vmatprep.subr.bf16.mxu0 0
    %1837 = vmatpush1.bf16.msra.mxu0 %v1740
    %1838 = vmatprep.subr.bf16.mxu0 0
    %1839 = vmatpush1.bf16.msra.mxu0 %v1739
    %1840 = vmatprep.subr.bf16.mxu0 0
    %1841 = vmatpush1.bf16.msra.mxu0 %v1738
    %1842 = vmatprep.subr.bf16.mxu0 0
    %1843 = vmatpush1.bf16.msra.mxu0 %v1737
    %1844 = vmatprep.subr.bf16.mxu0 0
    %1845 = vmatpush1.bf16.msra.mxu0 %v1736
    %1846 = vmatprep.subr.bf16.mxu0 0
    %1847 = vmatpush1.bf16.msra.mxu0 %v1735
    %1848 = vmatprep.subr.bf16.mxu0 0
    %1849 = vmatpush2.bf16.msra.mxu0 %v1750
    %1850 = vmatprep.subr.bf16.mxu0 0
    %1851 = vmatpush2.bf16.msra.mxu0 %v1749
    %1852 = vmatprep.subr.bf16.mxu0 0
    %1853 = vmatpush2.bf16.msra.mxu0 %v1748
    %1854 = vmatprep.subr.bf16.mxu0 0
    %1855 = vmatpush2.bf16.msra.mxu0 %v1747
    %1856 = vmatprep.subr.bf16.mxu0 0
    %1857 = vmatpush2.bf16.msra.mxu0 %v1746
    %1858 = vmatprep.subr.bf16.mxu0 0
    %1859 = vmatpush2.bf16.msra.mxu0 %v1745
    %1860 = vmatprep.subr.bf16.mxu0 0
    %1861 = vmatpush2.bf16.msra.mxu0 %v1744
    %1862 = vmatprep.subr.bf16.mxu0 0
    %1863 = vmatpush2.bf16.msra.mxu0 %v1743
    %1864 = vmatprep.mubr.bf16.mxu0 %v1521
    %1865 = vmatmul.mubr.bf16.gmra.mxu0 %v1520
    %v1866 = vpop.f32.mrf.mxu0
    %v1867 = vadd.f32 %v1818, %v1866
    %v1868 = vpop.f32.mrf.mxu0
    %v1869 = vpop.f32.mrf.mxu0
    %v1870 = vadd.f32 %v1821, %v1869
    %v1871 = vpop.f32.mrf.mxu0
    %1872 = vmatprep.mubr.bf16.mxu0 %v1525
    %1873 = vmatmul.mubr.bf16.gmra.mxu0 %v1524
    %v1874 = vpop.f32.mrf.mxu0
    %v1875 = vadd.f32 %v1826, %v1874
    %v1876 = vpop.f32.mrf.mxu0
    %v1877 = vpop.f32.mrf.mxu0
    %v1878 = vadd.f32 %v1829, %v1877
    %v1879 = vpop.f32.mrf.mxu0
    %1880 = vdwg.mxu0
    %v1881 = vadd.f32 %v1047, %v1867
    %v1882 = vadd.f32 %v1048, %v1870
    %v1883 = vadd.f32 %v1049, %v1875
    %v1884 = vadd.f32 %v1050, %v1878
    %v1885 = vld [vmem:[%s4 + $0x6] ss:$0 sm:$0xff]
    %v1886 = vld [vmem:[%s4 + $0x7] ss:$0 sm:$0xff]
    %1887 = vadd.xlane.f32.xlu0 %v1881
    %v1888 = vpop.xlane.xlu0 %1887
    %1889 = vadd.xlane.f32.xlu0 %v1882
    %v1890 = vpop.xlane.xlu0 %1889
    %1891 = vadd.xlane.f32.xlu0 %v1883
    %v1892 = vpop.xlane.xlu0 %1891
    %1893 = vadd.xlane.f32.xlu0 %v1884
    %v1894 = vpop.xlane.xlu0 %1893
    %v1895 = vmul.f32 %v1888, %v1006
    %v1896 = vmul.f32 %v1890, %v1006
    %v1897 = vmul.f32 %v1892, %v1006
    %v1898 = vmul.f32 %v1894, %v1006
    %v1899 = vsub.f32 %v1881, %v1895
    %v1900 = vsub.f32 %v1882, %v1896
    %v1901 = vsub.f32 %v1883, %v1897
    %v1902 = vsub.f32 %v1884, %v1898
    %v1903 = vmul.f32 %v1899, %v1899
    %v1904 = vmul.f32 %v1900, %v1900
    %v1905 = vmul.f32 %v1901, %v1901
    %v1906 = vmul.f32 %v1902, %v1902
    %1907 = vadd.xlane.f32.xlu0 %v1903
    %v1908 = vpop.xlane.xlu0 %1907
    %1909 = vadd.xlane.f32.xlu0 %v1904
    %v1910 = vpop.xlane.xlu0 %1909
    %1911 = vadd.xlane.f32.xlu0 %v1905
    %v1912 = vpop.xlane.xlu0 %1911
    %1913 = vadd.xlane.f32.xlu0 %v1906
    %v1914 = vpop.xlane.xlu0 %1913
    %v1915 = vmul.f32 %v1908, %v1006
    %v1916 = vmul.f32 %v1910, %v1006
    %v1917 = vmul.f32 %v1912, %v1006
    %v1918 = vmul.f32 %v1914, %v1006
    %v1919 = vadd.f32 %v1915, 1e-12
    %v1920 = vadd.f32 %v1916, 1e-12
    %v1921 = vadd.f32 %v1917, 1e-12
    %v1922 = vadd.f32 %v1918, 1e-12
    %v1923 = vrsqrt.pop %v1919
    %v1924 = vrsqrt.pop %v1920
    %v1925 = vrsqrt.pop %v1921
    %v1926 = vrsqrt.pop %v1922
    %v1927 = vmul.f32 %v1899, %v1923
    %v1928 = vmul.f32 %v1900, %v1924
    %v1929 = vmul.f32 %v1901, %v1925
    %v1930 = vmul.f32 %v1902, %v1926
    %v1931 = vmul.f32 %v1927, %v1885
    %v1932 = vmul.f32 %v1928, %v1885
    %v1933 = vmul.f32 %v1929, %v1885
    %v1934 = vmul.f32 %v1930, %v1885
    %v1935 = vadd.f32 %v1931, %v1886
    %v1936 = vadd.f32 %v1932, %v1886
    %v1937 = vadd.f32 %v1933, %v1886
    %v1938 = vadd.f32 %v1934, %v1886
    %v1939 = vpack.c.bf16 %v1936, %v1935
    %v1940 = vpack.c.bf16 %v1938, %v1937
    %v1941 = vld [vmem:[#allocation2 + $0x200] sm:$0xff]
    %v1942 = vld [vmem:[#allocation2 + $0x208] sm:$0xf]
    %v1943 = vld [vmem:[#allocation2 + $0x210] sm:$0xff]
    %v1944 = vld [vmem:[#allocation2 + $0x218] sm:$0xf]
    %v1945 = vld [vmem:[#allocation2 + $0x220] sm:$0xff]
    %v1946 = vld [vmem:[#allocation2 + $0x228] sm:$0xf]
    %v1947 = vld [vmem:[#allocation2 + $0x230] sm:$0xff]
    %v1948 = vld [vmem:[#allocation2 + $0x238] sm:$0xf]
    %v1949 = vld [vmem:[#allocation2 + $0x240] sm:$0xff]
    %v1950 = vld [vmem:[#allocation2 + $0x248] sm:$0xf]
    %v1951 = vld [vmem:[#allocation2 + $0x250] sm:$0xff]
    %v1952 = vld [vmem:[#allocation2 + $0x258] sm:$0xf]
    %v1953 = vld [vmem:[#allocation2 + $0x260] sm:$0xff]
    %v1954 = vld [vmem:[#allocation2 + $0x268] sm:$0xf]
    %v1955 = vld [vmem:[#allocation2 + $0x270] sm:$0xff]
    %v1956 = vld [vmem:[#allocation2 + $0x278] sm:$0xf]
    %v1957 = vld [vmem:[#allocation2 + $0x280] sm:$0xff]
    %v1958 = vld [vmem:[#allocation2 + $0x288] sm:$0xf]
    %v1959 = vld [vmem:[#allocation2 + $0x290] sm:$0xff]
    %v1960 = vld [vmem:[#allocation2 + $0x298] sm:$0xf]
    %v1961 = vld [vmem:[#allocation2 + $0x2a0] sm:$0xff]
    %v1962 = vld [vmem:[#allocation2 + $0x2a8] sm:$0xf]
    %v1963 = vld [vmem:[#allocation2 + $0x2b0] sm:$0xff]
    %v1964 = vld [vmem:[#allocation2 + $0x2b8] sm:$0xf]
    %v1965 = vld [vmem:[#allocation2 + $0x2c0] sm:$0xff]
    %v1966 = vld [vmem:[#allocation2 + $0x2c8] sm:$0xf]
    %v1967 = vld [vmem:[#allocation2 + $0x2d0] sm:$0xff]
    %v1968 = vld [vmem:[#allocation2 + $0x2d8] sm:$0xf]
    %v1969 = vld [vmem:[#allocation2 + $0x2e0] sm:$0xff]
    %v1970 = vld [vmem:[#allocation2 + $0x2e8] sm:$0xf]
    %v1971 = vld [vmem:[#allocation2 + $0x2f0] sm:$0xff]
    %v1972 = vld [vmem:[#allocation2 + $0x2f8] sm:$0xf]
    %v2005 = vunpack.c.l.b16 %v1941
    %v2006 = vunpack.c.h.b16 %v1941
    %v2007 = vunpack.c.l.b16 %v1942
    %v2008 = vunpack.c.l.b16 %v1943
    %v2009 = vunpack.c.h.b16 %v1943
    %v2010 = vunpack.c.l.b16 %v1944
    %v2011 = vunpack.c.l.b16 %v1945
    %v2012 = vunpack.c.h.b16 %v1945
    %v2013 = vunpack.c.l.b16 %v1946
    %v2014 = vunpack.c.l.b16 %v1947
    %v2015 = vunpack.c.h.b16 %v1947
    %v2016 = vunpack.c.l.b16 %v1948
    %v2017 = vunpack.c.l.b16 %v1949
    %v2018 = vunpack.c.h.b16 %v1949
    %v2019 = vunpack.c.l.b16 %v1950
    %v2020 = vunpack.c.l.b16 %v1951
    %v2021 = vunpack.c.h.b16 %v1951
    %v2022 = vunpack.c.l.b16 %v1952
    %v2023 = vunpack.c.l.b16 %v1953
    %v2024 = vunpack.c.h.b16 %v1953
    %v2025 = vunpack.c.l.b16 %v1954
    %v2026 = vunpack.c.l.b16 %v1955
    %v2027 = vunpack.c.h.b16 %v1955
    %v2028 = vunpack.c.l.b16 %v1956
    %v2029 = vunpack.c.l.b16 %v1957
    %v2030 = vunpack.c.h.b16 %v1957
    %v2031 = vunpack.c.l.b16 %v1958
    %v2032 = vunpack.c.l.b16 %v1959
    %v2033 = vunpack.c.h.b16 %v1959
    %v2034 = vunpack.c.l.b16 %v1960
    %v2035 = vunpack.c.l.b16 %v1961
    %v2036 = vunpack.c.h.b16 %v1961
    %v2037 = vunpack.c.l.b16 %v1962
    %v2038 = vunpack.c.l.b16 %v1963
    %v2039 = vunpack.c.h.b16 %v1963
    %v2040 = vunpack.c.l.b16 %v1964
    %v2041 = vunpack.c.l.b16 %v1965
    %v2042 = vunpack.c.h.b16 %v1965
    %v2043 = vunpack.c.l.b16 %v1966
    %v2044 = vunpack.c.l.b16 %v1967
    %v2045 = vunpack.c.h.b16 %v1967
    %v2046 = vunpack.c.l.b16 %v1968
    %v2047 = vunpack.c.l.b16 %v1969
    %v2048 = vunpack.c.h.b16 %v1969
    %v2049 = vunpack.c.l.b16 %v1970
    %v2050 = vunpack.c.l.b16 %v1971
    %v2051 = vunpack.c.h.b16 %v1971
    %v2052 = vunpack.c.l.b16 %v1972
    %v2053 = vpack.c.b16 %v2008, %v2005
    %v2054 = vpack.c.b16 %v2009, %v2006
    %v2055 = vpack.c.b16 %v2010, %v2007
    %v2056 = vpack.c.b16 %v2014, %v2011
    %v2057 = vpack.c.b16 %v2015, %v2012
    %v2058 = vpack.c.b16 %v2016, %v2013
    %v2059 = vpack.c.b16 %v2020, %v2017
    %v2060 = vpack.c.b16 %v2021, %v2018
    %v2061 = vpack.c.b16 %v2022, %v2019
    %v2062 = vpack.c.b16 %v2026, %v2023
    %v2063 = vpack.c.b16 %v2027, %v2024
    %v2064 = vpack.c.b16 %v2028, %v2025
    %v2065 = vpack.c.b16 %v2032, %v2029
    %v2066 = vpack.c.b16 %v2033, %v2030
    %v2067 = vpack.c.b16 %v2034, %v2031
    %v2068 = vpack.c.b16 %v2038, %v2035
    %v2069 = vpack.c.b16 %v2039, %v2036
    %v2070 = vpack.c.b16 %v2040, %v2037
    %v2071 = vpack.c.b16 %v2044, %v2041
    %v2072 = vpack.c.b16 %v2045, %v2042
    %v2073 = vpack.c.b16 %v2046, %v2043
    %v2074 = vpack.c.b16 %v2050, %v2047
    %v2075 = vpack.c.b16 %v2051, %v2048
    %v2076 = vpack.c.b16 %v2052, %v2049
    %2101 = vmatprep.subr.bf16.mxu0 %v2075
    %2102 = vmatpush1.bf16.msra.mxu0 %v2074
    %2103 = vmatprep.subr.bf16.mxu0 %v2072
    %2104 = vmatpush1.bf16.msra.mxu0 %v2071
    %2105 = vmatprep.subr.bf16.mxu0 %v2069
    %2106 = vmatpush1.bf16.msra.mxu0 %v2068
    %2107 = vmatprep.subr.bf16.mxu0 %v2066
    %2108 = vmatpush1.bf16.msra.mxu0 %v2065
    %2109 = vmatprep.subr.bf16.mxu0 %v2063
    %2110 = vmatpush1.bf16.msra.mxu0 %v2062
    %2111 = vmatprep.subr.bf16.mxu0 %v2060
    %2112 = vmatpush1.bf16.msra.mxu0 %v2059
    %2113 = vmatprep.subr.bf16.mxu0 %v2057
    %2114 = vmatpush1.bf16.msra.mxu0 %v2056
    %2115 = vmatprep.subr.bf16.mxu0 %v2054
    %2116 = vmatpush1.bf16.msra.mxu0 %v2053
    %2117 = vmatprep.subr.bf16.mxu0 0
    %2118 = vmatpush2.bf16.msra.mxu0 0
    %2119 = vmatprep.subr.bf16.mxu0 0
    %2120 = vmatpush2.bf16.msra.mxu0 0
    %2121 = vmatprep.subr.bf16.mxu0 0
    %2122 = vmatpush2.bf16.msra.mxu0 0
    %2123 = vmatprep.subr.bf16.mxu0 0
    %2124 = vmatpush2.bf16.msra.mxu0 0
    %2125 = vmatprep.subr.bf16.mxu0 0
    %2126 = vmatpush2.bf16.msra.mxu0 0
    %2127 = vmatprep.subr.bf16.mxu0 0
    %2128 = vmatpush2.bf16.msra.mxu0 0
    %2129 = vmatprep.subr.bf16.mxu0 0
    %2130 = vmatpush2.bf16.msra.mxu0 0
    %2131 = vmatprep.subr.bf16.mxu0 0
    %2132 = vmatpush2.bf16.msra.mxu0 0
    %2133 = vmatprep.mubr.bf16.mxu0 0
    %2134 = vmatmul.mubr.bf16.gmra.mxu0 %v1939
    %v2135 = vpop.f32.mrf.mxu0
    %v2136 = vadd.f32 0.0, %v2135
    %v2137 = vpop.f32.mrf.mxu0
    %v2138 = vadd.f32 0.0, %v2137
    %v2139 = vpop.f32.mrf.mxu0
    %v2140 = vpop.f32.mrf.mxu0
    %v2141 = vadd.f32 0.0, %v2140
    %2142 = vmatprep.mubr.bf16.mxu0 0
    %2143 = vmatmul.mubr.bf16.gmra.mxu0 %v1940
    %v2144 = vpop.f32.mrf.mxu0
    %v2145 = vadd.f32 0.0, %v2144
    %v2146 = vpop.f32.mrf.mxu0
    %v2147 = vadd.f32 0.0, %v2146
    %v2148 = vpop.f32.mrf.mxu0
    %v2149 = vpop.f32.mrf.mxu0
    %v2150 = vadd.f32 0.0, %v2149
    %2151 = vdwg.mxu0
    %2152 = vmatprep.subr.bf16.mxu0 0
    %2153 = vmatpush1.bf16.msra.mxu0 %v2076
    %2154 = vmatprep.subr.bf16.mxu0 0
    %2155 = vmatpush1.bf16.msra.mxu0 %v2073
    %2156 = vmatprep.subr.bf16.mxu0 0
    %2157 = vmatpush1.bf16.msra.mxu0 %v2070
    %2158 = vmatprep.subr.bf16.mxu0 0
    %2159 = vmatpush1.bf16.msra.mxu0 %v2067
    %2160 = vmatprep.subr.bf16.mxu0 0
    %2161 = vmatpush1.bf16.msra.mxu0 %v2064
    %2162 = vmatprep.subr.bf16.mxu0 0
    %2163 = vmatpush1.bf16.msra.mxu0 %v2061
    %2164 = vmatprep.subr.bf16.mxu0 0
    %2165 = vmatpush1.bf16.msra.mxu0 %v2058
    %2166 = vmatprep.subr.bf16.mxu0 0
    %2167 = vmatpush1.bf16.msra.mxu0 %v2055
    %2168 = vmatprep.subr.bf16.mxu0 0
    %2169 = vmatpush2.bf16.msra.mxu0 0
    %2170 = vmatprep.subr.bf16.mxu0 0
    %2171 = vmatpush2.bf16.msra.mxu0 0
    %2172 = vmatprep.subr.bf16.mxu0 0
    %2173 = vmatpush2.bf16.msra.mxu0 0
    %2174 = vmatprep.subr.bf16.mxu0 0
    %2175 = vmatpush2.bf16.msra.mxu0 0
    %2176 = vmatprep.subr.bf16.mxu0 0
    %2177 = vmatpush2.bf16.msra.mxu0 0
    %2178 = vmatprep.subr.bf16.mxu0 0
    %2179 = vmatpush2.bf16.msra.mxu0 0
    %2180 = vmatprep.subr.bf16.mxu0 0
    %2181 = vmatpush2.bf16.msra.mxu0 0
    %2182 = vmatprep.subr.bf16.mxu0 0
    %2183 = vmatpush2.bf16.msra.mxu0 0
    %2184 = vmatprep.mubr.bf16.mxu0 0
    %2185 = vmatmul.mubr.bf16.gmra.mxu0 %v1939
    %v2186 = vpop.f32.mrf.mxu0
    %v2187 = vadd.f32 0.0, %v2186
    %v2188 = vpop.f32.mrf.mxu0
    %v2189 = vpop.f32.mrf.mxu0
    %v2190 = vadd.f32 0.0, %v2189
    %v2191 = vpop.f32.mrf.mxu0
    %2192 = vmatprep.mubr.bf16.mxu0 0
    %2193 = vmatmul.mubr.bf16.gmra.mxu0 %v1940
    %v2194 = vpop.f32.mrf.mxu0
    %v2195 = vadd.f32 0.0, %v2194
    %v2196 = vpop.f32.mrf.mxu0
    %v2197 = vpop.f32.mrf.mxu0
    %v2198 = vadd.f32 0.0, %v2197
    %v2199 = vpop.f32.mrf.mxu0
    %2200 = vdwg.mxu0
    %v2201 = vld [vmem:[%s4 + $0x20] ss:$0 sm:$0xff]
    %v2202 = vadd.f32 %v2136, %v2201
    %v2203 = vadd.f32 %v2145, %v2201
    %v2204 = vld [vmem:[%s4 + $0x28] ss:$0 sm:$0xff]
    %v2205 = vadd.f32 %v2138, %v2204
    %v2206 = vadd.f32 %v2141, %v2204
    %v2207 = vadd.f32 %v2147, %v2204
    %v2208 = vadd.f32 %v2150, %v2204
    %v2209 = vld [vmem:[%s4 + $0x30] ss:$0 sm:$0xff]
    %v2210 = vadd.f32 %v2187, %v2209
    %v2211 = vadd.f32 %v2190, %v2209
    %v2212 = vadd.f32 %v2195, %v2209
    %v2213 = vadd.f32 %v2198, %v2209
    %v2215 = vrot.slane %v2203, 7
    %vm2217 = vcmask 1040384
    %v2218 = vsel %vm2217, %v2202, %v2215
    %v2220 = vrot.slane %v1937, 7
    %v2222 = vsel %vm2217, %v1935, %v2220
    %v2224 = vrot.slane %v207, 7
    %v2226 = vsel %vm2217, %v205, %v2224
    %v2227 = vpack.c.bf16 %v2218, %v2218
    %v2228 = vpack.c.bf16 %v2206, %v2205
    %v2229 = vpack.c.bf16 %v2208, %v2207
    %v2231 = vsel %vm492, %v2227, 0
    %v2234 = vsel %vm492, %v2228, 0
    %v2237 = vsel %vm492, %v2229, 0
    %2239 = vmatprep.subr.bf16.mxu0 0
    %2240 = vmatpush1.bf16.xpose.msra.mxu0 0
    %2241 = vmatprep.subr.bf16.mxu0 0
    %2242 = vmatpush1.bf16.xpose.msra.mxu0 0
    %2243 = vmatprep.subr.bf16.mxu0 0
    %2244 = vmatpush1.bf16.xpose.msra.mxu0 0
    %2245 = vmatprep.subr.bf16.mxu0 0
    %2246 = vmatpush1.bf16.xpose.msra.mxu0 0
    %2247 = vmatprep.subr.bf16.mxu0 0
    %2248 = vmatpush1.bf16.xpose.msra.mxu0 0
    %2249 = vmatprep.subr.bf16.mxu0 0
    %2250 = vmatpush1.bf16.xpose.msra.mxu0 0
    %2251 = vmatprep.subr.bf16.mxu0 0
    %2252 = vmatpush1.bf16.xpose.msra.mxu0 %v2237
    %2253 = vmatprep.subr.bf16.mxu0 0
    %2254 = vmatpush1.bf16.xpose.msra.mxu0 %v2234
    %2255 = vmatprep.subr.bf16.mxu0 0
    %2256 = vmatpush2.bf16.xpose.msra.mxu0 0
    %2257 = vmatprep.subr.bf16.mxu0 0
    %2258 = vmatpush2.bf16.xpose.msra.mxu0 0
    %2259 = vmatprep.subr.bf16.mxu0 0
    %2260 = vmatpush2.bf16.xpose.msra.mxu0 0
    %2261 = vmatprep.subr.bf16.mxu0 0
    %2262 = vmatpush2.bf16.xpose.msra.mxu0 0
    %2263 = vmatprep.subr.bf16.mxu0 0
    %2264 = vmatpush2.bf16.xpose.msra.mxu0 0
    %2265 = vmatprep.subr.bf16.mxu0 0
    %2266 = vmatpush2.bf16.xpose.msra.mxu0 0
    %2267 = vmatprep.subr.bf16.mxu0 0
    %2268 = vmatpush2.bf16.xpose.msra.mxu0 0
    %2269 = vmatprep.subr.bf16.mxu0 0
    %2270 = vmatpush2.bf16.xpose.msra.mxu0 0
    %2271 = vmatprep.mubr.bf16.mxu0 0
    %2272 = vmatmul.mubr.bf16.gmra.mxu0 %v2231
    %v2273 = vpop.f32.mrf.mxu0
    %v2274 = vadd.f32 0.0, %v2273
    %v2275 = vpop.f32.mrf.mxu0
    %v2276 = vpop.f32.mrf.mxu0
    %v2277 = vpop.f32.mrf.mxu0
    %2278 = vdwg.mxu0
    %v2279 = vmul.f32 %v2274, 0.125
    %v2280 = vadd.f32 %v2279, %v2226
    %vm2281 = vcmask 254976
    %v2282 = vsel %vm2281, %v2280, -inf
    %2283 = vmax.xlane.f32.xlu0 %v2282
    %v2284 = vpop.xlane.xlu0 %2283
    %v2285 = vsub.f32 %v2280, %v2284
    %v2286 = vmul.f32 %v2285, 1.442695
    %v2287 = vpow.pop %v2286
    %v2288 = vsel %vm2281, %v2287, 0.0
    %2289 = vadd.xlane.f32.xlu0 %v2288
    %v2290 = vpop.xlane.xlu0 %2289
    %v2291 = vrcp.pop %v2290
    %v2292 = vmul.f32 %v2287, %v2291
    %v2293 = vpack.c.bf16 %v2292, %v2292
    %v2294 = vpack.c.bf16 %v2211, %v2210
    %v2295 = vpack.c.bf16 %v2213, %v2212
    %v2297 = vsel %vm562, %v2293, 0
    %2299 = vmatprep.subr.bf16.mxu0 0
    %2300 = vmatpush1.bf16.msra.mxu0 0
    %2301 = vmatprep.subr.bf16.mxu0 0
    %2302 = vmatpush1.bf16.msra.mxu0 0
    %2303 = vmatprep.subr.bf16.mxu0 0
    %2304 = vmatpush1.bf16.msra.mxu0 0
    %2305 = vmatprep.subr.bf16.mxu0 0
    %2306 = vmatpush1.bf16.msra.mxu0 0
    %2307 = vmatprep.subr.bf16.mxu0 0
    %2308 = vmatpush1.bf16.msra.mxu0 0
    %2309 = vmatprep.subr.bf16.mxu0 0
    %2310 = vmatpush1.bf16.msra.mxu0 0
    %2311 = vmatprep.subr.bf16.mxu0 0
    %2312 = vmatpush1.bf16.msra.mxu0 %v2295
    %2313 = vmatprep.subr.bf16.mxu0 0
    %2314 = vmatpush1.bf16.msra.mxu0 %v2294
    %2315 = vmatprep.subr.bf16.mxu0 0
    %2316 = vmatpush2.bf16.msra.mxu0 0
    %2317 = vmatprep.subr.bf16.mxu0 0
    %2318 = vmatpush2.bf16.msra.mxu0 0
    %2319 = vmatprep.subr.bf16.mxu0 0
    %2320 = vmatpush2.bf16.msra.mxu0 0
    %2321 = vmatprep.subr.bf16.mxu0 0
    %2322 = vmatpush2.bf16.msra.mxu0 0
    %2323 = vmatprep.subr.bf16.mxu0 0
    %2324 = vmatpush2.bf16.msra.mxu0 0
    %2325 = vmatprep.subr.bf16.mxu0 0
    %2326 = vmatpush2.bf16.msra.mxu0 0
    %2327 = vmatprep.subr.bf16.mxu0 0
    %2328 = vmatpush2.bf16.msra.mxu0 0
    %2329 = vmatprep.subr.bf16.mxu0 0
    %2330 = vmatpush2.bf16.msra.mxu0 0
    %2331 = vmatprep.mubr.bf16.mxu0 0
    %2332 = vmatmul.mubr.bf16.gmra.mxu0 %v2297
    %v2333 = vpop.f32.mrf.mxu0
    %v2334 = vadd.f32 0.0, %v2333
    %v2335 = vpop.f32.mrf.mxu0
    %v2336 = vpop.f32.mrf.mxu0
    %v2337 = vpop.f32.mrf.mxu0
    %2338 = vdwg.mxu0
    %2340 = vrot.lane.b32.xlu0 %v2227, 64
    %v2341 = vpop.permute.xlu0 %2340
    %2344 = vrot.lane.b32.xlu0 %v2228, 64
    %v2345 = vpop.permute.xlu0 %2344
    %2346 = vrot.lane.b32.xlu0 %v2229, 64
    %v2347 = vpop.permute.xlu0 %2346
    %v2349 = vsel %vm492, %v2341, 0
    %v2352 = vsel %vm492, %v2345, 0
    %v2355 = vsel %vm492, %v2347, 0
    %2357 = vmatprep.subr.bf16.mxu0 0
    %2358 = vmatpush1.bf16.xpose.msra.mxu0 0
    %2359 = vmatprep.subr.bf16.mxu0 0
    %2360 = vmatpush1.bf16.xpose.msra.mxu0 0
    %2361 = vmatprep.subr.bf16.mxu0 0
    %2362 = vmatpush1.bf16.xpose.msra.mxu0 0
    %2363 = vmatprep.subr.bf16.mxu0 0
    %2364 = vmatpush1.bf16.xpose.msra.mxu0 0
    %2365 = vmatprep.subr.bf16.mxu0 0
    %2366 = vmatpush1.bf16.xpose.msra.mxu0 0
    %2367 = vmatprep.subr.bf16.mxu0 0
    %2368 = vmatpush1.bf16.xpose.msra.mxu0 0
    %2369 = vmatprep.subr.bf16.mxu0 0
    %2370 = vmatpush1.bf16.xpose.msra.mxu0 %v2355
    %2371 = vmatprep.subr.bf16.mxu0 0
    %2372 = vmatpush1.bf16.xpose.msra.mxu0 %v2352
    %2373 = vmatprep.subr.bf16.mxu0 0
    %2374 = vmatpush2.bf16.xpose.msra.mxu0 0
    %2375 = vmatprep.subr.bf16.mxu0 0
    %2376 = vmatpush2.bf16.xpose.msra.mxu0 0
    %2377 = vmatprep.subr.bf16.mxu0 0
    %2378 = vmatpush2.bf16.xpose.msra.mxu0 0
    %2379 = vmatprep.subr.bf16.mxu0 0
    %2380 = vmatpush2.bf16.xpose.msra.mxu0 0
    %2381 = vmatprep.subr.bf16.mxu0 0
    %2382 = vmatpush2.bf16.xpose.msra.mxu0 0
    %2383 = vmatprep.subr.bf16.mxu0 0
    %2384 = vmatpush2.bf16.xpose.msra.mxu0 0
    %2385 = vmatprep.subr.bf16.mxu0 0
    %2386 = vmatpush2.bf16.xpose.msra.mxu0 0
    %2387 = vmatprep.subr.bf16.mxu0 0
    %2388 = vmatpush2.bf16.xpose.msra.mxu0 0
    %2389 = vmatprep.mubr.bf16.mxu0 0
    %2390 = vmatmul.mubr.bf16.gmra.mxu0 %v2349
    %v2391 = vpop.f32.mrf.mxu0
    %v2392 = vadd.f32 0.0, %v2391
    %v2393 = vpop.f32.mrf.mxu0
    %v2394 = vpop.f32.mrf.mxu0
    %v2395 = vpop.f32.mrf.mxu0
    %2396 = vdwg.mxu0
    %v2397 = vmul.f32 %v2392, 0.125
    %v2398 = vadd.f32 %v2397, %v2226
    %v2399 = vsel %vm2281, %v2398, -inf
    %2400 = vmax.xlane.f32.xlu0 %v2399
    %v2401 = vpop.xlane.xlu0 %2400
    %v2402 = vsub.f32 %v2398, %v2401
    %v2403 = vmul.f32 %v2402, 1.442695
    %v2404 = vpow.pop %v2403
    %v2405 = vsel %vm2281, %v2404, 0.0
    %2406 = vadd.xlane.f32.xlu0 %v2405
    %v2407 = vpop.xlane.xlu0 %2406
    %v2408 = vrcp.pop %v2407
    %v2409 = vmul.f32 %v2404, %v2408
    %v2410 = vpack.c.bf16 %v2409, %v2409
    %2413 = vrot.lane.b32.xlu0 %v2294, 64
    %v2414 = vpop.permute.xlu0 %2413
    %2415 = vrot.lane.b32.xlu0 %v2295, 64
    %v2416 = vpop.permute.xlu0 %2415
    %v2420 = vsel %vm562, %v2410, 0
    %2422 = vmatprep.subr.bf16.mxu0 0
    %2423 = vmatpush1.bf16.msra.mxu0 0
    %2424 = vmatprep.subr.bf16.mxu0 0
    %2425 = vmatpush1.bf16.msra.mxu0 0
    %2426 = vmatprep.subr.bf16.mxu0 0
    %2427 = vmatpush1.bf16.msra.mxu0 0
    %2428 = vmatprep.subr.bf16.mxu0 0
    %2429 = vmatpush1.bf16.msra.mxu0 0
    %2430 = vmatprep.subr.bf16.mxu0 0
    %2431 = vmatpush1.bf16.msra.mxu0 0
    %2432 = vmatprep.subr.bf16.mxu0 0
    %2433 = vmatpush1.bf16.msra.mxu0 0
    %2434 = vmatprep.subr.bf16.mxu0 0
    %2435 = vmatpush1.bf16.msra.mxu0 %v2416
    %2436 = vmatprep.subr.bf16.mxu0 0
    %2437 = vmatpush1.bf16.msra.mxu0 %v2414
    %2438 = vmatprep.subr.bf16.mxu0 0
    %2439 = vmatpush2.bf16.msra.mxu0 0
    %2440 = vmatprep.subr.bf16.mxu0 0
    %2441 = vmatpush2.bf16.msra.mxu0 0
    %2442 = vmatprep.subr.bf16.mxu0 0
    %2443 = vmatpush2.bf16.msra.mxu0 0
    %2444 = vmatprep.subr.bf16.mxu0 0
    %2445 = vmatpush2.bf16.msra.mxu0 0
    %2446 = vmatprep.subr.bf16.mxu0 0
    %2447 = vmatpush2.bf16.msra.mxu0 0
    %2448 = vmatprep.subr.bf16.mxu0 0
    %2449 = vmatpush2.bf16.msra.mxu0 0
    %2450 = vmatprep.subr.bf16.mxu0 0
    %2451 = vmatpush2.bf16.msra.mxu0 0
    %2452 = vmatprep.subr.bf16.mxu0 0
    %2453 = vmatpush2.bf16.msra.mxu0 0
    %2454 = vmatprep.mubr.bf16.mxu0 0
    %2455 = vmatmul.mubr.bf16.gmra.mxu0 %v2420
    %v2456 = vpop.f32.mrf.mxu0
    %v2457 = vadd.f32 0.0, %v2456
    %v2458 = vpop.f32.mrf.mxu0
    %v2459 = vpop.f32.mrf.mxu0
    %v2460 = vpop.f32.mrf.mxu0
    %2461 = vdwg.mxu0
    %2463 = vrot.lane.b32.xlu0 %v2457, 64
    %v2464 = vpop.permute.xlu0 %2463
    %v2466 = vsel %vm492, %v2334, %v2464
    %v2467 = vpack.c.bf16 %v2466, %v2466
    %v2468 = vld [vmem:[#allocation4 + $0x140] sm:$0xf]
    %v2469 = vld [vmem:[#allocation4 + $0x144] sm:$0xf]
    %v2470 = vld [vmem:[#allocation4 + $0x148] sm:$0xf]
    %v2471 = vld [vmem:[#allocation4 + $0x14c] sm:$0xf]
    %v2472 = vld [vmem:[#allocation4 + $0x150] sm:$0xf]
    %v2473 = vld [vmem:[#allocation4 + $0x154] sm:$0xf]
    %v2474 = vld [vmem:[#allocation4 + $0x158] sm:$0xf]
    %v2475 = vld [vmem:[#allocation4 + $0x15c] sm:$0xf]
    %v2476 = vld [vmem:[#allocation4 + $0x160] sm:$0xf]
    %v2477 = vld [vmem:[#allocation4 + $0x164] sm:$0xf]
    %v2478 = vld [vmem:[#allocation4 + $0x168] sm:$0xf]
    %v2479 = vld [vmem:[#allocation4 + $0x16c] sm:$0xf]
    %v2480 = vld [vmem:[#allocation4 + $0x170] sm:$0xf]
    %v2481 = vld [vmem:[#allocation4 + $0x174] sm:$0xf]
    %v2482 = vld [vmem:[#allocation4 + $0x178] sm:$0xf]
    %v2483 = vld [vmem:[#allocation4 + $0x17c] sm:$0xf]
    %v2484 = vld [vmem:[%s4 + $0x21] ss:$0 sm:$0xff]
    %v2501 = vunpack.c.l.b16 %v2468
    %v2502 = vunpack.c.l.b16 %v2469
    %v2503 = vunpack.c.l.b16 %v2470
    %v2504 = vunpack.c.l.b16 %v2471
    %v2505 = vunpack.c.l.b16 %v2472
    %v2506 = vunpack.c.l.b16 %v2473
    %v2507 = vunpack.c.l.b16 %v2474
    %v2508 = vunpack.c.l.b16 %v2475
    %v2509 = vunpack.c.l.b16 %v2476
    %v2510 = vunpack.c.l.b16 %v2477
    %v2511 = vunpack.c.l.b16 %v2478
    %v2512 = vunpack.c.l.b16 %v2479
    %v2513 = vunpack.c.l.b16 %v2480
    %v2514 = vunpack.c.l.b16 %v2481
    %v2515 = vunpack.c.l.b16 %v2482
    %v2516 = vunpack.c.l.b16 %v2483
    %v2517 = vpack.c.b16 %v2502, %v2501
    %v2518 = vpack.c.b16 %v2504, %v2503
    %v2519 = vpack.c.b16 %v2506, %v2505
    %v2520 = vpack.c.b16 %v2508, %v2507
    %v2521 = vpack.c.b16 %v2510, %v2509
    %v2522 = vpack.c.b16 %v2512, %v2511
    %v2523 = vpack.c.b16 %v2514, %v2513
    %v2524 = vpack.c.b16 %v2516, %v2515
    %2533 = vmatprep.subr.bf16.mxu0 0
    %2534 = vmatpush1.bf16.msra.mxu0 %v2524
    %2535 = vmatprep.subr.bf16.mxu0 0
    %2536 = vmatpush1.bf16.msra.mxu0 %v2523
    %2537 = vmatprep.subr.bf16.mxu0 0
    %2538 = vmatpush1.bf16.msra.mxu0 %v2522
    %2539 = vmatprep.subr.bf16.mxu0 0
    %2540 = vmatpush1.bf16.msra.mxu0 %v2521
    %2541 = vmatprep.subr.bf16.mxu0 0
    %2542 = vmatpush1.bf16.msra.mxu0 %v2520
    %2543 = vmatprep.subr.bf16.mxu0 0
    %2544 = vmatpush1.bf16.msra.mxu0 %v2519
    %2545 = vmatprep.subr.bf16.mxu0 0
    %2546 = vmatpush1.bf16.msra.mxu0 %v2518
    %2547 = vmatprep.subr.bf16.mxu0 0
    %2548 = vmatpush1.bf16.msra.mxu0 %v2517
    %2549 = vmatprep.subr.bf16.mxu0 0
    %2550 = vmatpush2.bf16.msra.mxu0 0
    %2551 = vmatprep.subr.bf16.mxu0 0
    %2552 = vmatpush2.bf16.msra.mxu0 0
    %2553 = vmatprep.subr.bf16.mxu0 0
    %2554 = vmatpush2.bf16.msra.mxu0 0
    %2555 = vmatprep.subr.bf16.mxu0 0
    %2556 = vmatpush2.bf16.msra.mxu0 0
    %2557 = vmatprep.subr.bf16.mxu0 0
    %2558 = vmatpush2.bf16.msra.mxu0 0
    %2559 = vmatprep.subr.bf16.mxu0 0
    %2560 = vmatpush2.bf16.msra.mxu0 0
    %2561 = vmatprep.subr.bf16.mxu0 0
    %2562 = vmatpush2.bf16.msra.mxu0 0
    %2563 = vmatprep.subr.bf16.mxu0 0
    %2564 = vmatpush2.bf16.msra.mxu0 0
    %2565 = vmatprep.mubr.bf16.mxu0 0
    %2566 = vmatmul.mubr.bf16.gmra.mxu0 %v2467
    %v2567 = vpop.f32.mrf.mxu0
    %v2568 = vadd.f32 %v2484, %v2567
    %v2569 = vpop.f32.mrf.mxu0
    %v2570 = vpop.f32.mrf.mxu0
    %v2571 = vpop.f32.mrf.mxu0
    %2572 = vdwg.mxu0
    %v2573 = vadd.f32 %v2222, %v2568
    %v2574 = vld [vmem:[%s4 + $0x22] ss:$0 sm:$0xff]
    %v2575 = vld [vmem:[%s4 + $0x23] ss:$0 sm:$0xff]
    %vm2576 = vcmask 1041408
    %v2577 = vsel %vm2576, %v2573, 0.0
    %2578 = vadd.xlane.f32.xlu0 %v2577
    %v2579 = vpop.xlane.xlu0 %2578
    %v2580 = vmul.f32 %v2579, %v1006
    %v2581 = vsub.f32 %v2573, %v2580
    %v2582 = vmul.f32 %v2581, %v2581
    %v2583 = vsel %vm2576, %v2582, 0.0
    %2584 = vadd.xlane.f32.xlu0 %v2583
    %v2585 = vpop.xlane.xlu0 %2584
    %v2586 = vmul.f32 %v2585, %v1006
    %v2587 = vadd.f32 %v2586, 1e-12
    %v2588 = vrsqrt.pop %v2587
    %v2589 = vmul.f32 %v2581, %v2588
    %v2590 = vmul.f32 %v2589, %v2574
    %v2591 = vadd.f32 %v2590, %v2575
    %v2592 = vpack.c.bf16 %v2591, %v2591
    %v2593 = vld [vmem:[#allocation2 + $0x300] sm:$0xff]
    %v2594 = vld [vmem:[#allocation2 + $0x308] sm:$0xff]
    %v2595 = vld [vmem:[#allocation2 + $0x310] sm:$0xff]
    %v2596 = vld [vmem:[#allocation2 + $0x318] sm:$0xff]
    %v2597 = vld [vmem:[#allocation2 + $0x320] sm:$0xff]
    %v2598 = vld [vmem:[#allocation2 + $0x328] sm:$0xff]
    %v2599 = vld [vmem:[#allocation2 + $0x330] sm:$0xff]
    %v2600 = vld [vmem:[#allocation2 + $0x338] sm:$0xff]
    %v2601 = vld [vmem:[#allocation2 + $0x340] sm:$0xff]
    %v2602 = vld [vmem:[#allocation2 + $0x348] sm:$0xff]
    %v2603 = vld [vmem:[#allocation2 + $0x350] sm:$0xff]
    %v2604 = vld [vmem:[#allocation2 + $0x358] sm:$0xff]
    %v2605 = vld [vmem:[#allocation2 + $0x360] sm:$0xff]
    %v2606 = vld [vmem:[#allocation2 + $0x368] sm:$0xff]
    %v2607 = vld [vmem:[#allocation2 + $0x370] sm:$0xff]
    %v2608 = vld [vmem:[#allocation2 + $0x378] sm:$0xff]
    %v2609 = vld [vmem:[#allocation2 + $0x380] sm:$0xff]
    %v2610 = vld [vmem:[#allocation2 + $0x388] sm:$0xff]
    %v2611 = vld [vmem:[#allocation2 + $0x390] sm:$0xff]
    %v2612 = vld [vmem:[#allocation2 + $0x398] sm:$0xff]
    %v2613 = vld [vmem:[#allocation2 + $0x3a0] sm:$0xff]
    %v2614 = vld [vmem:[#allocation2 + $0x3a8] sm:$0xff]
    %v2615 = vld [vmem:[#allocation2 + $0x3b0] sm:$0xff]
    %v2616 = vld [vmem:[#allocation2 + $0x3b8] sm:$0xff]
    %v2617 = vld [vmem:[#allocation2 + $0x3c0] sm:$0xff]
    %v2618 = vld [vmem:[#allocation2 + $0x3c8] sm:$0xff]
    %v2619 = vld [vmem:[#allocation2 + $0x3d0] sm:$0xff]
    %v2620 = vld [vmem:[#allocation2 + $0x3d8] sm:$0xff]
    %v2621 = vld [vmem:[#allocation2 + $0x3e0] sm:$0xff]
    %v2622 = vld [vmem:[#allocation2 + $0x3e8] sm:$0xff]
    %v2623 = vld [vmem:[#allocation2 + $0x3f0] sm:$0xff]
    %v2624 = vld [vmem:[#allocation2 + $0x3f8] sm:$0xff]
    %s2625 = scalar_lea.vmem %s4, 36
    %v2626 = vld [vmem:[%s2625] ss:$8 sm:$0xf]
    %v2628 = vlaneseq
    %v2629 = vshrl.u32 %v2628, 7
    %v2630 = vsub.s32 0, %v2629
    %v2631 = vrot.slane %v2626, %v2630
    %v2632 = vlaneseq
    %v2633 = vshrl.u32 %v2632, 7
    %v2634 = vsub.s32 1, %v2633
    %v2635 = vrot.slane %v2626, %v2634
    %v2636 = vlaneseq
    %v2637 = vshrl.u32 %v2636, 7
    %v2638 = vsub.s32 2, %v2637
    %v2639 = vrot.slane %v2626, %v2638
    %v2640 = vlaneseq
    %v2641 = vshrl.u32 %v2640, 7
    %v2642 = vsub.s32 3, %v2641
    %v2643 = vrot.slane %v2626, %v2642
    %v2680 = vunpack.c.l.b16 %v2593
    %v2681 = vunpack.c.h.b16 %v2593
    %v2682 = vunpack.c.l.b16 %v2594
    %v2683 = vunpack.c.h.b16 %v2594
    %v2684 = vunpack.c.l.b16 %v2595
    %v2685 = vunpack.c.h.b16 %v2595
    %v2686 = vunpack.c.l.b16 %v2596
    %v2687 = vunpack.c.h.b16 %v2596
    %v2688 = vunpack.c.l.b16 %v2597
    %v2689 = vunpack.c.h.b16 %v2597
    %v2690 = vunpack.c.l.b16 %v2598
    %v2691 = vunpack.c.h.b16 %v2598
    %v2692 = vunpack.c.l.b16 %v2599
    %v2693 = vunpack.c.h.b16 %v2599
    %v2694 = vunpack.c.l.b16 %v2600
    %v2695 = vunpack.c.h.b16 %v2600
    %v2696 = vunpack.c.l.b16 %v2601
    %v2697 = vunpack.c.h.b16 %v2601
    %v2698 = vunpack.c.l.b16 %v2602
    %v2699 = vunpack.c.h.b16 %v2602
    %v2700 = vunpack.c.l.b16 %v2603
    %v2701 = vunpack.c.h.b16 %v2603
    %v2702 = vunpack.c.l.b16 %v2604
    %v2703 = vunpack.c.h.b16 %v2604
    %v2704 = vunpack.c.l.b16 %v2605
    %v2705 = vunpack.c.h.b16 %v2605
    %v2706 = vunpack.c.l.b16 %v2606
    %v2707 = vunpack.c.h.b16 %v2606
    %v2708 = vunpack.c.l.b16 %v2607
    %v2709 = vunpack.c.h.b16 %v2607
    %v2710 = vunpack.c.l.b16 %v2608
    %v2711 = vunpack.c.h.b16 %v2608
    %v2712 = vunpack.c.l.b16 %v2609
    %v2713 = vunpack.c.h.b16 %v2609
    %v2714 = vunpack.c.l.b16 %v2610
    %v2715 = vunpack.c.h.b16 %v2610
    %v2716 = vunpack.c.l.b16 %v2611
    %v2717 = vunpack.c.h.b16 %v2611
    %v2718 = vunpack.c.l.b16 %v2612
    %v2719 = vunpack.c.h.b16 %v2612
    %v2720 = vunpack.c.l.b16 %v2613
    %v2721 = vunpack.c.h.b16 %v2613
    %v2722 = vunpack.c.l.b16 %v2614
    %v2723 = vunpack.c.h.b16 %v2614
    %v2724 = vunpack.c.l.b16 %v2615
    %v2725 = vunpack.c.h.b16 %v2615
    %v2726 = vunpack.c.l.b16 %v2616
    %v2727 = vunpack.c.h.b16 %v2616
    %v2728 = vunpack.c.l.b16 %v2617
    %v2729 = vunpack.c.h.b16 %v2617
    %v2730 = vunpack.c.l.b16 %v2618
    %v2731 = vunpack.c.h.b16 %v2618
    %v2732 = vunpack.c.l.b16 %v2619
    %v2733 = vunpack.c.h.b16 %v2619
    %v2734 = vunpack.c.l.b16 %v2620
    %v2735 = vunpack.c.h.b16 %v2620
    %v2736 = vunpack.c.l.b16 %v2621
    %v2737 = vunpack.c.h.b16 %v2621
    %v2738 = vunpack.c.l.b16 %v2622
    %v2739 = vunpack.c.h.b16 %v2622
    %v2740 = vunpack.c.l.b16 %v2623
    %v2741 = vunpack.c.h.b16 %v2623
    %v2742 = vunpack.c.l.b16 %v2624
    %v2743 = vunpack.c.h.b16 %v2624
    %v2744 = vpack.c.b16 %v2684, %v2680
    %v2745 = vpack.c.b16 %v2685, %v2681
    %v2746 = vpack.c.b16 %v2686, %v2682
    %v2747 = vpack.c.b16 %v2687, %v2683
    %v2748 = vpack.c.b16 %v2692, %v2688
    %v2749 = vpack.c.b16 %v2693, %v2689
    %v2750 = vpack.c.b16 %v2694, %v2690
    %v2751 = vpack.c.b16 %v2695, %v2691
    %v2752 = vpack.c.b16 %v2700, %v2696
    %v2753 = vpack.c.b16 %v2701, %v2697
    %v2754 = vpack.c.b16 %v2702, %v2698
    %v2755 = vpack.c.b16 %v2703, %v2699
    %v2756 = vpack.c.b16 %v2708, %v2704
    %v2757 = vpack.c.b16 %v2709, %v2705
    %v2758 = vpack.c.b16 %v2710, %v2706
    %v2759 = vpack.c.b16 %v2711, %v2707
    %v2760 = vpack.c.b16 %v2716, %v2712
    %v2761 = vpack.c.b16 %v2717, %v2713
    %v2762 = vpack.c.b16 %v2718, %v2714
    %v2763 = vpack.c.b16 %v2719, %v2715
    %v2764 = vpack.c.b16 %v2724, %v2720
    %v2765 = vpack.c.b16 %v2725, %v2721
    %v2766 = vpack.c.b16 %v2726, %v2722
    %v2767 = vpack.c.b16 %v2727, %v2723
    %v2768 = vpack.c.b16 %v2732, %v2728
    %v2769 = vpack.c.b16 %v2733, %v2729
    %v2770 = vpack.c.b16 %v2734, %v2730
    %v2771 = vpack.c.b16 %v2735, %v2731
    %v2772 = vpack.c.b16 %v2740, %v2736
    %v2773 = vpack.c.b16 %v2741, %v2737
    %v2774 = vpack.c.b16 %v2742, %v2738
    %v2775 = vpack.c.b16 %v2743, %v2739
    %2808 = vmatprep.subr.bf16.mxu0 %v2773
    %2809 = vmatpush1.bf16.msra.mxu0 %v2772
    %2810 = vmatprep.subr.bf16.mxu0 %v2769
    %2811 = vmatpush1.bf16.msra.mxu0 %v2768
    %2812 = vmatprep.subr.bf16.mxu0 %v2765
    %2813 = vmatpush1.bf16.msra.mxu0 %v2764
    %2814 = vmatprep.subr.bf16.mxu0 %v2761
    %2815 = vmatpush1.bf16.msra.mxu0 %v2760
    %2816 = vmatprep.subr.bf16.mxu0 %v2757
    %2817 = vmatpush1.bf16.msra.mxu0 %v2756
    %2818 = vmatprep.subr.bf16.mxu0 %v2753
    %2819 = vmatpush1.bf16.msra.mxu0 %v2752
    %2820 = vmatprep.subr.bf16.mxu0 %v2749
    %2821 = vmatpush1.bf16.msra.mxu0 %v2748
    %2822 = vmatprep.subr.bf16.mxu0 %v2745
    %2823 = vmatpush1.bf16.msra.mxu0 %v2744
    %2824 = vmatprep.subr.bf16.mxu0 0
    %2825 = vmatpush2.bf16.msra.mxu0 0
    %2826 = vmatprep.subr.bf16.mxu0 0
    %2827 = vmatpush2.bf16.msra.mxu0 0
    %2828 = vmatprep.subr.bf16.mxu0 0
    %2829 = vmatpush2.bf16.msra.mxu0 0
    %2830 = vmatprep.subr.bf16.mxu0 0
    %2831 = vmatpush2.bf16.msra.mxu0 0
    %2832 = vmatprep.subr.bf16.mxu0 0
    %2833 = vmatpush2.bf16.msra.mxu0 0
    %2834 = vmatprep.subr.bf16.mxu0 0
    %2835 = vmatpush2.bf16.msra.mxu0 0
    %2836 = vmatprep.subr.bf16.mxu0 0
    %2837 = vmatpush2.bf16.msra.mxu0 0
    %2838 = vmatprep.subr.bf16.mxu0 0
    %2839 = vmatpush2.bf16.msra.mxu0 0
    %2840 = vmatprep.mubr.bf16.mxu0 0
    %2841 = vmatmul.mubr.bf16.gmra.mxu0 %v2592
    %v2842 = vpop.f32.mrf.mxu0
    %v2843 = vadd.f32 %v2631, %v2842
    %v2844 = vpop.f32.mrf.mxu0
    %v2845 = vadd.f32 %v2635, %v2844
    %v2846 = vpop.f32.mrf.mxu0
    %v2847 = vpop.f32.mrf.mxu0
    %2848 = vdwg.mxu0
    %2849 = vmatprep.subr.bf16.mxu0 %v2775
    %2850 = vmatpush1.bf16.msra.mxu0 %v2774
    %2851 = vmatprep.subr.bf16.mxu0 %v2771
    %2852 = vmatpush1.bf16.msra.mxu0 %v2770
    %2853 = vmatprep.subr.bf16.mxu0 %v2767
    %2854 = vmatpush1.bf16.msra.mxu0 %v2766
    %2855 = vmatprep.subr.bf16.mxu0 %v2763
    %2856 = vmatpush1.bf16.msra.mxu0 %v2762
    %2857 = vmatprep.subr.bf16.mxu0 %v2759
    %2858 = vmatpush1.bf16.msra.mxu0 %v2758
    %2859 = vmatprep.subr.bf16.mxu0 %v2755
    %2860 = vmatpush1.bf16.msra.mxu0 %v2754
    %2861 = vmatprep.subr.bf16.mxu0 %v2751
    %2862 = vmatpush1.bf16.msra.mxu0 %v2750
    %2863 = vmatprep.subr.bf16.mxu0 %v2747
    %2864 = vmatpush1.bf16.msra.mxu0 %v2746
    %2865 = vmatprep.subr.bf16.mxu0 0
    %2866 = vmatpush2.bf16.msra.mxu0 0
    %2867 = vmatprep.subr.bf16.mxu0 0
    %2868 = vmatpush2.bf16.msra.mxu0 0
    %2869 = vmatprep.subr.bf16.mxu0 0
    %2870 = vmatpush2.bf16.msra.mxu0 0
    %2871 = vmatprep.subr.bf16.mxu0 0
    %2872 = vmatpush2.bf16.msra.mxu0 0
    %2873 = vmatprep.subr.bf16.mxu0 0
    %2874 = vmatpush2.bf16.msra.mxu0 0
    %2875 = vmatprep.subr.bf16.mxu0 0
    %2876 = vmatpush2.bf16.msra.mxu0 0
    %2877 = vmatprep.subr.bf16.mxu0 0
    %2878 = vmatpush2.bf16.msra.mxu0 0
    %2879 = vmatprep.subr.bf16.mxu0 0
    %2880 = vmatpush2.bf16.msra.mxu0 0
    %2881 = vmatprep.mubr.bf16.mxu0 0
    %2882 = vmatmul.mubr.bf16.gmra.mxu0 %v2592
    %v2883 = vpop.f32.mrf.mxu0
    %v2884 = vadd.f32 %v2639, %v2883
    %v2885 = vpop.f32.mrf.mxu0
    %v2886 = vadd.f32 %v2643, %v2885
    %v2887 = vpop.f32.mrf.mxu0
    %v2888 = vpop.f32.mrf.mxu0
    %2889 = vdwg.mxu0
    %v2890 = vmul.f32 %v2843, %v2843
    %v2891 = vmul.f32 %v2845, %v2845
    %v2892 = vmul.f32 %v2884, %v2884
    %v2893 = vmul.f32 %v2886, %v2886
    %v2894 = vmul.f32 %v2843, %v2890
    %v2895 = vmul.f32 %v2845, %v2891
    %v2896 = vmul.f32 %v2884, %v2892
    %v2897 = vmul.f32 %v2886, %v2893
    %v2898 = vmul.f32 %v2894, 0.044715
    %v2899 = vmul.f32 %v2895, 0.044715
    %v2900 = vmul.f32 %v2896, 0.044715
    %v2901 = vmul.f32 %v2897, 0.044715
    %v2902 = vadd.f32 %v2843, %v2898
    %v2903 = vadd.f32 %v2845, %v2899
    %v2904 = vadd.f32 %v2884, %v2900
    %v2905 = vadd.f32 %v2886, %v2901
    %v2906 = vmul.f32 %v2902, 0.7978846
    %v2907 = vmul.f32 %v2903, 0.7978846
    %v2908 = vmul.f32 %v2904, 0.7978846
    %v2909 = vmul.f32 %v2905, 0.7978846
    %v2910 = vtanh.pop %v2906
    %v2911 = vtanh.pop %v2907
    %v2912 = vtanh.pop %v2908
    %v2913 = vtanh.pop %v2909
    %v2914 = vadd.f32 %v2910, 1.0
    %v2915 = vadd.f32 %v2911, 1.0
    %v2916 = vadd.f32 %v2912, 1.0
    %v2917 = vadd.f32 %v2913, 1.0
    %v2918 = vmul.f32 %v2914, 0.5
    %v2919 = vmul.f32 %v2915, 0.5
    %v2920 = vmul.f32 %v2916, 0.5
    %v2921 = vmul.f32 %v2917, 0.5
    %v2922 = vmul.f32 %v2843, %v2918
    %v2923 = vmul.f32 %v2845, %v2919
    %v2924 = vmul.f32 %v2884, %v2920
    %v2925 = vmul.f32 %v2886, %v2921
    %v2926 = vpack.c.bf16 %v2922, %v2922
    %v2927 = vpack.c.bf16 %v2923, %v2923
    %v2928 = vpack.c.bf16 %v2924, %v2924
    %v2929 = vpack.c.bf16 %v2925, %v2925
    %v2930 = vld [vmem:[#allocation4 + $0x180] sm:$0xf]
    %v2931 = vld [vmem:[#allocation4 + $0x184] sm:$0xf]
    %v2932 = vld [vmem:[#allocation4 + $0x188] sm:$0xf]
    %v2933 = vld [vmem:[#allocation4 + $0x18c] sm:$0xf]
    %v2934 = vld [vmem:[#allocation4 + $0x190] sm:$0xf]
    %v2935 = vld [vmem:[#allocation4 + $0x194] sm:$0xf]
    %v2936 = vld [vmem:[#allocation4 + $0x198] sm:$0xf]
    %v2937 = vld [vmem:[#allocation4 + $0x19c] sm:$0xf]
    %v2938 = vld [vmem:[#allocation4 + $0x1a0] sm:$0xf]
    %v2939 = vld [vmem:[#allocation4 + $0x1a4] sm:$0xf]
    %v2940 = vld [vmem:[#allocation4 + $0x1a8] sm:$0xf]
    %v2941 = vld [vmem:[#allocation4 + $0x1ac] sm:$0xf]
    %v2942 = vld [vmem:[#allocation4 + $0x1b0] sm:$0xf]
    %v2943 = vld [vmem:[#allocation4 + $0x1b4] sm:$0xf]
    %v2944 = vld [vmem:[#allocation4 + $0x1b8] sm:$0xf]
    %v2945 = vld [vmem:[#allocation4 + $0x1bc] sm:$0xf]
    %v2946 = vld [vmem:[#allocation4 + $0x1c0] sm:$0xf]
    %v2947 = vld [vmem:[#allocation4 + $0x1c4] sm:$0xf]
    %v2948 = vld [vmem:[#allocation4 + $0x1c8] sm:$0xf]
    %v2949 = vld [vmem:[#allocation4 + $0x1cc] sm:$0xf]
    %v2950 = vld [vmem:[#allocation4 + $0x1d0] sm:$0xf]
    %v2951 = vld [vmem:[#allocation4 + $0x1d4] sm:$0xf]
    %v2952 = vld [vmem:[#allocation4 + $0x1d8] sm:$0xf]
    %v2953 = vld [vmem:[#allocation4 + $0x1dc] sm:$0xf]
    %v2954 = vld [vmem:[#allocation4 + $0x1e0] sm:$0xf]
    %v2955 = vld [vmem:[#allocation4 + $0x1e4] sm:$0xf]
    %v2956 = vld [vmem:[#allocation4 + $0x1e8] sm:$0xf]
    %v2957 = vld [vmem:[#allocation4 + $0x1ec] sm:$0xf]
    %v2958 = vld [vmem:[#allocation4 + $0x1f0] sm:$0xf]
    %v2959 = vld [vmem:[#allocation4 + $0x1f4] sm:$0xf]
    %v2960 = vld [vmem:[#allocation4 + $0x1f8] sm:$0xf]
    %v2961 = vld [vmem:[#allocation4 + $0x1fc] sm:$0xf]
    %v2962 = vld [vmem:[#allocation4 + $0x200] sm:$0xf]
    %v2963 = vld [vmem:[#allocation4 + $0x204] sm:$0xf]
    %v2964 = vld [vmem:[#allocation4 + $0x208] sm:$0xf]
    %v2965 = vld [vmem:[#allocation4 + $0x20c] sm:$0xf]
    %v2966 = vld [vmem:[#allocation4 + $0x210] sm:$0xf]
    %v2967 = vld [vmem:[#allocation4 + $0x214] sm:$0xf]
    %v2968 = vld [vmem:[#allocation4 + $0x218] sm:$0xf]
    %v2969 = vld [vmem:[#allocation4 + $0x21c] sm:$0xf]
    %v2970 = vld [vmem:[#allocation4 + $0x220] sm:$0xf]
    %v2971 = vld [vmem:[#allocation4 + $0x224] sm:$0xf]
    %v2972 = vld [vmem:[#allocation4 + $0x228] sm:$0xf]
    %v2973 = vld [vmem:[#allocation4 + $0x22c] sm:$0xf]
    %v2974 = vld [vmem:[#allocation4 + $0x230] sm:$0xf]
    %v2975 = vld [vmem:[#allocation4 + $0x234] sm:$0xf]
    %v2976 = vld [vmem:[#allocation4 + $0x238] sm:$0xf]
    %v2977 = vld [vmem:[#allocation4 + $0x23c] sm:$0xf]
    %v2978 = vld [vmem:[#allocation4 + $0x240] sm:$0xf]
    %v2979 = vld [vmem:[#allocation4 + $0x244] sm:$0xf]
    %v2980 = vld [vmem:[#allocation4 + $0x248] sm:$0xf]
    %v2981 = vld [vmem:[#allocation4 + $0x24c] sm:$0xf]
    %v2982 = vld [vmem:[#allocation4 + $0x250] sm:$0xf]
    %v2983 = vld [vmem:[#allocation4 + $0x254] sm:$0xf]
    %v2984 = vld [vmem:[#allocation4 + $0x258] sm:$0xf]
    %v2985 = vld [vmem:[#allocation4 + $0x25c] sm:$0xf]
    %v2986 = vld [vmem:[#allocation4 + $0x260] sm:$0xf]
    %v2987 = vld [vmem:[#allocation4 + $0x264] sm:$0xf]
    %v2988 = vld [vmem:[#allocation4 + $0x268] sm:$0xf]
    %v2989 = vld [vmem:[#allocation4 + $0x26c] sm:$0xf]
    %v2990 = vld [vmem:[#allocation4 + $0x270] sm:$0xf]
    %v2991 = vld [vmem:[#allocation4 + $0x274] sm:$0xf]
    %v2992 = vld [vmem:[#allocation4 + $0x278] sm:$0xf]
    %v2993 = vld [vmem:[#allocation4 + $0x27c] sm:$0xf]
    %v2994 = vld [vmem:[%s4 + $0x25] ss:$0 sm:$0xff]
    %v3059 = vunpack.c.l.b16 %v2930
    %v3060 = vunpack.c.l.b16 %v2931
    %v3061 = vunpack.c.l.b16 %v2932
    %v3062 = vunpack.c.l.b16 %v2933
    %v3063 = vunpack.c.l.b16 %v2934
    %v3064 = vunpack.c.l.b16 %v2935
    %v3065 = vunpack.c.l.b16 %v2936
    %v3066 = vunpack.c.l.b16 %v2937
    %v3067 = vunpack.c.l.b16 %v2938
    %v3068 = vunpack.c.l.b16 %v2939
    %v3069 = vunpack.c.l.b16 %v2940
    %v3070 = vunpack.c.l.b16 %v2941
    %v3071 = vunpack.c.l.b16 %v2942
    %v3072 = vunpack.c.l.b16 %v2943
    %v3073 = vunpack.c.l.b16 %v2944
    %v3074 = vunpack.c.l.b16 %v2945
    %v3075 = vunpack.c.l.b16 %v2946
    %v3076 = vunpack.c.l.b16 %v2947
    %v3077 = vunpack.c.l.b16 %v2948
    %v3078 = vunpack.c.l.b16 %v2949
    %v3079 = vunpack.c.l.b16 %v2950
    %v3080 = vunpack.c.l.b16 %v2951
    %v3081 = vunpack.c.l.b16 %v2952
    %v3082 = vunpack.c.l.b16 %v2953
    %v3083 = vunpack.c.l.b16 %v2954
    %v3084 = vunpack.c.l.b16 %v2955
    %v3085 = vunpack.c.l.b16 %v2956
    %v3086 = vunpack.c.l.b16 %v2957
    %v3087 = vunpack.c.l.b16 %v2958
    %v3088 = vunpack.c.l.b16 %v2959
    %v3089 = vunpack.c.l.b16 %v2960
    %v3090 = vunpack.c.l.b16 %v2961
    %v3091 = vunpack.c.l.b16 %v2962
    %v3092 = vunpack.c.l.b16 %v2963
    %v3093 = vunpack.c.l.b16 %v2964
    %v3094 = vunpack.c.l.b16 %v2965
    %v3095 = vunpack.c.l.b16 %v2966
    %v3096 = vunpack.c.l.b16 %v2967
    %v3097 = vunpack.c.l.b16 %v2968
    %v3098 = vunpack.c.l.b16 %v2969
    %v3099 = vunpack.c.l.b16 %v2970
    %v3100 = vunpack.c.l.b16 %v2971
    %v3101 = vunpack.c.l.b16 %v2972
    %v3102 = vunpack.c.l.b16 %v2973
    %v3103 = vunpack.c.l.b16 %v2974
    %v3104 = vunpack.c.l.b16 %v2975
    %v3105 = vunpack.c.l.b16 %v2976
    %v3106 = vunpack.c.l.b16 %v2977
    %v3107 = vunpack.c.l.b16 %v2978
    %v3108 = vunpack.c.l.b16 %v2979
    %v3109 = vunpack.c.l.b16 %v2980
    %v3110 = vunpack.c.l.b16 %v2981
    %v3111 = vunpack.c.l.b16 %v2982
    %v3112 = vunpack.c.l.b16 %v2983
    %v3113 = vunpack.c.l.b16 %v2984
    %v3114 = vunpack.c.l.b16 %v2985
    %v3115 = vunpack.c.l.b16 %v2986
    %v3116 = vunpack.c.l.b16 %v2987
    %v3117 = vunpack.c.l.b16 %v2988
    %v3118 = vunpack.c.l.b16 %v2989
    %v3119 = vunpack.c.l.b16 %v2990
    %v3120 = vunpack.c.l.b16 %v2991
    %v3121 = vunpack.c.l.b16 %v2992
    %v3122 = vunpack.c.l.b16 %v2993
    %v3123 = vpack.c.b16 %v3060, %v3059
    %v3124 = vpack.c.b16 %v3062, %v3061
    %v3125 = vpack.c.b16 %v3064, %v3063
    %v3126 = vpack.c.b16 %v3066, %v3065
    %v3127 = vpack.c.b16 %v3068, %v3067
    %v3128 = vpack.c.b16 %v3070, %v3069
    %v3129 = vpack.c.b16 %v3072, %v3071
    %v3130 = vpack.c.b16 %v3074, %v3073
    %v3131 = vpack.c.b16 %v3076, %v3075
    %v3132 = vpack.c.b16 %v3078, %v3077
    %v3133 = vpack.c.b16 %v3080, %v3079
    %v3134 = vpack.c.b16 %v3082, %v3081
    %v3135 = vpack.c.b16 %v3084, %v3083
    %v3136 = vpack.c.b16 %v3086, %v3085
    %v3137 = vpack.c.b16 %v3088, %v3087
    %v3138 = vpack.c.b16 %v3090, %v3089
    %v3139 = vpack.c.b16 %v3092, %v3091
    %v3140 = vpack.c.b16 %v3094, %v3093
    %v3141 = vpack.c.b16 %v3096, %v3095
    %v3142 = vpack.c.b16 %v3098, %v3097
    %v3143 = vpack.c.b16 %v3100, %v3099
    %v3144 = vpack.c.b16 %v3102, %v3101
    %v3145 = vpack.c.b16 %v3104, %v3103
    %v3146 = vpack.c.b16 %v3106, %v3105
    %v3147 = vpack.c.b16 %v3108, %v3107
    %v3148 = vpack.c.b16 %v3110, %v3109
    %v3149 = vpack.c.b16 %v3112, %v3111
    %v3150 = vpack.c.b16 %v3114, %v3113
    %v3151 = vpack.c.b16 %v3116, %v3115
    %v3152 = vpack.c.b16 %v3118, %v3117
    %v3153 = vpack.c.b16 %v3120, %v3119
    %v3154 = vpack.c.b16 %v3122, %v3121
    %3187 = vmatprep.subr.bf16.mxu0 0
    %3188 = vmatpush1.bf16.msra.mxu0 %v3130
    %3189 = vmatprep.subr.bf16.mxu0 0
    %3190 = vmatpush1.bf16.msra.mxu0 %v3129
    %3191 = vmatprep.subr.bf16.mxu0 0
    %3192 = vmatpush1.bf16.msra.mxu0 %v3128
    %3193 = vmatprep.subr.bf16.mxu0 0
    %3194 = vmatpush1.bf16.msra.mxu0 %v3127
    %3195 = vmatprep.subr.bf16.mxu0 0
    %3196 = vmatpush1.bf16.msra.mxu0 %v3126
    %3197 = vmatprep.subr.bf16.mxu0 0
    %3198 = vmatpush1.bf16.msra.mxu0 %v3125
    %3199 = vmatprep.subr.bf16.mxu0 0
    %3200 = vmatpush1.bf16.msra.mxu0 %v3124
    %3201 = vmatprep.subr.bf16.mxu0 0
    %3202 = vmatpush1.bf16.msra.mxu0 %v3123
    %3203 = vmatprep.subr.bf16.mxu0 0
    %3204 = vmatpush2.bf16.msra.mxu0 %v3138
    %3205 = vmatprep.subr.bf16.mxu0 0
    %3206 = vmatpush2.bf16.msra.mxu0 %v3137
    %3207 = vmatprep.subr.bf16.mxu0 0
    %3208 = vmatpush2.bf16.msra.mxu0 %v3136
    %3209 = vmatprep.subr.bf16.mxu0 0
    %3210 = vmatpush2.bf16.msra.mxu0 %v3135
    %3211 = vmatprep.subr.bf16.mxu0 0
    %3212 = vmatpush2.bf16.msra.mxu0 %v3134
    %3213 = vmatprep.subr.bf16.mxu0 0
    %3214 = vmatpush2.bf16.msra.mxu0 %v3133
    %3215 = vmatprep.subr.bf16.mxu0 0
    %3216 = vmatpush2.bf16.msra.mxu0 %v3132
    %3217 = vmatprep.subr.bf16.mxu0 0
    %3218 = vmatpush2.bf16.msra.mxu0 %v3131
    %3219 = vmatprep.mubr.bf16.mxu0 %v2927
    %3220 = vmatmul.mubr.bf16.gmra.mxu0 %v2926
    %v3221 = vpop.f32.mrf.mxu0
    %v3222 = vadd.f32 %v2994, %v3221
    %v3223 = vpop.f32.mrf.mxu0
    %v3224 = vpop.f32.mrf.mxu0
    %v3225 = vpop.f32.mrf.mxu0
    %3226 = vdwg.mxu0
    %3227 = vmatprep.subr.bf16.mxu0 0
    %3228 = vmatpush1.bf16.msra.mxu0 %v3146
    %3229 = vmatprep.subr.bf16.mxu0 0
    %3230 = vmatpush1.bf16.msra.mxu0 %v3145
    %3231 = vmatprep.subr.bf16.mxu0 0
    %3232 = vmatpush1.bf16.msra.mxu0 %v3144
    %3233 = vmatprep.subr.bf16.mxu0 0
    %3234 = vmatpush1.bf16.msra.mxu0 %v3143
    %3235 = vmatprep.subr.bf16.mxu0 0
    %3236 = vmatpush1.bf16.msra.mxu0 %v3142
    %3237 = vmatprep.subr.bf16.mxu0 0
    %3238 = vmatpush1.bf16.msra.mxu0 %v3141
    %3239 = vmatprep.subr.bf16.mxu0 0
    %3240 = vmatpush1.bf16.msra.mxu0 %v3140
    %3241 = vmatprep.subr.bf16.mxu0 0
    %3242 = vmatpush1.bf16.msra.mxu0 %v3139
    %3243 = vmatprep.subr.bf16.mxu0 0
    %3244 = vmatpush2.bf16.msra.mxu0 %v3154
    %3245 = vmatprep.subr.bf16.mxu0 0
    %3246 = vmatpush2.bf16.msra.mxu0 %v3153
    %3247 = vmatprep.subr.bf16.mxu0 0
    %3248 = vmatpush2.bf16.msra.mxu0 %v3152
    %3249 = vmatprep.subr.bf16.mxu0 0
    %3250 = vmatpush2.bf16.msra.mxu0 %v3151
    %3251 = vmatprep.subr.bf16.mxu0 0
    %3252 = vmatpush2.bf16.msra.mxu0 %v3150
    %3253 = vmatprep.subr.bf16.mxu0 0
    %3254 = vmatpush2.bf16.msra.mxu0 %v3149
    %3255 = vmatprep.subr.bf16.mxu0 0
    %3256 = vmatpush2.bf16.msra.mxu0 %v3148
    %3257 = vmatprep.subr.bf16.mxu0 0
    %3258 = vmatpush2.bf16.msra.mxu0 %v3147
    %3259 = vmatprep.mubr.bf16.mxu0 %v2929
    %3260 = vmatmul.mubr.bf16.gmra.mxu0 %v2928
    %v3261 = vpop.f32.mrf.mxu0
    %v3262 = vadd.f32 %v3222, %v3261
    %v3263 = vpop.f32.mrf.mxu0
    %v3264 = vpop.f32.mrf.mxu0
    %v3265 = vpop.f32.mrf.mxu0
    %3266 = vdwg.mxu0
    %v3267 = vadd.f32 %v2591, %v3262
    %v3268 = vld [vmem:[%s4 + $0x26] ss:$0 sm:$0xff]
    %v3269 = vld [vmem:[%s4 + $0x27] ss:$0 sm:$0xff]
    %v3270 = vsel %vm2576, %v3267, 0.0
    %3271 = vadd.xlane.f32.xlu0 %v3270
    %v3272 = vpop.xlane.xlu0 %3271
    %v3273 = vmul.f32 %v3272, %v1006
    %v3274 = vsub.f32 %v3267, %v3273
    %v3275 = vmul.f32 %v3274, %v3274
    %v3276 = vsel %vm2576, %v3275, 0.0
    %3277 = vadd.xlane.f32.xlu0 %v3276
    %v3278 = vpop.xlane.xlu0 %3277
    %v3279 = vmul.f32 %v3278, %v1006
    %v3280 = vadd.f32 %v3279, 1e-12
    %v3281 = vrsqrt.pop %v3280
    %v3282 = vmul.f32 %v3274, %v3281
    %v3283 = vmul.f32 %v3282, %v3268
    %v3284 = vadd.f32 %v3283, %v3269
    %v3285 = vpack.c.bf16 %v3284, %v3284
    %v3286 = vld [vmem:[#allocation4 + $0x280] sm:$0xf]
    %v3287 = vld [vmem:[#allocation4 + $0x284] sm:$0xf]
    %v3288 = vld [vmem:[#allocation4 + $0x288] sm:$0xf]
    %v3289 = vld [vmem:[#allocation4 + $0x28c] sm:$0xf]
    %v3290 = vld [vmem:[#allocation4 + $0x290] sm:$0xf]
    %v3291 = vld [vmem:[#allocation4 + $0x294] sm:$0xf]
    %v3292 = vld [vmem:[#allocation4 + $0x298] sm:$0xf]
    %v3293 = vld [vmem:[#allocation4 + $0x29c] sm:$0xf]
    %v3294 = vld [vmem:[#allocation4 + $0x2a0] sm:$0xf]
    %v3295 = vld [vmem:[#allocation4 + $0x2a4] sm:$0xf]
    %v3296 = vld [vmem:[#allocation4 + $0x2a8] sm:$0xf]
    %v3297 = vld [vmem:[#allocation4 + $0x2ac] sm:$0xf]
    %v3298 = vld [vmem:[#allocation4 + $0x2b0] sm:$0xf]
    %v3299 = vld [vmem:[#allocation4 + $0x2b4] sm:$0xf]
    %v3300 = vld [vmem:[#allocation4 + $0x2b8] sm:$0xf]
    %v3301 = vld [vmem:[#allocation4 + $0x2bc] sm:$0xf]
    %v3302 = vld [vmem:[%s4 + $0x40] ss:$0 sm:$0xff]
    %v3319 = vunpack.c.l.b16 %v3286
    %v3320 = vunpack.c.l.b16 %v3287
    %v3321 = vunpack.c.l.b16 %v3288
    %v3322 = vunpack.c.l.b16 %v3289
    %v3323 = vunpack.c.l.b16 %v3290
    %v3324 = vunpack.c.l.b16 %v3291
    %v3325 = vunpack.c.l.b16 %v3292
    %v3326 = vunpack.c.l.b16 %v3293
    %v3327 = vunpack.c.l.b16 %v3294
    %v3328 = vunpack.c.l.b16 %v3295
    %v3329 = vunpack.c.l.b16 %v3296
    %v3330 = vunpack.c.l.b16 %v3297
    %v3331 = vunpack.c.l.b16 %v3298
    %v3332 = vunpack.c.l.b16 %v3299
    %v3333 = vunpack.c.l.b16 %v3300
    %v3334 = vunpack.c.l.b16 %v3301
    %v3335 = vpack.c.b16 %v3320, %v3319
    %v3336 = vpack.c.b16 %v3322, %v3321
    %v3337 = vpack.c.b16 %v3324, %v3323
    %v3338 = vpack.c.b16 %v3326, %v3325
    %v3339 = vpack.c.b16 %v3328, %v3327
    %v3340 = vpack.c.b16 %v3330, %v3329
    %v3341 = vpack.c.b16 %v3332, %v3331
    %v3342 = vpack.c.b16 %v3334, %v3333
    %3351 = vmatprep.subr.bf16.mxu0 0
    %3352 = vmatpush1.bf16.msra.mxu0 %v3342
    %3353 = vmatprep.subr.bf16.mxu0 0
    %3354 = vmatpush1.bf16.msra.mxu0 %v3341
    %3355 = vmatprep.subr.bf16.mxu0 0
    %3356 = vmatpush1.bf16.msra.mxu0 %v3340
    %3357 = vmatprep.subr.bf16.mxu0 0
    %3358 = vmatpush1.bf16.msra.mxu0 %v3339
    %3359 = vmatprep.subr.bf16.mxu0 0
    %3360 = vmatpush1.bf16.msra.mxu0 %v3338
    %3361 = vmatprep.subr.bf16.mxu0 0
    %3362 = vmatpush1.bf16.msra.mxu0 %v3337
    %3363 = vmatprep.subr.bf16.mxu0 0
    %3364 = vmatpush1.bf16.msra.mxu0 %v3336
    %3365 = vmatprep.subr.bf16.mxu0 0
    %3366 = vmatpush1.bf16.msra.mxu0 %v3335
    %3367 = vmatprep.subr.bf16.mxu0 0
    %3368 = vmatpush2.bf16.msra.mxu0 0
    %3369 = vmatprep.subr.bf16.mxu0 0
    %3370 = vmatpush2.bf16.msra.mxu0 0
    %3371 = vmatprep.subr.bf16.mxu0 0
    %3372 = vmatpush2.bf16.msra.mxu0 0
    %3373 = vmatprep.subr.bf16.mxu0 0
    %3374 = vmatpush2.bf16.msra.mxu0 0
    %3375 = vmatprep.subr.bf16.mxu0 0
    %3376 = vmatpush2.bf16.msra.mxu0 0
    %3377 = vmatprep.subr.bf16.mxu0 0
    %3378 = vmatpush2.bf16.msra.mxu0 0
    %3379 = vmatprep.subr.bf16.mxu0 0
    %3380 = vmatpush2.bf16.msra.mxu0 0
    %3381 = vmatprep.subr.bf16.mxu0 0
    %3382 = vmatpush2.bf16.msra.mxu0 0
    %3383 = vmatprep.mubr.bf16.mxu0 0
    %3384 = vmatmul.mubr.bf16.gmra.mxu0 %v3285
    %v3385 = vpop.f32.mrf.mxu0
    %v3386 = vadd.f32 %v3302, %v3385
    %v3387 = vpop.f32.mrf.mxu0
    %v3388 = vpop.f32.mrf.mxu0
    %v3389 = vpop.f32.mrf.mxu0
    %3390 = vdwg.mxu0
    %v3391 = vmul.f32 %v3386, %v3386
    %v3392 = vmul.f32 %v3386, %v3391
    %v3393 = vmul.f32 %v3392, 0.044715
    %v3394 = vadd.f32 %v3386, %v3393
    %v3395 = vmul.f32 %v3394, 0.7978846
    %v3396 = vtanh.pop %v3395
    %v3397 = vadd.f32 %v3396, 1.0
    %v3398 = vmul.f32 %v3397, 0.5
    %v3399 = vmul.f32 %v3386, %v3398
    %v3400 = vld [vmem:[%s4 + $0x41] ss:$0 sm:$0xff]
    %v3401 = vld [vmem:[%s4 + $0x42] ss:$0 sm:$0xff]
    %v3402 = vsel %vm2576, %v3399, 0.0
    %3403 = vadd.xlane.f32.xlu0 %v3402
    %v3404 = vpop.xlane.xlu0 %3403
    %v3405 = vmul.f32 %v3404, %v1006
    %v3406 = vsub.f32 %v3399, %v3405
    %v3407 = vmul.f32 %v3406, %v3406
    %v3408 = vsel %vm2576, %v3407, 0.0
    %3409 = vadd.xlane.f32.xlu0 %v3408
    %v3410 = vpop.xlane.xlu0 %3409
    %v3411 = vmul.f32 %v3410, %v1006
    %v3412 = vadd.f32 %v3411, 1e-12
    %v3413 = vrsqrt.pop %v3412
    %v3414 = vmul.f32 %v3406, %v3413
    %v3415 = vmul.f32 %v3414, %v3400
    %v3416 = vadd.f32 %v3415, %v3401
    %v3417 = vpack.c.bf16 %v3416, %v3416
    %v3418 = vld [vmem:[#allocation4 + $0x2c0] sm:$0xf]
    %v3419 = vld [vmem:[#allocation4 + $0x2c4] sm:$0xf]
    %v3420 = vld [vmem:[#allocation4 + $0x2c8] sm:$0xf]
    %v3421 = vld [vmem:[#allocation4 + $0x2cc] sm:$0xf]
    %v3422 = vld [vmem:[#allocation4 + $0x2d0] sm:$0xf]
    %v3423 = vld [vmem:[#allocation4 + $0x2d4] sm:$0xf]
    %v3424 = vld [vmem:[#allocation4 + $0x2d8] sm:$0xf]
    %v3425 = vld [vmem:[#allocation4 + $0x2dc] sm:$0xf]
    %v3426 = vld [vmem:[#allocation4 + $0x2e0] sm:$0xf]
    %v3427 = vld [vmem:[#allocation4 + $0x2e4] sm:$0xf]
    %v3428 = vld [vmem:[#allocation4 + $0x2e8] sm:$0xf]
    %v3429 = vld [vmem:[#allocation4 + $0x2ec] sm:$0xf]
    %v3430 = vld [vmem:[#allocation4 + $0x2f0] sm:$0xf]
    %v3431 = vld [vmem:[#allocation4 + $0x2f4] sm:$0xf]
    %v3432 = vld [vmem:[#allocation4 + $0x2f8] sm:$0xf]
    %v3433 = vld [vmem:[#allocation4 + $0x2fc] sm:$0xf]
    %v3434 = vld [vmem:[%s4 + $0x43] ss:$0 sm:$0xff]
    %v3451 = vunpack.c.l.b16 %v3418
    %v3452 = vunpack.c.l.b16 %v3419
    %v3453 = vunpack.c.l.b16 %v3420
    %v3454 = vunpack.c.l.b16 %v3421
    %v3455 = vunpack.c.l.b16 %v3422
    %v3456 = vunpack.c.l.b16 %v3423
    %v3457 = vunpack.c.l.b16 %v3424
    %v3458 = vunpack.c.l.b16 %v3425
    %v3459 = vunpack.c.l.b16 %v3426
    %v3460 = vunpack.c.l.b16 %v3427
    %v3461 = vunpack.c.l.b16 %v3428
    %v3462 = vunpack.c.l.b16 %v3429
    %v3463 = vunpack.c.l.b16 %v3430
    %v3464 = vunpack.c.l.b16 %v3431
    %v3465 = vunpack.c.l.b16 %v3432
    %v3466 = vunpack.c.l.b16 %v3433
    %v3467 = vpack.c.b16 %v3452, %v3451
    %v3468 = vpack.c.b16 %v3454, %v3453
    %v3469 = vpack.c.b16 %v3456, %v3455
    %v3470 = vpack.c.b16 %v3458, %v3457
    %v3471 = vpack.c.b16 %v3460, %v3459
    %v3472 = vpack.c.b16 %v3462, %v3461
    %v3473 = vpack.c.b16 %v3464, %v3463
    %v3474 = vpack.c.b16 %v3466, %v3465
    %3483 = vmatprep.subr.bf16.mxu0 0
    %3484 = vmatpush1.bf16.msra.mxu0 %v3474
    %3485 = vmatprep.subr.bf16.mxu0 0
    %3486 = vmatpush1.bf16.msra.mxu0 %v3473
    %3487 = vmatprep.subr.bf16.mxu0 0
    %3488 = vmatpush1.bf16.msra.mxu0 %v3472
    %3489 = vmatprep.subr.bf16.mxu0 0
    %3490 = vmatpush1.bf16.msra.mxu0 %v3471
    %3491 = vmatprep.subr.bf16.mxu0 0
    %3492 = vmatpush1.bf16.msra.mxu0 %v3470
    %3493 = vmatprep.subr.bf16.mxu0 0
    %3494 = vmatpush1.bf16.msra.mxu0 %v3469
    %3495 = vmatprep.subr.bf16.mxu0 0
    %3496 = vmatpush1.bf16.msra.mxu0 %v3468
    %3497 = vmatprep.subr.bf16.mxu0 0
    %3498 = vmatpush1.bf16.msra.mxu0 %v3467
    %3499 = vmatprep.subr.bf16.mxu0 0
    %3500 = vmatpush2.bf16.msra.mxu0 0
    %3501 = vmatprep.subr.bf16.mxu0 0
    %3502 = vmatpush2.bf16.msra.mxu0 0
    %3503 = vmatprep.subr.bf16.mxu0 0
    %3504 = vmatpush2.bf16.msra.mxu0 0
    %3505 = vmatprep.subr.bf16.mxu0 0
    %3506 = vmatpush2.bf16.msra.mxu0 0
    %3507 = vmatprep.subr.bf16.mxu0 0
    %3508 = vmatpush2.bf16.msra.mxu0 0
    %3509 = vmatprep.subr.bf16.mxu0 0
    %3510 = vmatpush2.bf16.msra.mxu0 0
    %3511 = vmatprep.subr.bf16.mxu0 0
    %3512 = vmatpush2.bf16.msra.mxu0 0
    %3513 = vmatprep.subr.bf16.mxu0 0
    %3514 = vmatpush2.bf16.msra.mxu0 0
    %3515 = vmatprep.mubr.bf16.mxu0 0
    %3516 = vmatmul.mubr.bf16.gmra.mxu0 %v3417
    %v3517 = vpop.f32.mrf.mxu0
    %v3518 = vadd.f32 %v3434, %v3517
    %v3519 = vpop.f32.mrf.mxu0
    %v3520 = vpop.f32.mrf.mxu0
    %v3521 = vpop.f32.mrf.mxu0
    %3522 = vdwg.mxu0
    %vm3523 = vcmask 9216
    %v3524 = vsel %vm3523, %v3518, -inf
    %3525 = vmax.xlane.f32.xlu0 %v3524
    %v3526 = vpop.xlane.xlu0 %3525
    %v3527 = vsub.f32 %v3518, %v3526
    %v3528 = vmul.f32 %v3527, 1.442695
    %v3529 = vpow.pop %v3528
    %v3530 = vsel %vm3523, %v3529, 0.0
    %3531 = vadd.xlane.f32.xlu0 %v3530
    %v3532 = vpop.xlane.xlu0 %3531
    %v3533 = vlog2.pop %v3532
    %v3534 = vmul.f32 %v3533, 0.6931472
    %v3535 = vadd.f32 %v3526, %v3534
    %v3536 = vld [vmem:[%s0 + $0x28] sm:$0x3]
    %3537 = vset.pattern.permute.xlu0 0
    %3538 = vperm.xlu0 %3537, %v3536
    %v3539 = vpop.permute.xlu0 %3538
    %vm3540 = vcmp.eq.s32.totalorder %v54, %v3539
    %v3541 = vsel %vm3540, 1, 0
    %v3542 = vcvt.s32.f32 %v3541
    %vm3543 = vcmask 1024
    %v3544 = vsel %vm3543, %v3535, 0.0
    %3545 = vadd.xlane.f32.xlu0 %v3544
    %v3546 = vpop.xlane.xlu0 %3545
    %v3547 = vrot.slane %v3546, 4
    %v3548 = vadd.f32 %v3546, %v3547
    %v3549 = vrot.slane %v3548, 2
    %v3550 = vadd.f32 %v3548, %v3549
    %v3551 = vrot.slane %v3550, 1
    %v3552 = vadd.f32 %v3550, %v3551
    %s3553 = vtos %v3552
    %v3554 = vmul.f32 %v3542, %v3518
    %v3555 = vsel %vm3523, %v3554, 0.0
    %3556 = vadd.xlane.f32.xlu0 %v3555
    %v3557 = vpop.xlane.xlu0 %3556
    %v3558 = vrot.slane %v3557, 4
    %v3559 = vadd.f32 %v3557, %v3558
    %v3560 = vrot.slane %v3559, 2
    %v3561 = vadd.f32 %v3559, %v3560
    %v3562 = vrot.slane %v3561, 1
    %v3563 = vadd.f32 %v3561, %v3562
    %s3564 = vtos %v3563
    %s3565 = ssub.f32 %s3553, %s3564
    %s3566 = smul.f32 %s3565, 0.5
    %v3567 = vstv %s3566
    %v3568 = vsel %vm2576, %v3518, %v3567
    %vm3569 = vcmask 1042432
    %v3570 = vsel %vm3569, %v3568, 0.0
    %3571 = vst [vmem:[%s5] sm:$0xff] %v3570
    // Predicated region
    $region30: #{prompt_wsw_forward.1} parent=1 // pred_check
      _
    $region31: #{prompt_wsw_forward.1} parent=1 // pred_check_branch
      %3573 = sbr.rel (0) target = $region33
    $region32: #{prompt_wsw_forward.1} parent=1 // pred_region
      _
    $region33: #{prompt_wsw_forward.1} parent=1 // pred_fallthru
      _
    // Predicated region
    $region34: #{prompt_wsw_forward.1} parent=1 // pred_check
      _
    $region35: #{prompt_wsw_forward.1} parent=1 // pred_check_branch
      %3575 = sbr.rel (0) target = $region37
    $region36: #{prompt_wsw_forward.1} parent=1 // pred_region
      _
    $region37: #{prompt_wsw_forward.1} parent=1 // pred_fallthru
      _
    %3576 = vsyncpa [#allocation3], 1
    %3577 = vsyncpa [#allocation5], 1

</llo_original>
